<compile_context>
chip_gen: v5e
topology: v5e:2x2
jax: 0.10.0
libtpu: 0.0.40
codegen_flags: <defaults>
</compile_context>

<pallas_src>
import jax
import jax.numpy as jnp
from jax.experimental import pallas as pl
from jax.experimental.pallas import tpu as pltpu


# ----------------------------------------------------------------------------
# Parameter construction (deterministic, synthetic, pre-split / depth-stacked)
# ----------------------------------------------------------------------------

def _lin_init(key, fan_in, fan_out):
    kw, kb = jax.random.split(key)
    w = jax.random.normal(kw, (fan_in, fan_out), jnp.float32) / jnp.sqrt(
        jnp.float32(fan_in))
    b = 0.01 * jax.random.normal(kb, (1, fan_out), jnp.float32)
    return w, b


def init_params(key, input_nfs, hidden_nfs, output_dim, mpl_intermed, depth,
                mlp_dims):
    K = len(input_nfs)
    I = mpl_intermed
    keys = iter(jax.random.split(key, 512))

    init = []
    for j in range(K):
        w, b = _lin_init(next(keys), input_nfs[j], hidden_nfs[j])
        init.append({"w": w, "b": b})

    def msg_block(k, h_self, h_nb):
        k1, k2, k3, k4 = jax.random.split(k, 4)
        wh, _ = _lin_init(k1, h_self, I)          # rows acting on own features
        wa, _ = _lin_init(k2, h_nb, I)            # rows acting on aggregated nb
        wd, b1 = _lin_init(k3, 1, I)              # row acting on squared dist
        w2, b2 = _lin_init(k4, I, I)
        return ({"wh": wh, "wa": wa, "wd": wd, "b": b1}, {"w": w2, "b": b2})

    mpl = []
    for j in range(K):
        hj = hidden_nfs[j]
        upper = hidden_nfs[j + 1] if j < K - 1 else None
        lower = hidden_nfs[j - 1] if j > 0 else None
        per_depth = []
        for _ in range(depth):
            p = {}
            if upper is not None:
                p["up1"], p["up2"] = msg_block(next(keys), hj, upper)
            if lower is not None:
                p["low1"], p["low2"] = msg_block(next(keys), hj, lower)
            n1 = {}
            n1["wself"], n1["b"] = _lin_init(next(keys), hj, I)
            if upper is not None:
                n1["wmu"], _ = _lin_init(next(keys), I, I)
            if lower is not None:
                n1["wml"], _ = _lin_init(next(keys), I, I)
            p["node1"] = n1
            w, b = _lin_init(next(keys), I, hj)
            p["node2"] = {"w": w, "b": b}
            if j == 0:                              # learn_x only for rank-1
                w, b = _lin_init(next(keys), I, 1)
                p["xproj"] = {"w": w, "b": b}
            per_depth.append(p)
        # Stack the depth axis so each (rank, role) weight is ONE operand.
        mpl.append(jax.tree_util.tree_map(
            lambda *xs: jnp.stack(xs, axis=0), *per_depth))

    d0, d1 = mlp_dims
    w0 = []
    for j in range(K):
        w, _ = _lin_init(next(keys), hidden_nfs[j], d0)   # head L0, split by rank
        w0.append(w)
    b0 = 0.01 * jax.random.normal(next(keys), (1, d0), jnp.float32)
    w1, b1 = _lin_init(next(keys), d0, d1)
    w2, b2 = _lin_init(next(keys), d1, output_dim)
    head = {"w0": w0, "b0": b0, "w1": w1, "b1": b1, "w2": w2, "b2": b2}

    return {"init": init, "mpl": mpl, "head": head}


# ----------------------------------------------------------------------------
# Fully fused forward kernel
# ----------------------------------------------------------------------------

def build_forward(params, *, depth, num_graphs, output_dim):
    flat_params, treedef = jax.tree_util.tree_flatten(params)
    n_param = len(flat_params)
    N_DATA = 11
    f32 = jnp.float32

    def kernel(*refs):
        (h1_r, h2_r, h3_r, x1_r, U1_r, L2_r, U2_r, L3_r,
         bt1_r, bt2_r, bt3_r) = refs[:N_DATA]
        prm = jax.tree_util.tree_unflatten(treedef, refs[N_DATA:N_DATA + n_param])
        out_ref = refs[-1]

        def dot(a, b):
            return jnp.dot(a, b, preferred_element_type=f32)

        def relu(v):
            return jnp.maximum(v, 0.0)

        # Everything below stays in VMEM / vregs; no intermediate HBM traffic.
        h1 = h1_r[...].astype(f32)
        h2 = h2_r[...].astype(f32)
        h3 = h3_r[...].astype(f32)
        x1 = x1_r[...].astype(f32)
        U1, L2, U2, L3 = U1_r[...], L2_r[...], U2_r[...], L3_r[...]

        # ---- initial per-rank embeddings --------------------------------
        h1 = dot(h1, prm["init"][0]["w"][...]) + prm["init"][0]["b"][...]
        h2 = dot(h2, prm["init"][1]["w"][...]) + prm["init"][1]["b"][...]
        h3 = dot(h3, prm["init"][2]["w"][...]) + prm["init"][2]["b"][...]

        def message(h, h_agg, x, x_agg, p1, p2):
            # relu(Linear([h, h_agg, ||x - x_agg||^2])) without a concat:
            # the weight is pre-split into row blocks wh / wa / wd.
            diff = x - x_agg
            d2 = jnp.sum(diff * diff, axis=-1, keepdims=True)
            m = relu(dot(h, p1["wh"]) + dot(h_agg, p1["wa"])
                     + d2 * p1["wd"] + p1["b"])
            return relu(dot(m, p2["w"]) + p2["b"])

        # ---- message-passing depth loop (statically unrolled) -----------
        for i in range(depth):
            p0 = jax.tree_util.tree_map(lambda r: r[i], prm["mpl"][0])
            p1_ = jax.tree_util.tree_map(lambda r: r[i], prm["mpl"][1])
            p2_ = jax.tree_util.tree_map(lambda r: r[i], prm["mpl"][2])

            # centroids of 2-/3-cells = mean of their boundary coordinates
            x2 = dot(L2, x1)
            x3 = dot(L3, x2)

            # --- rank-1 cells: upper messages from 2-cells (learn_x) -----
            h2u = dot(U1, h2)
            x2u = dot(U1, x2)
            m_up1 = message(h1, h2u, x1, x2u, p0["up1"], p0["up2"])
            nh = relu(dot(h1, p0["node1"]["wself"])
                      + dot(m_up1, p0["node1"]["wmu"]) + p0["node1"]["b"])
            h1n = h1 + dot(nh, p0["node2"]["w"]) + p0["node2"]["b"]
            scale = dot(m_up1, p0["xproj"]["w"]) + p0["xproj"]["b"]
            x1n = x1 + (x1 - x2u) * scale          # coords_agg='mean'

            # --- rank-2 cells: upper (3-cells) + lower (1-cells) ----------
            h3u = dot(U2, h3)
            x3u = dot(U2, x3)
            m_up2 = message(h2, h3u, x2, x3u, p1_["up1"], p1_["up2"])
            h1l = dot(L2, h1)
            x1l = dot(L2, x1)
            m_lo2 = message(h2, h1l, x2, x1l, p1_["low1"], p1_["low2"])
            nh = relu(dot(h2, p1_["node1"]["wself"])
                      + dot(m_up2, p1_["node1"]["wmu"])
                      + dot(m_lo2, p1_["node1"]["wml"]) + p1_["node1"]["b"])
            h2n = h2 + dot(nh, p1_["node2"]["w"]) + p1_["node2"]["b"]

            # --- rank-3 cells: lower messages from 2-cells ----------------
            h2l = dot(L3, h2)
            x2l = dot(L3, x2)
            m_lo3 = message(h3, h2l, x3, x2l, p2_["low1"], p2_["low2"])
            nh = relu(dot(h3, p2_["node1"]["wself"])
                      + dot(m_lo3, p2_["node1"]["wml"]) + p2_["node1"]["b"])
            h3n = h3 + dot(nh, p2_["node2"]["w"]) + p2_["node2"]["b"]

            h1, h2, h3, x1 = h1n, h2n, h3n, x1n

        # ---- per-graph max pooling (empty graphs -> 0, not -inf) --------
        def pool_max(f, bat_ref):
            n = f.shape[0]
            gid = jax.lax.broadcasted_iota(jnp.int32, (n, num_graphs), 1)
            maskf = (bat_ref[...] == gid).astype(f32)          # (n, G)
            neg = jnp.float32(-3.0e38)
            rows = []
            for g in range(num_graphs):
                mg = maskf[:, g:g + 1]                         # (n, 1)
                has = jnp.max(mg, axis=0, keepdims=True)       # (1, 1)
                pooled = jnp.max(jnp.where(mg > 0.0, f, neg),
                                 axis=0, keepdims=True)        # (1, d)
                rows.append(pooled * has)
            return jnp.concatenate(rows, axis=0)               # (G, d)

        g1 = pool_max(h1, bt1_r)
        g2 = pool_max(h2, bt2_r)
        g3 = pool_max(h3, bt3_r)
        # NOTE: the reference also max-pools x_1 but never uses it -> dropped.

        # ---- classification head + log_softmax (first layer pre-split) --
        hd = prm["head"]
        z = (dot(g1, hd["w0"][0][...]) + dot(g2, hd["w0"][1][...])
             + dot(g3, hd["w0"][2][...]) + hd["b0"][...])
        z = relu(dot(z, hd["w1"][...]) + hd["b1"][...])
        z = dot(z, hd["w2"][...]) + hd["b2"][...]

        zmax = jnp.max(z, axis=-1, keepdims=True)
        s = z - zmax
        lse = jnp.log(jnp.sum(jnp.exp(s), axis=-1, keepdims=True))
        out_ref[...] = (s - lse).astype(out_ref.dtype)

    vmem = pl.BlockSpec(memory_space=pltpu.MemorySpace.VMEM)

    @jax.jit
    def fwd(h_1, h_2, h_3, x_1, b_1, b_2, batch1, batch2, batch3):
        # Loop-invariant, pre-normalized aggregation matrices, computed ONCE
        # (fold |b| and 1/degree so every mean-agg is a single MXU matmul).
        def prenorm(b):
            a = jnp.abs(b.astype(f32))
            up = a / jnp.maximum(jnp.sum(a, axis=1, keepdims=True), 1.0)
            at = a.T
            down = at / jnp.maximum(jnp.sum(at, axis=1, keepdims=True), 1.0)
            return up, down

        U1, L2 = prenorm(b_1)        # (n1,n2) row-mean, (n2,n1) row-mean
        U2, L3 = prenorm(b_2)        # (n2,n3) row-mean, (n3,n2) row-mean
        inputs = (h_1, h_2, h_3, x_1, U1, L2, U2, L3,
                  batch1.reshape(-1, 1).astype(jnp.int32),
                  batch2.reshape(-1, 1).astype(jnp.int32),
                  batch3.reshape(-1, 1).astype(jnp.int32),
                  *flat_params)
        return pl.pallas_call(
            kernel,
            out_shape=jax.ShapeDtypeStruct((num_graphs, output_dim), jnp.float32),
            in_specs=[vmem] * len(inputs),
            out_specs=vmem,
        )(*inputs)

    return fwd


# ----------------------------------------------------------------------------
# Demo
# ----------------------------------------------------------------------------

if __name__ == "__main__":
    # Module hyperparameters (small, consistent with the constructor).
    input_nfs = (8, 8, 8)
    hidden_nfs = (16, 16, 16)
    output_dim = 4
    mpl_intermed = 32
    depth = 2
    mlp_dims = (32, 64)

    # Cell complex sizes: 16 1-cells, 8 2-cells, 4 3-cells; 2 graphs in batch.
    n1, n2, n3, num_graphs = 16, 8, 4, 2

    key = jax.random.PRNGKey(0)
    kp, k1, k2, k3, kx = jax.random.split(key, 5)

    params = init_params(kp, input_nfs, hidden_nfs, output_dim, mpl_intermed,
                         depth, mlp_dims)
    fwd = build_forward(params, depth=depth, num_graphs=num_graphs,
                        output_dim=output_dim)

    h_1 = jax.random.normal(k1, (n1, input_nfs[0]), jnp.float32)
    h_2 = jax.random.normal(k2, (n2, input_nfs[1]), jnp.float32)
    h_3 = jax.random.normal(k3, (n3, input_nfs[2]), jnp.float32)
    x_1 = jax.random.normal(kx, (n1, 3), jnp.float32)

    # Deterministic signed boundary matrices (each upper cell has 3 faces).
    b_1 = jnp.zeros((n1, n2), jnp.float32)
    for j in range(n2):
        rows = (2 * j, 2 * j + 1, (2 * j + 2) % n1)
        for r, s in zip(rows, (1.0, -1.0, 1.0)):
            b_1 = b_1.at[r, j].set(s)
    b_2 = jnp.zeros((n2, n3), jnp.float32)
    for j in range(n3):
        rows = (2 * j, 2 * j + 1, (2 * j + 2) % n2)
        for r, s in zip(rows, (1.0, -1.0, 1.0)):
            b_2 = b_2.at[r, j].set(s)

    batch1 = jnp.array([0] * (n1 // 2) + [1] * (n1 // 2), jnp.int32)
    batch2 = jnp.array([0] * (n2 // 2) + [1] * (n2 // 2), jnp.int32)
    batch3 = jnp.array([0] * (n3 // 2) + [1] * (n3 // 2), jnp.int32)

    out = fwd(h_1, h_2, h_3, x_1, b_1, b_2, batch1, batch2, batch3)
    out = jax.block_until_ready(out)

    assert out.shape == (num_graphs, output_dim)
    assert bool(jnp.all(jnp.isfinite(out)))
    print("KERNEL_OK")
</pallas_src>

<mosaic_0001>
module attributes {stable_mosaic.version = 11 : i64} {
  func.func @kernel(%arg0: memref<16x8xf32, #tpu.memory_space<vmem>>, %arg1: memref<8x8xf32, #tpu.memory_space<vmem>>, %arg2: memref<4x8xf32, #tpu.memory_space<vmem>>, %arg3: memref<16x3xf32, #tpu.memory_space<vmem>>, %arg4: memref<16x8xf32, #tpu.memory_space<vmem>>, %arg5: memref<8x16xf32, #tpu.memory_space<vmem>>, %arg6: memref<8x4xf32, #tpu.memory_space<vmem>>, %arg7: memref<4x8xf32, #tpu.memory_space<vmem>>, %arg8: memref<16x1xi32, #tpu.memory_space<vmem>>, %arg9: memref<8x1xi32, #tpu.memory_space<vmem>>, %arg10: memref<4x1xi32, #tpu.memory_space<vmem>>, %arg11: memref<1x32xf32, #tpu.memory_space<vmem>>, %arg12: memref<1x64xf32, #tpu.memory_space<vmem>>, %arg13: memref<1x4xf32, #tpu.memory_space<vmem>>, %arg14: memref<16x32xf32, #tpu.memory_space<vmem>>, %arg15: memref<16x32xf32, #tpu.memory_space<vmem>>, %arg16: memref<16x32xf32, #tpu.memory_space<vmem>>, %arg17: memref<32x64xf32, #tpu.memory_space<vmem>>, %arg18: memref<64x4xf32, #tpu.memory_space<vmem>>, %arg19: memref<1x16xf32, #tpu.memory_space<vmem>>, %arg20: memref<8x16xf32, #tpu.memory_space<vmem>>, %arg21: memref<1x16xf32, #tpu.memory_space<vmem>>, %arg22: memref<8x16xf32, #tpu.memory_space<vmem>>, %arg23: memref<1x16xf32, #tpu.memory_space<vmem>>, %arg24: memref<8x16xf32, #tpu.memory_space<vmem>>, %arg25: memref<2x1x32xf32, #tpu.memory_space<vmem>>, %arg26: memref<2x32x32xf32, #tpu.memory_space<vmem>>, %arg27: memref<2x16x32xf32, #tpu.memory_space<vmem>>, %arg28: memref<2x1x16xf32, #tpu.memory_space<vmem>>, %arg29: memref<2x32x16xf32, #tpu.memory_space<vmem>>, %arg30: memref<2x1x32xf32, #tpu.memory_space<vmem>>, %arg31: memref<2x16x32xf32, #tpu.memory_space<vmem>>, %arg32: memref<2x1x32xf32, #tpu.memory_space<vmem>>, %arg33: memref<2x16x32xf32, #tpu.memory_space<vmem>>, %arg34: memref<2x1x32xf32, #tpu.memory_space<vmem>>, %arg35: memref<2x32x32xf32, #tpu.memory_space<vmem>>, %arg36: memref<2x1x1xf32, #tpu.memory_space<vmem>>, %arg37: memref<2x32x1xf32, #tpu.memory_space<vmem>>, %arg38: memref<2x1x32xf32, #tpu.memory_space<vmem>>, %arg39: memref<2x16x32xf32, #tpu.memory_space<vmem>>, %arg40: memref<2x1x32xf32, #tpu.memory_space<vmem>>, %arg41: memref<2x16x32xf32, #tpu.memory_space<vmem>>, %arg42: memref<2x1x32xf32, #tpu.memory_space<vmem>>, %arg43: memref<2x32x32xf32, #tpu.memory_space<vmem>>, %arg44: memref<2x1x32xf32, #tpu.memory_space<vmem>>, %arg45: memref<2x32x32xf32, #tpu.memory_space<vmem>>, %arg46: memref<2x32x32xf32, #tpu.memory_space<vmem>>, %arg47: memref<2x16x32xf32, #tpu.memory_space<vmem>>, %arg48: memref<2x1x16xf32, #tpu.memory_space<vmem>>, %arg49: memref<2x32x16xf32, #tpu.memory_space<vmem>>, %arg50: memref<2x1x32xf32, #tpu.memory_space<vmem>>, %arg51: memref<2x16x32xf32, #tpu.memory_space<vmem>>, %arg52: memref<2x1x32xf32, #tpu.memory_space<vmem>>, %arg53: memref<2x16x32xf32, #tpu.memory_space<vmem>>, %arg54: memref<2x1x32xf32, #tpu.memory_space<vmem>>, %arg55: memref<2x32x32xf32, #tpu.memory_space<vmem>>, %arg56: memref<2x1x32xf32, #tpu.memory_space<vmem>>, %arg57: memref<2x16x32xf32, #tpu.memory_space<vmem>>, %arg58: memref<2x1x32xf32, #tpu.memory_space<vmem>>, %arg59: memref<2x16x32xf32, #tpu.memory_space<vmem>>, %arg60: memref<2x1x32xf32, #tpu.memory_space<vmem>>, %arg61: memref<2x32x32xf32, #tpu.memory_space<vmem>>, %arg62: memref<2x1x32xf32, #tpu.memory_space<vmem>>, %arg63: memref<2x32x32xf32, #tpu.memory_space<vmem>>, %arg64: memref<2x16x32xf32, #tpu.memory_space<vmem>>, %arg65: memref<2x1x16xf32, #tpu.memory_space<vmem>>, %arg66: memref<2x32x16xf32, #tpu.memory_space<vmem>>, %arg67: memref<2x4xf32, #tpu.memory_space<vmem>>) attributes {dimension_semantics = [], scalar_prefetch = 0 : i64, scratch_operands = 0 : i64, tpu.core_type = #tpu.core_type<tc>} {
    %c0 = arith.constant 0 : index
    %c0_0 = arith.constant 0 : index
    %0 = vector.load %arg0[%c0, %c0_0] : memref<16x8xf32, #tpu.memory_space<vmem>>, vector<16x8xf32>
    %c0_1 = arith.constant 0 : index
    %c0_2 = arith.constant 0 : index
    %1 = vector.load %arg1[%c0_1, %c0_2] : memref<8x8xf32, #tpu.memory_space<vmem>>, vector<8x8xf32>
    %c0_3 = arith.constant 0 : index
    %c0_4 = arith.constant 0 : index
    %2 = vector.load %arg2[%c0_3, %c0_4] : memref<4x8xf32, #tpu.memory_space<vmem>>, vector<4x8xf32>
    %c0_5 = arith.constant 0 : index
    %c0_6 = arith.constant 0 : index
    %3 = vector.load %arg3[%c0_5, %c0_6] : memref<16x3xf32, #tpu.memory_space<vmem>>, vector<16x3xf32>
    %c0_7 = arith.constant 0 : index
    %c0_8 = arith.constant 0 : index
    %4 = vector.load %arg4[%c0_7, %c0_8] : memref<16x8xf32, #tpu.memory_space<vmem>>, vector<16x8xf32>
    %c0_9 = arith.constant 0 : index
    %c0_10 = arith.constant 0 : index
    %5 = vector.load %arg5[%c0_9, %c0_10] : memref<8x16xf32, #tpu.memory_space<vmem>>, vector<8x16xf32>
    %c0_11 = arith.constant 0 : index
    %c0_12 = arith.constant 0 : index
    %6 = vector.load %arg6[%c0_11, %c0_12] : memref<8x4xf32, #tpu.memory_space<vmem>>, vector<8x4xf32>
    %c0_13 = arith.constant 0 : index
    %c0_14 = arith.constant 0 : index
    %7 = vector.load %arg7[%c0_13, %c0_14] : memref<4x8xf32, #tpu.memory_space<vmem>>, vector<4x8xf32>
    %c0_15 = arith.constant 0 : index
    %c0_16 = arith.constant 0 : index
    %8 = vector.load %arg20[%c0_15, %c0_16] : memref<8x16xf32, #tpu.memory_space<vmem>>, vector<8x16xf32>
    %cst = arith.constant dense<0.000000e+00> : vector<16x16xf32>
    %9 = tpu.matmul %0, %8, %cst {dimension_numbers = #tpu.dot_dimension_numbers<[1], [0], [0], [1], [0, 0, 1, 1], [], []>} : vector<16x8xf32>, vector<8x16xf32>, vector<16x16xf32> -> vector<16x16xf32>
    %c0_17 = arith.constant 0 : index
    %c0_18 = arith.constant 0 : index
    %10 = vector.load %arg19[%c0_17, %c0_18] : memref<1x16xf32, #tpu.memory_space<vmem>>, vector<1x16xf32>
    %11 = vector.broadcast %10 : vector<1x16xf32> to vector<16x16xf32>
    %12 = arith.addf %9, %11 : vector<16x16xf32>
    %c0_19 = arith.constant 0 : index
    %c0_20 = arith.constant 0 : index
    %13 = vector.load %arg22[%c0_19, %c0_20] : memref<8x16xf32, #tpu.memory_space<vmem>>, vector<8x16xf32>
    %cst_21 = arith.constant dense<0.000000e+00> : vector<8x16xf32>
    %14 = tpu.matmul %1, %13, %cst_21 {dimension_numbers = #tpu.dot_dimension_numbers<[1], [0], [0], [1], [0, 0, 1, 1], [], []>} : vector<8x8xf32>, vector<8x16xf32>, vector<8x16xf32> -> vector<8x16xf32>
    %c0_22 = arith.constant 0 : index
    %c0_23 = arith.constant 0 : index
    %15 = vector.load %arg21[%c0_22, %c0_23] : memref<1x16xf32, #tpu.memory_space<vmem>>, vector<1x16xf32>
    %16 = vector.broadcast %15 : vector<1x16xf32> to vector<8x16xf32>
    %17 = arith.addf %14, %16 : vector<8x16xf32>
    %c0_24 = arith.constant 0 : index
    %c0_25 = arith.constant 0 : index
    %18 = vector.load %arg24[%c0_24, %c0_25] : memref<8x16xf32, #tpu.memory_space<vmem>>, vector<8x16xf32>
    %cst_26 = arith.constant dense<0.000000e+00> : vector<4x16xf32>
    %19 = tpu.matmul %2, %18, %cst_26 {dimension_numbers = #tpu.dot_dimension_numbers<[1], [0], [0], [1], [0, 0, 1, 1], [], []>} : vector<4x8xf32>, vector<8x16xf32>, vector<4x16xf32> -> vector<4x16xf32>
    %c0_27 = arith.constant 0 : index
    %c0_28 = arith.constant 0 : index
    %20 = vector.load %arg23[%c0_27, %c0_28] : memref<1x16xf32, #tpu.memory_space<vmem>>, vector<1x16xf32>
    %21 = vector.broadcast %20 : vector<1x16xf32> to vector<4x16xf32>
    %22 = arith.addf %19, %21 : vector<4x16xf32>
    %c0_29 = arith.constant 0 : index
    %c0_30 = arith.constant 0 : index
    %c0_31 = arith.constant 0 : index
    %23 = vector.load %arg25[%c0_29, %c0_30, %c0_31] : memref<2x1x32xf32, #tpu.memory_space<vmem>>, vector<1x1x32xf32>
    %24 = vector.shape_cast %23 : vector<1x1x32xf32> to vector<1x32xf32>
    %c0_32 = arith.constant 0 : index
    %c0_33 = arith.constant 0 : index
    %c0_34 = arith.constant 0 : index
    %25 = vector.load %arg26[%c0_32, %c0_33, %c0_34] : memref<2x32x32xf32, #tpu.memory_space<vmem>>, vector<1x32x32xf32>
    %26 = vector.shape_cast %25 : vector<1x32x32xf32> to vector<32x32xf32>
    %c0_35 = arith.constant 0 : index
    %c0_36 = arith.constant 0 : index
    %c0_37 = arith.constant 0 : index
    %27 = vector.load %arg27[%c0_35, %c0_36, %c0_37] : memref<2x16x32xf32, #tpu.memory_space<vmem>>, vector<1x16x32xf32>
    %28 = vector.shape_cast %27 : vector<1x16x32xf32> to vector<16x32xf32>
    %c0_38 = arith.constant 0 : index
    %c0_39 = arith.constant 0 : index
    %c0_40 = arith.constant 0 : index
    %29 = vector.load %arg28[%c0_38, %c0_39, %c0_40] : memref<2x1x16xf32, #tpu.memory_space<vmem>>, vector<1x1x16xf32>
    %30 = vector.shape_cast %29 : vector<1x1x16xf32> to vector<1x16xf32>
    %c0_41 = arith.constant 0 : index
    %c0_42 = arith.constant 0 : index
    %c0_43 = arith.constant 0 : index
    %31 = vector.load %arg29[%c0_41, %c0_42, %c0_43] : memref<2x32x16xf32, #tpu.memory_space<vmem>>, vector<1x32x16xf32>
    %32 = vector.shape_cast %31 : vector<1x32x16xf32> to vector<32x16xf32>
    %c0_44 = arith.constant 0 : index
    %c0_45 = arith.constant 0 : index
    %c0_46 = arith.constant 0 : index
    %33 = vector.load %arg30[%c0_44, %c0_45, %c0_46] : memref<2x1x32xf32, #tpu.memory_space<vmem>>, vector<1x1x32xf32>
    %34 = vector.shape_cast %33 : vector<1x1x32xf32> to vector<1x32xf32>
    %c0_47 = arith.constant 0 : index
    %c0_48 = arith.constant 0 : index
    %c0_49 = arith.constant 0 : index
    %35 = vector.load %arg31[%c0_47, %c0_48, %c0_49] : memref<2x16x32xf32, #tpu.memory_space<vmem>>, vector<1x16x32xf32>
    %36 = vector.shape_cast %35 : vector<1x16x32xf32> to vector<16x32xf32>
    %c0_50 = arith.constant 0 : index
    %c0_51 = arith.constant 0 : index
    %c0_52 = arith.constant 0 : index
    %37 = vector.load %arg32[%c0_50, %c0_51, %c0_52] : memref<2x1x32xf32, #tpu.memory_space<vmem>>, vector<1x1x32xf32>
    %38 = vector.shape_cast %37 : vector<1x1x32xf32> to vector<1x32xf32>
    %c0_53 = arith.constant 0 : index
    %c0_54 = arith.constant 0 : index
    %c0_55 = arith.constant 0 : index
    %39 = vector.load %arg33[%c0_53, %c0_54, %c0_55] : memref<2x16x32xf32, #tpu.memory_space<vmem>>, vector<1x16x32xf32>
    %40 = vector.shape_cast %39 : vector<1x16x32xf32> to vector<16x32xf32>
    %c0_56 = arith.constant 0 : index
    %c0_57 = arith.constant 0 : index
    %c0_58 = arith.constant 0 : index
    %41 = vector.load %arg34[%c0_56, %c0_57, %c0_58] : memref<2x1x32xf32, #tpu.memory_space<vmem>>, vector<1x1x32xf32>
    %42 = vector.shape_cast %41 : vector<1x1x32xf32> to vector<1x32xf32>
    %c0_59 = arith.constant 0 : index
    %c0_60 = arith.constant 0 : index
    %c0_61 = arith.constant 0 : index
    %43 = vector.load %arg35[%c0_59, %c0_60, %c0_61] : memref<2x32x32xf32, #tpu.memory_space<vmem>>, vector<1x32x32xf32>
    %44 = vector.shape_cast %43 : vector<1x32x32xf32> to vector<32x32xf32>
    %c0_62 = arith.constant 0 : index
    %c0_63 = arith.constant 0 : index
    %c0_64 = arith.constant 0 : index
    %45 = vector.load %arg36[%c0_62, %c0_63, %c0_64] : memref<2x1x1xf32, #tpu.memory_space<vmem>>, vector<1x1x1xf32>
    %46 = vector.shape_cast %45 : vector<1x1x1xf32> to vector<1x1xf32>
    %c0_65 = arith.constant 0 : index
    %c0_66 = arith.constant 0 : index
    %c0_67 = arith.constant 0 : index
    %47 = vector.load %arg37[%c0_65, %c0_66, %c0_67] : memref<2x32x1xf32, #tpu.memory_space<vmem>>, vector<1x32x1xf32>
    %48 = vector.shape_cast %47 : vector<1x32x1xf32> to vector<32x1xf32>
    %c0_68 = arith.constant 0 : index
    %c0_69 = arith.constant 0 : index
    %c0_70 = arith.constant 0 : index
    %49 = vector.load %arg38[%c0_68, %c0_69, %c0_70] : memref<2x1x32xf32, #tpu.memory_space<vmem>>, vector<1x1x32xf32>
    %50 = vector.shape_cast %49 : vector<1x1x32xf32> to vector<1x32xf32>
    %c0_71 = arith.constant 0 : index
    %c0_72 = arith.constant 0 : index
    %c0_73 = arith.constant 0 : index
    %51 = vector.load %arg39[%c0_71, %c0_72, %c0_73] : memref<2x16x32xf32, #tpu.memory_space<vmem>>, vector<1x16x32xf32>
    %52 = vector.shape_cast %51 : vector<1x16x32xf32> to vector<16x32xf32>
    %c0_74 = arith.constant 0 : index
    %c0_75 = arith.constant 0 : index
    %c0_76 = arith.constant 0 : index
    %53 = vector.load %arg40[%c0_74, %c0_75, %c0_76] : memref<2x1x32xf32, #tpu.memory_space<vmem>>, vector<1x1x32xf32>
    %54 = vector.shape_cast %53 : vector<1x1x32xf32> to vector<1x32xf32>
    %c0_77 = arith.constant 0 : index
    %c0_78 = arith.constant 0 : index
    %c0_79 = arith.constant 0 : index
    %55 = vector.load %arg41[%c0_77, %c0_78, %c0_79] : memref<2x16x32xf32, #tpu.memory_space<vmem>>, vector<1x16x32xf32>
    %56 = vector.shape_cast %55 : vector<1x16x32xf32> to vector<16x32xf32>
    %c0_80 = arith.constant 0 : index
    %c0_81 = arith.constant 0 : index
    %c0_82 = arith.constant 0 : index
    %57 = vector.load %arg42[%c0_80, %c0_81, %c0_82] : memref<2x1x32xf32, #tpu.memory_space<vmem>>, vector<1x1x32xf32>
    %58 = vector.shape_cast %57 : vector<1x1x32xf32> to vector<1x32xf32>
    %c0_83 = arith.constant 0 : index
    %c0_84 = arith.constant 0 : index
    %c0_85 = arith.constant 0 : index
    %59 = vector.load %arg43[%c0_83, %c0_84, %c0_85] : memref<2x32x32xf32, #tpu.memory_space<vmem>>, vector<1x32x32xf32>
    %60 = vector.shape_cast %59 : vector<1x32x32xf32> to vector<32x32xf32>
    %c0_86 = arith.constant 0 : index
    %c0_87 = arith.constant 0 : index
    %c0_88 = arith.constant 0 : index
    %61 = vector.load %arg44[%c0_86, %c0_87, %c0_88] : memref<2x1x32xf32, #tpu.memory_space<vmem>>, vector<1x1x32xf32>
    %62 = vector.shape_cast %61 : vector<1x1x32xf32> to vector<1x32xf32>
    %c0_89 = arith.constant 0 : index
    %c0_90 = arith.constant 0 : index
    %c0_91 = arith.constant 0 : index
    %63 = vector.load %arg45[%c0_89, %c0_90, %c0_91] : memref<2x32x32xf32, #tpu.memory_space<vmem>>, vector<1x32x32xf32>
    %64 = vector.shape_cast %63 : vector<1x32x32xf32> to vector<32x32xf32>
    %c0_92 = arith.constant 0 : index
    %c0_93 = arith.constant 0 : index
    %c0_94 = arith.constant 0 : index
    %65 = vector.load %arg46[%c0_92, %c0_93, %c0_94] : memref<2x32x32xf32, #tpu.memory_space<vmem>>, vector<1x32x32xf32>
    %66 = vector.shape_cast %65 : vector<1x32x32xf32> to vector<32x32xf32>
    %c0_95 = arith.constant 0 : index
    %c0_96 = arith.constant 0 : index
    %c0_97 = arith.constant 0 : index
    %67 = vector.load %arg47[%c0_95, %c0_96, %c0_97] : memref<2x16x32xf32, #tpu.memory_space<vmem>>, vector<1x16x32xf32>
    %68 = vector.shape_cast %67 : vector<1x16x32xf32> to vector<16x32xf32>
    %c0_98 = arith.constant 0 : index
    %c0_99 = arith.constant 0 : index
    %c0_100 = arith.constant 0 : index
    %69 = vector.load %arg48[%c0_98, %c0_99, %c0_100] : memref<2x1x16xf32, #tpu.memory_space<vmem>>, vector<1x1x16xf32>
    %70 = vector.shape_cast %69 : vector<1x1x16xf32> to vector<1x16xf32>
    %c0_101 = arith.constant 0 : index
    %c0_102 = arith.constant 0 : index
    %c0_103 = arith.constant 0 : index
    %71 = vector.load %arg49[%c0_101, %c0_102, %c0_103] : memref<2x32x16xf32, #tpu.memory_space<vmem>>, vector<1x32x16xf32>
    %72 = vector.shape_cast %71 : vector<1x32x16xf32> to vector<32x16xf32>
    %c0_104 = arith.constant 0 : index
    %c0_105 = arith.constant 0 : index
    %c0_106 = arith.constant 0 : index
    %73 = vector.load %arg50[%c0_104, %c0_105, %c0_106] : memref<2x1x32xf32, #tpu.memory_space<vmem>>, vector<1x1x32xf32>
    %74 = vector.shape_cast %73 : vector<1x1x32xf32> to vector<1x32xf32>
    %c0_107 = arith.constant 0 : index
    %c0_108 = arith.constant 0 : index
    %c0_109 = arith.constant 0 : index
    %75 = vector.load %arg51[%c0_107, %c0_108, %c0_109] : memref<2x16x32xf32, #tpu.memory_space<vmem>>, vector<1x16x32xf32>
    %76 = vector.shape_cast %75 : vector<1x16x32xf32> to vector<16x32xf32>
    %c0_110 = arith.constant 0 : index
    %c0_111 = arith.constant 0 : index
    %c0_112 = arith.constant 0 : index
    %77 = vector.load %arg52[%c0_110, %c0_111, %c0_112] : memref<2x1x32xf32, #tpu.memory_space<vmem>>, vector<1x1x32xf32>
    %78 = vector.shape_cast %77 : vector<1x1x32xf32> to vector<1x32xf32>
    %c0_113 = arith.constant 0 : index
    %c0_114 = arith.constant 0 : index
    %c0_115 = arith.constant 0 : index
    %79 = vector.load %arg53[%c0_113, %c0_114, %c0_115] : memref<2x16x32xf32, #tpu.memory_space<vmem>>, vector<1x16x32xf32>
    %80 = vector.shape_cast %79 : vector<1x16x32xf32> to vector<16x32xf32>
    %c0_116 = arith.constant 0 : index
    %c0_117 = arith.constant 0 : index
    %c0_118 = arith.constant 0 : index
    %81 = vector.load %arg54[%c0_116, %c0_117, %c0_118] : memref<2x1x32xf32, #tpu.memory_space<vmem>>, vector<1x1x32xf32>
    %82 = vector.shape_cast %81 : vector<1x1x32xf32> to vector<1x32xf32>
    %c0_119 = arith.constant 0 : index
    %c0_120 = arith.constant 0 : index
    %c0_121 = arith.constant 0 : index
    %83 = vector.load %arg55[%c0_119, %c0_120, %c0_121] : memref<2x32x32xf32, #tpu.memory_space<vmem>>, vector<1x32x32xf32>
    %84 = vector.shape_cast %83 : vector<1x32x32xf32> to vector<32x32xf32>
    %c0_122 = arith.constant 0 : index
    %c0_123 = arith.constant 0 : index
    %c0_124 = arith.constant 0 : index
    %85 = vector.load %arg56[%c0_122, %c0_123, %c0_124] : memref<2x1x32xf32, #tpu.memory_space<vmem>>, vector<1x1x32xf32>
    %86 = vector.shape_cast %85 : vector<1x1x32xf32> to vector<1x32xf32>
    %c0_125 = arith.constant 0 : index
    %c0_126 = arith.constant 0 : index
    %c0_127 = arith.constant 0 : index
    %87 = vector.load %arg57[%c0_125, %c0_126, %c0_127] : memref<2x16x32xf32, #tpu.memory_space<vmem>>, vector<1x16x32xf32>
    %88 = vector.shape_cast %87 : vector<1x16x32xf32> to vector<16x32xf32>
    %c0_128 = arith.constant 0 : index
    %c0_129 = arith.constant 0 : index
    %c0_130 = arith.constant 0 : index
    %89 = vector.load %arg58[%c0_128, %c0_129, %c0_130] : memref<2x1x32xf32, #tpu.memory_space<vmem>>, vector<1x1x32xf32>
    %90 = vector.shape_cast %89 : vector<1x1x32xf32> to vector<1x32xf32>
    %c0_131 = arith.constant 0 : index
    %c0_132 = arith.constant 0 : index
    %c0_133 = arith.constant 0 : index
    %91 = vector.load %arg59[%c0_131, %c0_132, %c0_133] : memref<2x16x32xf32, #tpu.memory_space<vmem>>, vector<1x16x32xf32>
    %92 = vector.shape_cast %91 : vector<1x16x32xf32> to vector<16x32xf32>
    %c0_134 = arith.constant 0 : index
    %c0_135 = arith.constant 0 : index
    %c0_136 = arith.constant 0 : index
    %93 = vector.load %arg60[%c0_134, %c0_135, %c0_136] : memref<2x1x32xf32, #tpu.memory_space<vmem>>, vector<1x1x32xf32>
    %94 = vector.shape_cast %93 : vector<1x1x32xf32> to vector<1x32xf32>
    %c0_137 = arith.constant 0 : index
    %c0_138 = arith.constant 0 : index
    %c0_139 = arith.constant 0 : index
    %95 = vector.load %arg61[%c0_137, %c0_138, %c0_139] : memref<2x32x32xf32, #tpu.memory_space<vmem>>, vector<1x32x32xf32>
    %96 = vector.shape_cast %95 : vector<1x32x32xf32> to vector<32x32xf32>
    %c0_140 = arith.constant 0 : index
    %c0_141 = arith.constant 0 : index
    %c0_142 = arith.constant 0 : index
    %97 = vector.load %arg62[%c0_140, %c0_141, %c0_142] : memref<2x1x32xf32, #tpu.memory_space<vmem>>, vector<1x1x32xf32>
    %98 = vector.shape_cast %97 : vector<1x1x32xf32> to vector<1x32xf32>
    %c0_143 = arith.constant 0 : index
    %c0_144 = arith.constant 0 : index
    %c0_145 = arith.constant 0 : index
    %99 = vector.load %arg63[%c0_143, %c0_144, %c0_145] : memref<2x32x32xf32, #tpu.memory_space<vmem>>, vector<1x32x32xf32>
    %100 = vector.shape_cast %99 : vector<1x32x32xf32> to vector<32x32xf32>
    %c0_146 = arith.constant 0 : index
    %c0_147 = arith.constant 0 : index
    %c0_148 = arith.constant 0 : index
    %101 = vector.load %arg64[%c0_146, %c0_147, %c0_148] : memref<2x16x32xf32, #tpu.memory_space<vmem>>, vector<1x16x32xf32>
    %102 = vector.shape_cast %101 : vector<1x16x32xf32> to vector<16x32xf32>
    %c0_149 = arith.constant 0 : index
    %c0_150 = arith.constant 0 : index
    %c0_151 = arith.constant 0 : index
    %103 = vector.load %arg65[%c0_149, %c0_150, %c0_151] : memref<2x1x16xf32, #tpu.memory_space<vmem>>, vector<1x1x16xf32>
    %104 = vector.shape_cast %103 : vector<1x1x16xf32> to vector<1x16xf32>
    %c0_152 = arith.constant 0 : index
    %c0_153 = arith.constant 0 : index
    %c0_154 = arith.constant 0 : index
    %105 = vector.load %arg66[%c0_152, %c0_153, %c0_154] : memref<2x32x16xf32, #tpu.memory_space<vmem>>, vector<1x32x16xf32>
    %106 = vector.shape_cast %105 : vector<1x32x16xf32> to vector<32x16xf32>
    %cst_155 = arith.constant dense<0.000000e+00> : vector<8x3xf32>
    %107 = tpu.matmul %5, %3, %cst_155 {dimension_numbers = #tpu.dot_dimension_numbers<[1], [0], [0], [1], [0, 0, 1, 1], [], []>} : vector<8x16xf32>, vector<16x3xf32>, vector<8x3xf32> -> vector<8x3xf32>
    %cst_156 = arith.constant dense<0.000000e+00> : vector<4x3xf32>
    %108 = tpu.matmul %7, %107, %cst_156 {dimension_numbers = #tpu.dot_dimension_numbers<[1], [0], [0], [1], [0, 0, 1, 1], [], []>} : vector<4x8xf32>, vector<8x3xf32>, vector<4x3xf32> -> vector<4x3xf32>
    %cst_157 = arith.constant dense<0.000000e+00> : vector<16x16xf32>
    %109 = tpu.matmul %4, %17, %cst_157 {dimension_numbers = #tpu.dot_dimension_numbers<[1], [0], [0], [1], [0, 0, 1, 1], [], []>} : vector<16x8xf32>, vector<8x16xf32>, vector<16x16xf32> -> vector<16x16xf32>
    %cst_158 = arith.constant dense<0.000000e+00> : vector<16x3xf32>
    %110 = tpu.matmul %4, %107, %cst_158 {dimension_numbers = #tpu.dot_dimension_numbers<[1], [0], [0], [1], [0, 0, 1, 1], [], []>} : vector<16x8xf32>, vector<8x3xf32>, vector<16x3xf32> -> vector<16x3xf32>
    %111 = arith.subf %3, %110 : vector<16x3xf32>
    %112 = arith.mulf %111, %111 : vector<16x3xf32>
    %cst_159 = arith.constant dense<0.000000e+00> : vector<16xf32>
    %113 = vector.multi_reduction <add>, %112, %cst_159 [1] : vector<16x3xf32> to vector<16xf32>
    %114 = vector.shape_cast %113 : vector<16xf32> to vector<16x1xf32>
    %cst_160 = arith.constant dense<0.000000e+00> : vector<16x32xf32>
    %115 = tpu.matmul %12, %40, %cst_160 {dimension_numbers = #tpu.dot_dimension_numbers<[1], [0], [0], [1], [0, 0, 1, 1], [], []>} : vector<16x16xf32>, vector<16x32xf32>, vector<16x32xf32> -> vector<16x32xf32>
    %cst_161 = arith.constant dense<0.000000e+00> : vector<16x32xf32>
    %116 = tpu.matmul %109, %36, %cst_161 {dimension_numbers = #tpu.dot_dimension_numbers<[1], [0], [0], [1], [0, 0, 1, 1], [], []>} : vector<16x16xf32>, vector<16x32xf32>, vector<16x32xf32> -> vector<16x32xf32>
    %117 = arith.addf %115, %116 : vector<16x32xf32>
    %118 = vector.broadcast %114 : vector<16x1xf32> to vector<16x32xf32>
    %119 = vector.broadcast %38 : vector<1x32xf32> to vector<16x32xf32>
    %120 = arith.mulf %118, %119 : vector<16x32xf32>
    %121 = arith.addf %117, %120 : vector<16x32xf32>
    %122 = vector.broadcast %34 : vector<1x32xf32> to vector<16x32xf32>
    %123 = arith.addf %121, %122 : vector<16x32xf32>
    %cst_162 = arith.constant 0.000000e+00 : f32
    %124 = vector.broadcast %cst_162 : f32 to vector<16x32xf32>
    %125 = arith.maximumf %123, %124 : vector<16x32xf32>
    %cst_163 = arith.constant dense<0.000000e+00> : vector<16x32xf32>
    %126 = tpu.matmul %125, %44, %cst_163 {dimension_numbers = #tpu.dot_dimension_numbers<[1], [0], [0], [1], [0, 0, 1, 1], [], []>} : vector<16x32xf32>, vector<32x32xf32>, vector<16x32xf32> -> vector<16x32xf32>
    %127 = vector.broadcast %42 : vector<1x32xf32> to vector<16x32xf32>
    %128 = arith.addf %126, %127 : vector<16x32xf32>
    %cst_164 = arith.constant 0.000000e+00 : f32
    %129 = vector.broadcast %cst_164 : f32 to vector<16x32xf32>
    %130 = arith.maximumf %128, %129 : vector<16x32xf32>
    %cst_165 = arith.constant dense<0.000000e+00> : vector<16x32xf32>
    %131 = tpu.matmul %12, %28, %cst_165 {dimension_numbers = #tpu.dot_dimension_numbers<[1], [0], [0], [1], [0, 0, 1, 1], [], []>} : vector<16x16xf32>, vector<16x32xf32>, vector<16x32xf32> -> vector<16x32xf32>
    %cst_166 = arith.constant dense<0.000000e+00> : vector<16x32xf32>
    %132 = tpu.matmul %130, %26, %cst_166 {dimension_numbers = #tpu.dot_dimension_numbers<[1], [0], [0], [1], [0, 0, 1, 1], [], []>} : vector<16x32xf32>, vector<32x32xf32>, vector<16x32xf32> -> vector<16x32xf32>
    %133 = arith.addf %131, %132 : vector<16x32xf32>
    %134 = vector.broadcast %24 : vector<1x32xf32> to vector<16x32xf32>
    %135 = arith.addf %133, %134 : vector<16x32xf32>
    %cst_167 = arith.constant 0.000000e+00 : f32
    %136 = vector.broadcast %cst_167 : f32 to vector<16x32xf32>
    %137 = arith.maximumf %135, %136 : vector<16x32xf32>
    %cst_168 = arith.constant dense<0.000000e+00> : vector<16x16xf32>
    %138 = tpu.matmul %137, %32, %cst_168 {dimension_numbers = #tpu.dot_dimension_numbers<[1], [0], [0], [1], [0, 0, 1, 1], [], []>} : vector<16x32xf32>, vector<32x16xf32>, vector<16x16xf32> -> vector<16x16xf32>
    %139 = arith.addf %12, %138 : vector<16x16xf32>
    %140 = vector.broadcast %30 : vector<1x16xf32> to vector<16x16xf32>
    %141 = arith.addf %139, %140 : vector<16x16xf32>
    %cst_169 = arith.constant dense<0.000000e+00> : vector<16x1xf32>
    %142 = tpu.matmul %130, %48, %cst_169 {dimension_numbers = #tpu.dot_dimension_numbers<[1], [0], [0], [1], [0, 0, 1, 1], [], []>} : vector<16x32xf32>, vector<32x1xf32>, vector<16x1xf32> -> vector<16x1xf32>
    %143 = vector.broadcast %46 : vector<1x1xf32> to vector<16x1xf32>
    %144 = arith.addf %142, %143 : vector<16x1xf32>
    %145 = arith.subf %3, %110 : vector<16x3xf32>
    %146 = vector.broadcast %144 : vector<16x1xf32> to vector<16x3xf32>
    %147 = arith.mulf %145, %146 : vector<16x3xf32>
    %148 = arith.addf %3, %147 : vector<16x3xf32>
    %cst_170 = arith.constant dense<0.000000e+00> : vector<8x16xf32>
    %149 = tpu.matmul %6, %22, %cst_170 {dimension_numbers = #tpu.dot_dimension_numbers<[1], [0], [0], [1], [0, 0, 1, 1], [], []>} : vector<8x4xf32>, vector<4x16xf32>, vector<8x16xf32> -> vector<8x16xf32>
    %cst_171 = arith.constant dense<0.000000e+00> : vector<8x3xf32>
    %150 = tpu.matmul %6, %108, %cst_171 {dimension_numbers = #tpu.dot_dimension_numbers<[1], [0], [0], [1], [0, 0, 1, 1], [], []>} : vector<8x4xf32>, vector<4x3xf32>, vector<8x3xf32> -> vector<8x3xf32>
    %151 = arith.subf %107, %150 : vector<8x3xf32>
    %152 = arith.mulf %151, %151 : vector<8x3xf32>
    %cst_172 = arith.constant dense<0.000000e+00> : vector<8xf32>
    %153 = vector.multi_reduction <add>, %152, %cst_172 [1] : vector<8x3xf32> to vector<8xf32>
    %154 = vector.shape_cast %153 : vector<8xf32> to vector<8x1xf32>
    %cst_173 = arith.constant dense<0.000000e+00> : vector<8x32xf32>
    %155 = tpu.matmul %17, %80, %cst_173 {dimension_numbers = #tpu.dot_dimension_numbers<[1], [0], [0], [1], [0, 0, 1, 1], [], []>} : vector<8x16xf32>, vector<16x32xf32>, vector<8x32xf32> -> vector<8x32xf32>
    %cst_174 = arith.constant dense<0.000000e+00> : vector<8x32xf32>
    %156 = tpu.matmul %149, %76, %cst_174 {dimension_numbers = #tpu.dot_dimension_numbers<[1], [0], [0], [1], [0, 0, 1, 1], [], []>} : vector<8x16xf32>, vector<16x32xf32>, vector<8x32xf32> -> vector<8x32xf32>
    %157 = arith.addf %155, %156 : vector<8x32xf32>
    %158 = vector.broadcast %154 : vector<8x1xf32> to vector<8x32xf32>
    %159 = vector.broadcast %78 : vector<1x32xf32> to vector<8x32xf32>
    %160 = arith.mulf %158, %159 : vector<8x32xf32>
    %161 = arith.addf %157, %160 : vector<8x32xf32>
    %162 = vector.broadcast %74 : vector<1x32xf32> to vector<8x32xf32>
    %163 = arith.addf %161, %162 : vector<8x32xf32>
    %cst_175 = arith.constant 0.000000e+00 : f32
    %164 = vector.broadcast %cst_175 : f32 to vector<8x32xf32>
    %165 = arith.maximumf %163, %164 : vector<8x32xf32>
    %cst_176 = arith.constant dense<0.000000e+00> : vector<8x32xf32>
    %166 = tpu.matmul %165, %84, %cst_176 {dimension_numbers = #tpu.dot_dimension_numbers<[1], [0], [0], [1], [0, 0, 1, 1], [], []>} : vector<8x32xf32>, vector<32x32xf32>, vector<8x32xf32> -> vector<8x32xf32>
    %167 = vector.broadcast %82 : vector<1x32xf32> to vector<8x32xf32>
    %168 = arith.addf %166, %167 : vector<8x32xf32>
    %cst_177 = arith.constant 0.000000e+00 : f32
    %169 = vector.broadcast %cst_177 : f32 to vector<8x32xf32>
    %170 = arith.maximumf %168, %169 : vector<8x32xf32>
    %cst_178 = arith.constant dense<0.000000e+00> : vector<8x16xf32>
    %171 = tpu.matmul %5, %12, %cst_178 {dimension_numbers = #tpu.dot_dimension_numbers<[1], [0], [0], [1], [0, 0, 1, 1], [], []>} : vector<8x16xf32>, vector<16x16xf32>, vector<8x16xf32> -> vector<8x16xf32>
    %cst_179 = arith.constant dense<0.000000e+00> : vector<8x3xf32>
    %172 = tpu.matmul %5, %3, %cst_179 {dimension_numbers = #tpu.dot_dimension_numbers<[1], [0], [0], [1], [0, 0, 1, 1], [], []>} : vector<8x16xf32>, vector<16x3xf32>, vector<8x3xf32> -> vector<8x3xf32>
    %173 = arith.subf %107, %172 : vector<8x3xf32>
    %174 = arith.mulf %173, %173 : vector<8x3xf32>
    %cst_180 = arith.constant dense<0.000000e+00> : vector<8xf32>
    %175 = vector.multi_reduction <add>, %174, %cst_180 [1] : vector<8x3xf32> to vector<8xf32>
    %176 = vector.shape_cast %175 : vector<8xf32> to vector<8x1xf32>
    %cst_181 = arith.constant dense<0.000000e+00> : vector<8x32xf32>
    %177 = tpu.matmul %17, %56, %cst_181 {dimension_numbers = #tpu.dot_dimension_numbers<[1], [0], [0], [1], [0, 0, 1, 1], [], []>} : vector<8x16xf32>, vector<16x32xf32>, vector<8x32xf32> -> vector<8x32xf32>
    %cst_182 = arith.constant dense<0.000000e+00> : vector<8x32xf32>
    %178 = tpu.matmul %171, %52, %cst_182 {dimension_numbers = #tpu.dot_dimension_numbers<[1], [0], [0], [1], [0, 0, 1, 1], [], []>} : vector<8x16xf32>, vector<16x32xf32>, vector<8x32xf32> -> vector<8x32xf32>
    %179 = arith.addf %177, %178 : vector<8x32xf32>
    %180 = vector.broadcast %176 : vector<8x1xf32> to vector<8x32xf32>
    %181 = vector.broadcast %54 : vector<1x32xf32> to vector<8x32xf32>
    %182 = arith.mulf %180, %181 : vector<8x32xf32>
    %183 = arith.addf %179, %182 : vector<8x32xf32>
    %184 = vector.broadcast %50 : vector<1x32xf32> to vector<8x32xf32>
    %185 = arith.addf %183, %184 : vector<8x32xf32>
    %cst_183 = arith.constant 0.000000e+00 : f32
    %186 = vector.broadcast %cst_183 : f32 to vector<8x32xf32>
    %187 = arith.maximumf %185, %186 : vector<8x32xf32>
    %cst_184 = arith.constant dense<0.000000e+00> : vector<8x32xf32>
    %188 = tpu.matmul %187, %60, %cst_184 {dimension_numbers = #tpu.dot_dimension_numbers<[1], [0], [0], [1], [0, 0, 1, 1], [], []>} : vector<8x32xf32>, vector<32x32xf32>, vector<8x32xf32> -> vector<8x32xf32>
    %189 = vector.broadcast %58 : vector<1x32xf32> to vector<8x32xf32>
    %190 = arith.addf %188, %189 : vector<8x32xf32>
    %cst_185 = arith.constant 0.000000e+00 : f32
    %191 = vector.broadcast %cst_185 : f32 to vector<8x32xf32>
    %192 = arith.maximumf %190, %191 : vector<8x32xf32>
    %cst_186 = arith.constant dense<0.000000e+00> : vector<8x32xf32>
    %193 = tpu.matmul %17, %68, %cst_186 {dimension_numbers = #tpu.dot_dimension_numbers<[1], [0], [0], [1], [0, 0, 1, 1], [], []>} : vector<8x16xf32>, vector<16x32xf32>, vector<8x32xf32> -> vector<8x32xf32>
    %cst_187 = arith.constant dense<0.000000e+00> : vector<8x32xf32>
    %194 = tpu.matmul %170, %66, %cst_187 {dimension_numbers = #tpu.dot_dimension_numbers<[1], [0], [0], [1], [0, 0, 1, 1], [], []>} : vector<8x32xf32>, vector<32x32xf32>, vector<8x32xf32> -> vector<8x32xf32>
    %195 = arith.addf %193, %194 : vector<8x32xf32>
    %cst_188 = arith.constant dense<0.000000e+00> : vector<8x32xf32>
    %196 = tpu.matmul %192, %64, %cst_188 {dimension_numbers = #tpu.dot_dimension_numbers<[1], [0], [0], [1], [0, 0, 1, 1], [], []>} : vector<8x32xf32>, vector<32x32xf32>, vector<8x32xf32> -> vector<8x32xf32>
    %197 = arith.addf %195, %196 : vector<8x32xf32>
    %198 = vector.broadcast %62 : vector<1x32xf32> to vector<8x32xf32>
    %199 = arith.addf %197, %198 : vector<8x32xf32>
    %cst_189 = arith.constant 0.000000e+00 : f32
    %200 = vector.broadcast %cst_189 : f32 to vector<8x32xf32>
    %201 = arith.maximumf %199, %200 : vector<8x32xf32>
    %cst_190 = arith.constant dense<0.000000e+00> : vector<8x16xf32>
    %202 = tpu.matmul %201, %72, %cst_190 {dimension_numbers = #tpu.dot_dimension_numbers<[1], [0], [0], [1], [0, 0, 1, 1], [], []>} : vector<8x32xf32>, vector<32x16xf32>, vector<8x16xf32> -> vector<8x16xf32>
    %203 = arith.addf %17, %202 : vector<8x16xf32>
    %204 = vector.broadcast %70 : vector<1x16xf32> to vector<8x16xf32>
    %205 = arith.addf %203, %204 : vector<8x16xf32>
    %cst_191 = arith.constant dense<0.000000e+00> : vector<4x16xf32>
    %206 = tpu.matmul %7, %17, %cst_191 {dimension_numbers = #tpu.dot_dimension_numbers<[1], [0], [0], [1], [0, 0, 1, 1], [], []>} : vector<4x8xf32>, vector<8x16xf32>, vector<4x16xf32> -> vector<4x16xf32>
    %cst_192 = arith.constant dense<0.000000e+00> : vector<4x3xf32>
    %207 = tpu.matmul %7, %107, %cst_192 {dimension_numbers = #tpu.dot_dimension_numbers<[1], [0], [0], [1], [0, 0, 1, 1], [], []>} : vector<4x8xf32>, vector<8x3xf32>, vector<4x3xf32> -> vector<4x3xf32>
    %208 = arith.subf %108, %207 : vector<4x3xf32>
    %209 = arith.mulf %208, %208 : vector<4x3xf32>
    %cst_193 = arith.constant dense<0.000000e+00> : vector<4xf32>
    %210 = vector.multi_reduction <add>, %209, %cst_193 [1] : vector<4x3xf32> to vector<4xf32>
    %211 = vector.shape_cast %210 : vector<4xf32> to vector<4x1xf32>
    %cst_194 = arith.constant dense<0.000000e+00> : vector<4x32xf32>
    %212 = tpu.matmul %22, %92, %cst_194 {dimension_numbers = #tpu.dot_dimension_numbers<[1], [0], [0], [1], [0, 0, 1, 1], [], []>} : vector<4x16xf32>, vector<16x32xf32>, vector<4x32xf32> -> vector<4x32xf32>
    %cst_195 = arith.constant dense<0.000000e+00> : vector<4x32xf32>
    %213 = tpu.matmul %206, %88, %cst_195 {dimension_numbers = #tpu.dot_dimension_numbers<[1], [0], [0], [1], [0, 0, 1, 1], [], []>} : vector<4x16xf32>, vector<16x32xf32>, vector<4x32xf32> -> vector<4x32xf32>
    %214 = arith.addf %212, %213 : vector<4x32xf32>
    %215 = vector.broadcast %211 : vector<4x1xf32> to vector<4x32xf32>
    %216 = vector.broadcast %90 : vector<1x32xf32> to vector<4x32xf32>
    %217 = arith.mulf %215, %216 : vector<4x32xf32>
    %218 = arith.addf %214, %217 : vector<4x32xf32>
    %219 = vector.broadcast %86 : vector<1x32xf32> to vector<4x32xf32>
    %220 = arith.addf %218, %219 : vector<4x32xf32>
    %cst_196 = arith.constant 0.000000e+00 : f32
    %221 = vector.broadcast %cst_196 : f32 to vector<4x32xf32>
    %222 = arith.maximumf %220, %221 : vector<4x32xf32>
    %cst_197 = arith.constant dense<0.000000e+00> : vector<4x32xf32>
    %223 = tpu.matmul %222, %96, %cst_197 {dimension_numbers = #tpu.dot_dimension_numbers<[1], [0], [0], [1], [0, 0, 1, 1], [], []>} : vector<4x32xf32>, vector<32x32xf32>, vector<4x32xf32> -> vector<4x32xf32>
    %224 = vector.broadcast %94 : vector<1x32xf32> to vector<4x32xf32>
    %225 = arith.addf %223, %224 : vector<4x32xf32>
    %cst_198 = arith.constant 0.000000e+00 : f32
    %226 = vector.broadcast %cst_198 : f32 to vector<4x32xf32>
    %227 = arith.maximumf %225, %226 : vector<4x32xf32>
    %cst_199 = arith.constant dense<0.000000e+00> : vector<4x32xf32>
    %228 = tpu.matmul %22, %102, %cst_199 {dimension_numbers = #tpu.dot_dimension_numbers<[1], [0], [0], [1], [0, 0, 1, 1], [], []>} : vector<4x16xf32>, vector<16x32xf32>, vector<4x32xf32> -> vector<4x32xf32>
    %cst_200 = arith.constant dense<0.000000e+00> : vector<4x32xf32>
    %229 = tpu.matmul %227, %100, %cst_200 {dimension_numbers = #tpu.dot_dimension_numbers<[1], [0], [0], [1], [0, 0, 1, 1], [], []>} : vector<4x32xf32>, vector<32x32xf32>, vector<4x32xf32> -> vector<4x32xf32>
    %230 = arith.addf %228, %229 : vector<4x32xf32>
    %231 = vector.broadcast %98 : vector<1x32xf32> to vector<4x32xf32>
    %232 = arith.addf %230, %231 : vector<4x32xf32>
    %cst_201 = arith.constant 0.000000e+00 : f32
    %233 = vector.broadcast %cst_201 : f32 to vector<4x32xf32>
    %234 = arith.maximumf %232, %233 : vector<4x32xf32>
    %cst_202 = arith.constant dense<0.000000e+00> : vector<4x16xf32>
    %235 = tpu.matmul %234, %106, %cst_202 {dimension_numbers = #tpu.dot_dimension_numbers<[1], [0], [0], [1], [0, 0, 1, 1], [], []>} : vector<4x32xf32>, vector<32x16xf32>, vector<4x16xf32> -> vector<4x16xf32>
    %236 = arith.addf %22, %235 : vector<4x16xf32>
    %237 = vector.broadcast %104 : vector<1x16xf32> to vector<4x16xf32>
    %238 = arith.addf %236, %237 : vector<4x16xf32>
    %c1 = arith.constant 1 : index
    %c0_203 = arith.constant 0 : index
    %c0_204 = arith.constant 0 : index
    %239 = vector.load %arg25[%c1, %c0_203, %c0_204] : memref<2x1x32xf32, #tpu.memory_space<vmem>>, vector<1x1x32xf32>
    %240 = vector.shape_cast %239 : vector<1x1x32xf32> to vector<1x32xf32>
    %c1_205 = arith.constant 1 : index
    %c0_206 = arith.constant 0 : index
    %c0_207 = arith.constant 0 : index
    %241 = vector.load %arg26[%c1_205, %c0_206, %c0_207] : memref<2x32x32xf32, #tpu.memory_space<vmem>>, vector<1x32x32xf32>
    %242 = vector.shape_cast %241 : vector<1x32x32xf32> to vector<32x32xf32>
    %c1_208 = arith.constant 1 : index
    %c0_209 = arith.constant 0 : index
    %c0_210 = arith.constant 0 : index
    %243 = vector.load %arg27[%c1_208, %c0_209, %c0_210] : memref<2x16x32xf32, #tpu.memory_space<vmem>>, vector<1x16x32xf32>
    %244 = vector.shape_cast %243 : vector<1x16x32xf32> to vector<16x32xf32>
    %c1_211 = arith.constant 1 : index
    %c0_212 = arith.constant 0 : index
    %c0_213 = arith.constant 0 : index
    %245 = vector.load %arg28[%c1_211, %c0_212, %c0_213] : memref<2x1x16xf32, #tpu.memory_space<vmem>>, vector<1x1x16xf32>
    %246 = vector.shape_cast %245 : vector<1x1x16xf32> to vector<1x16xf32>
    %c1_214 = arith.constant 1 : index
    %c0_215 = arith.constant 0 : index
    %c0_216 = arith.constant 0 : index
    %247 = vector.load %arg29[%c1_214, %c0_215, %c0_216] : memref<2x32x16xf32, #tpu.memory_space<vmem>>, vector<1x32x16xf32>
    %248 = vector.shape_cast %247 : vector<1x32x16xf32> to vector<32x16xf32>
    %c1_217 = arith.constant 1 : index
    %c0_218 = arith.constant 0 : index
    %c0_219 = arith.constant 0 : index
    %249 = vector.load %arg30[%c1_217, %c0_218, %c0_219] : memref<2x1x32xf32, #tpu.memory_space<vmem>>, vector<1x1x32xf32>
    %250 = vector.shape_cast %249 : vector<1x1x32xf32> to vector<1x32xf32>
    %c1_220 = arith.constant 1 : index
    %c0_221 = arith.constant 0 : index
    %c0_222 = arith.constant 0 : index
    %251 = vector.load %arg31[%c1_220, %c0_221, %c0_222] : memref<2x16x32xf32, #tpu.memory_space<vmem>>, vector<1x16x32xf32>
    %252 = vector.shape_cast %251 : vector<1x16x32xf32> to vector<16x32xf32>
    %c1_223 = arith.constant 1 : index
    %c0_224 = arith.constant 0 : index
    %c0_225 = arith.constant 0 : index
    %253 = vector.load %arg32[%c1_223, %c0_224, %c0_225] : memref<2x1x32xf32, #tpu.memory_space<vmem>>, vector<1x1x32xf32>
    %254 = vector.shape_cast %253 : vector<1x1x32xf32> to vector<1x32xf32>
    %c1_226 = arith.constant 1 : index
    %c0_227 = arith.constant 0 : index
    %c0_228 = arith.constant 0 : index
    %255 = vector.load %arg33[%c1_226, %c0_227, %c0_228] : memref<2x16x32xf32, #tpu.memory_space<vmem>>, vector<1x16x32xf32>
    %256 = vector.shape_cast %255 : vector<1x16x32xf32> to vector<16x32xf32>
    %c1_229 = arith.constant 1 : index
    %c0_230 = arith.constant 0 : index
    %c0_231 = arith.constant 0 : index
    %257 = vector.load %arg34[%c1_229, %c0_230, %c0_231] : memref<2x1x32xf32, #tpu.memory_space<vmem>>, vector<1x1x32xf32>
    %258 = vector.shape_cast %257 : vector<1x1x32xf32> to vector<1x32xf32>
    %c1_232 = arith.constant 1 : index
    %c0_233 = arith.constant 0 : index
    %c0_234 = arith.constant 0 : index
    %259 = vector.load %arg35[%c1_232, %c0_233, %c0_234] : memref<2x32x32xf32, #tpu.memory_space<vmem>>, vector<1x32x32xf32>
    %260 = vector.shape_cast %259 : vector<1x32x32xf32> to vector<32x32xf32>
    %c1_235 = arith.constant 1 : index
    %c0_236 = arith.constant 0 : index
    %c0_237 = arith.constant 0 : index
    %261 = vector.load %arg38[%c1_235, %c0_236, %c0_237] : memref<2x1x32xf32, #tpu.memory_space<vmem>>, vector<1x1x32xf32>
    %262 = vector.shape_cast %261 : vector<1x1x32xf32> to vector<1x32xf32>
    %c1_238 = arith.constant 1 : index
    %c0_239 = arith.constant 0 : index
    %c0_240 = arith.constant 0 : index
    %263 = vector.load %arg39[%c1_238, %c0_239, %c0_240] : memref<2x16x32xf32, #tpu.memory_space<vmem>>, vector<1x16x32xf32>
    %264 = vector.shape_cast %263 : vector<1x16x32xf32> to vector<16x32xf32>
    %c1_241 = arith.constant 1 : index
    %c0_242 = arith.constant 0 : index
    %c0_243 = arith.constant 0 : index
    %265 = vector.load %arg40[%c1_241, %c0_242, %c0_243] : memref<2x1x32xf32, #tpu.memory_space<vmem>>, vector<1x1x32xf32>
    %266 = vector.shape_cast %265 : vector<1x1x32xf32> to vector<1x32xf32>
    %c1_244 = arith.constant 1 : index
    %c0_245 = arith.constant 0 : index
    %c0_246 = arith.constant 0 : index
    %267 = vector.load %arg41[%c1_244, %c0_245, %c0_246] : memref<2x16x32xf32, #tpu.memory_space<vmem>>, vector<1x16x32xf32>
    %268 = vector.shape_cast %267 : vector<1x16x32xf32> to vector<16x32xf32>
    %c1_247 = arith.constant 1 : index
    %c0_248 = arith.constant 0 : index
    %c0_249 = arith.constant 0 : index
    %269 = vector.load %arg42[%c1_247, %c0_248, %c0_249] : memref<2x1x32xf32, #tpu.memory_space<vmem>>, vector<1x1x32xf32>
    %270 = vector.shape_cast %269 : vector<1x1x32xf32> to vector<1x32xf32>
    %c1_250 = arith.constant 1 : index
    %c0_251 = arith.constant 0 : index
    %c0_252 = arith.constant 0 : index
    %271 = vector.load %arg43[%c1_250, %c0_251, %c0_252] : memref<2x32x32xf32, #tpu.memory_space<vmem>>, vector<1x32x32xf32>
    %272 = vector.shape_cast %271 : vector<1x32x32xf32> to vector<32x32xf32>
    %c1_253 = arith.constant 1 : index
    %c0_254 = arith.constant 0 : index
    %c0_255 = arith.constant 0 : index
    %273 = vector.load %arg44[%c1_253, %c0_254, %c0_255] : memref<2x1x32xf32, #tpu.memory_space<vmem>>, vector<1x1x32xf32>
    %274 = vector.shape_cast %273 : vector<1x1x32xf32> to vector<1x32xf32>
    %c1_256 = arith.constant 1 : index
    %c0_257 = arith.constant 0 : index
    %c0_258 = arith.constant 0 : index
    %275 = vector.load %arg45[%c1_256, %c0_257, %c0_258] : memref<2x32x32xf32, #tpu.memory_space<vmem>>, vector<1x32x32xf32>
    %276 = vector.shape_cast %275 : vector<1x32x32xf32> to vector<32x32xf32>
    %c1_259 = arith.constant 1 : index
    %c0_260 = arith.constant 0 : index
    %c0_261 = arith.constant 0 : index
    %277 = vector.load %arg46[%c1_259, %c0_260, %c0_261] : memref<2x32x32xf32, #tpu.memory_space<vmem>>, vector<1x32x32xf32>
    %278 = vector.shape_cast %277 : vector<1x32x32xf32> to vector<32x32xf32>
    %c1_262 = arith.constant 1 : index
    %c0_263 = arith.constant 0 : index
    %c0_264 = arith.constant 0 : index
    %279 = vector.load %arg47[%c1_262, %c0_263, %c0_264] : memref<2x16x32xf32, #tpu.memory_space<vmem>>, vector<1x16x32xf32>
    %280 = vector.shape_cast %279 : vector<1x16x32xf32> to vector<16x32xf32>
    %c1_265 = arith.constant 1 : index
    %c0_266 = arith.constant 0 : index
    %c0_267 = arith.constant 0 : index
    %281 = vector.load %arg48[%c1_265, %c0_266, %c0_267] : memref<2x1x16xf32, #tpu.memory_space<vmem>>, vector<1x1x16xf32>
    %282 = vector.shape_cast %281 : vector<1x1x16xf32> to vector<1x16xf32>
    %c1_268 = arith.constant 1 : index
    %c0_269 = arith.constant 0 : index
    %c0_270 = arith.constant 0 : index
    %283 = vector.load %arg49[%c1_268, %c0_269, %c0_270] : memref<2x32x16xf32, #tpu.memory_space<vmem>>, vector<1x32x16xf32>
    %284 = vector.shape_cast %283 : vector<1x32x16xf32> to vector<32x16xf32>
    %c1_271 = arith.constant 1 : index
    %c0_272 = arith.constant 0 : index
    %c0_273 = arith.constant 0 : index
    %285 = vector.load %arg50[%c1_271, %c0_272, %c0_273] : memref<2x1x32xf32, #tpu.memory_space<vmem>>, vector<1x1x32xf32>
    %286 = vector.shape_cast %285 : vector<1x1x32xf32> to vector<1x32xf32>
    %c1_274 = arith.constant 1 : index
    %c0_275 = arith.constant 0 : index
    %c0_276 = arith.constant 0 : index
    %287 = vector.load %arg51[%c1_274, %c0_275, %c0_276] : memref<2x16x32xf32, #tpu.memory_space<vmem>>, vector<1x16x32xf32>
    %288 = vector.shape_cast %287 : vector<1x16x32xf32> to vector<16x32xf32>
    %c1_277 = arith.constant 1 : index
    %c0_278 = arith.constant 0 : index
    %c0_279 = arith.constant 0 : index
    %289 = vector.load %arg52[%c1_277, %c0_278, %c0_279] : memref<2x1x32xf32, #tpu.memory_space<vmem>>, vector<1x1x32xf32>
    %290 = vector.shape_cast %289 : vector<1x1x32xf32> to vector<1x32xf32>
    %c1_280 = arith.constant 1 : index
    %c0_281 = arith.constant 0 : index
    %c0_282 = arith.constant 0 : index
    %291 = vector.load %arg53[%c1_280, %c0_281, %c0_282] : memref<2x16x32xf32, #tpu.memory_space<vmem>>, vector<1x16x32xf32>
    %292 = vector.shape_cast %291 : vector<1x16x32xf32> to vector<16x32xf32>
    %c1_283 = arith.constant 1 : index
    %c0_284 = arith.constant 0 : index
    %c0_285 = arith.constant 0 : index
    %293 = vector.load %arg54[%c1_283, %c0_284, %c0_285] : memref<2x1x32xf32, #tpu.memory_space<vmem>>, vector<1x1x32xf32>
    %294 = vector.shape_cast %293 : vector<1x1x32xf32> to vector<1x32xf32>
    %c1_286 = arith.constant 1 : index
    %c0_287 = arith.constant 0 : index
    %c0_288 = arith.constant 0 : index
    %295 = vector.load %arg55[%c1_286, %c0_287, %c0_288] : memref<2x32x32xf32, #tpu.memory_space<vmem>>, vector<1x32x32xf32>
    %296 = vector.shape_cast %295 : vector<1x32x32xf32> to vector<32x32xf32>
    %c1_289 = arith.constant 1 : index
    %c0_290 = arith.constant 0 : index
    %c0_291 = arith.constant 0 : index
    %297 = vector.load %arg56[%c1_289, %c0_290, %c0_291] : memref<2x1x32xf32, #tpu.memory_space<vmem>>, vector<1x1x32xf32>
    %298 = vector.shape_cast %297 : vector<1x1x32xf32> to vector<1x32xf32>
    %c1_292 = arith.constant 1 : index
    %c0_293 = arith.constant 0 : index
    %c0_294 = arith.constant 0 : index
    %299 = vector.load %arg57[%c1_292, %c0_293, %c0_294] : memref<2x16x32xf32, #tpu.memory_space<vmem>>, vector<1x16x32xf32>
    %300 = vector.shape_cast %299 : vector<1x16x32xf32> to vector<16x32xf32>
    %c1_295 = arith.constant 1 : index
    %c0_296 = arith.constant 0 : index
    %c0_297 = arith.constant 0 : index
    %301 = vector.load %arg58[%c1_295, %c0_296, %c0_297] : memref<2x1x32xf32, #tpu.memory_space<vmem>>, vector<1x1x32xf32>
    %302 = vector.shape_cast %301 : vector<1x1x32xf32> to vector<1x32xf32>
    %c1_298 = arith.constant 1 : index
    %c0_299 = arith.constant 0 : index
    %c0_300 = arith.constant 0 : index
    %303 = vector.load %arg59[%c1_298, %c0_299, %c0_300] : memref<2x16x32xf32, #tpu.memory_space<vmem>>, vector<1x16x32xf32>
    %304 = vector.shape_cast %303 : vector<1x16x32xf32> to vector<16x32xf32>
    %c1_301 = arith.constant 1 : index
    %c0_302 = arith.constant 0 : index
    %c0_303 = arith.constant 0 : index
    %305 = vector.load %arg60[%c1_301, %c0_302, %c0_303] : memref<2x1x32xf32, #tpu.memory_space<vmem>>, vector<1x1x32xf32>
    %306 = vector.shape_cast %305 : vector<1x1x32xf32> to vector<1x32xf32>
    %c1_304 = arith.constant 1 : index
    %c0_305 = arith.constant 0 : index
    %c0_306 = arith.constant 0 : index
    %307 = vector.load %arg61[%c1_304, %c0_305, %c0_306] : memref<2x32x32xf32, #tpu.memory_space<vmem>>, vector<1x32x32xf32>
    %308 = vector.shape_cast %307 : vector<1x32x32xf32> to vector<32x32xf32>
    %c1_307 = arith.constant 1 : index
    %c0_308 = arith.constant 0 : index
    %c0_309 = arith.constant 0 : index
    %309 = vector.load %arg62[%c1_307, %c0_308, %c0_309] : memref<2x1x32xf32, #tpu.memory_space<vmem>>, vector<1x1x32xf32>
    %310 = vector.shape_cast %309 : vector<1x1x32xf32> to vector<1x32xf32>
    %c1_310 = arith.constant 1 : index
    %c0_311 = arith.constant 0 : index
    %c0_312 = arith.constant 0 : index
    %311 = vector.load %arg63[%c1_310, %c0_311, %c0_312] : memref<2x32x32xf32, #tpu.memory_space<vmem>>, vector<1x32x32xf32>
    %312 = vector.shape_cast %311 : vector<1x32x32xf32> to vector<32x32xf32>
    %c1_313 = arith.constant 1 : index
    %c0_314 = arith.constant 0 : index
    %c0_315 = arith.constant 0 : index
    %313 = vector.load %arg64[%c1_313, %c0_314, %c0_315] : memref<2x16x32xf32, #tpu.memory_space<vmem>>, vector<1x16x32xf32>
    %314 = vector.shape_cast %313 : vector<1x16x32xf32> to vector<16x32xf32>
    %c1_316 = arith.constant 1 : index
    %c0_317 = arith.constant 0 : index
    %c0_318 = arith.constant 0 : index
    %315 = vector.load %arg65[%c1_316, %c0_317, %c0_318] : memref<2x1x16xf32, #tpu.memory_space<vmem>>, vector<1x1x16xf32>
    %316 = vector.shape_cast %315 : vector<1x1x16xf32> to vector<1x16xf32>
    %c1_319 = arith.constant 1 : index
    %c0_320 = arith.constant 0 : index
    %c0_321 = arith.constant 0 : index
    %317 = vector.load %arg66[%c1_319, %c0_320, %c0_321] : memref<2x32x16xf32, #tpu.memory_space<vmem>>, vector<1x32x16xf32>
    %318 = vector.shape_cast %317 : vector<1x32x16xf32> to vector<32x16xf32>
    %cst_322 = arith.constant dense<0.000000e+00> : vector<8x3xf32>
    %319 = tpu.matmul %5, %148, %cst_322 {dimension_numbers = #tpu.dot_dimension_numbers<[1], [0], [0], [1], [0, 0, 1, 1], [], []>} : vector<8x16xf32>, vector<16x3xf32>, vector<8x3xf32> -> vector<8x3xf32>
    %cst_323 = arith.constant dense<0.000000e+00> : vector<4x3xf32>
    %320 = tpu.matmul %7, %319, %cst_323 {dimension_numbers = #tpu.dot_dimension_numbers<[1], [0], [0], [1], [0, 0, 1, 1], [], []>} : vector<4x8xf32>, vector<8x3xf32>, vector<4x3xf32> -> vector<4x3xf32>
    %cst_324 = arith.constant dense<0.000000e+00> : vector<16x16xf32>
    %321 = tpu.matmul %4, %205, %cst_324 {dimension_numbers = #tpu.dot_dimension_numbers<[1], [0], [0], [1], [0, 0, 1, 1], [], []>} : vector<16x8xf32>, vector<8x16xf32>, vector<16x16xf32> -> vector<16x16xf32>
    %cst_325 = arith.constant dense<0.000000e+00> : vector<16x3xf32>
    %322 = tpu.matmul %4, %319, %cst_325 {dimension_numbers = #tpu.dot_dimension_numbers<[1], [0], [0], [1], [0, 0, 1, 1], [], []>} : vector<16x8xf32>, vector<8x3xf32>, vector<16x3xf32> -> vector<16x3xf32>
    %323 = arith.subf %148, %322 : vector<16x3xf32>
    %324 = arith.mulf %323, %323 : vector<16x3xf32>
    %cst_326 = arith.constant dense<0.000000e+00> : vector<16xf32>
    %325 = vector.multi_reduction <add>, %324, %cst_326 [1] : vector<16x3xf32> to vector<16xf32>
    %326 = vector.shape_cast %325 : vector<16xf32> to vector<16x1xf32>
    %cst_327 = arith.constant dense<0.000000e+00> : vector<16x32xf32>
    %327 = tpu.matmul %141, %256, %cst_327 {dimension_numbers = #tpu.dot_dimension_numbers<[1], [0], [0], [1], [0, 0, 1, 1], [], []>} : vector<16x16xf32>, vector<16x32xf32>, vector<16x32xf32> -> vector<16x32xf32>
    %cst_328 = arith.constant dense<0.000000e+00> : vector<16x32xf32>
    %328 = tpu.matmul %321, %252, %cst_328 {dimension_numbers = #tpu.dot_dimension_numbers<[1], [0], [0], [1], [0, 0, 1, 1], [], []>} : vector<16x16xf32>, vector<16x32xf32>, vector<16x32xf32> -> vector<16x32xf32>
    %329 = arith.addf %327, %328 : vector<16x32xf32>
    %330 = vector.broadcast %326 : vector<16x1xf32> to vector<16x32xf32>
    %331 = vector.broadcast %254 : vector<1x32xf32> to vector<16x32xf32>
    %332 = arith.mulf %330, %331 : vector<16x32xf32>
    %333 = arith.addf %329, %332 : vector<16x32xf32>
    %334 = vector.broadcast %250 : vector<1x32xf32> to vector<16x32xf32>
    %335 = arith.addf %333, %334 : vector<16x32xf32>
    %cst_329 = arith.constant 0.000000e+00 : f32
    %336 = vector.broadcast %cst_329 : f32 to vector<16x32xf32>
    %337 = arith.maximumf %335, %336 : vector<16x32xf32>
    %cst_330 = arith.constant dense<0.000000e+00> : vector<16x32xf32>
    %338 = tpu.matmul %337, %260, %cst_330 {dimension_numbers = #tpu.dot_dimension_numbers<[1], [0], [0], [1], [0, 0, 1, 1], [], []>} : vector<16x32xf32>, vector<32x32xf32>, vector<16x32xf32> -> vector<16x32xf32>
    %339 = vector.broadcast %258 : vector<1x32xf32> to vector<16x32xf32>
    %340 = arith.addf %338, %339 : vector<16x32xf32>
    %cst_331 = arith.constant 0.000000e+00 : f32
    %341 = vector.broadcast %cst_331 : f32 to vector<16x32xf32>
    %342 = arith.maximumf %340, %341 : vector<16x32xf32>
    %cst_332 = arith.constant dense<0.000000e+00> : vector<16x32xf32>
    %343 = tpu.matmul %141, %244, %cst_332 {dimension_numbers = #tpu.dot_dimension_numbers<[1], [0], [0], [1], [0, 0, 1, 1], [], []>} : vector<16x16xf32>, vector<16x32xf32>, vector<16x32xf32> -> vector<16x32xf32>
    %cst_333 = arith.constant dense<0.000000e+00> : vector<16x32xf32>
    %344 = tpu.matmul %342, %242, %cst_333 {dimension_numbers = #tpu.dot_dimension_numbers<[1], [0], [0], [1], [0, 0, 1, 1], [], []>} : vector<16x32xf32>, vector<32x32xf32>, vector<16x32xf32> -> vector<16x32xf32>
    %345 = arith.addf %343, %344 : vector<16x32xf32>
    %346 = vector.broadcast %240 : vector<1x32xf32> to vector<16x32xf32>
    %347 = arith.addf %345, %346 : vector<16x32xf32>
    %cst_334 = arith.constant 0.000000e+00 : f32
    %348 = vector.broadcast %cst_334 : f32 to vector<16x32xf32>
    %349 = arith.maximumf %347, %348 : vector<16x32xf32>
    %cst_335 = arith.constant dense<0.000000e+00> : vector<16x16xf32>
    %350 = tpu.matmul %349, %248, %cst_335 {dimension_numbers = #tpu.dot_dimension_numbers<[1], [0], [0], [1], [0, 0, 1, 1], [], []>} : vector<16x32xf32>, vector<32x16xf32>, vector<16x16xf32> -> vector<16x16xf32>
    %351 = arith.addf %141, %350 : vector<16x16xf32>
    %352 = vector.broadcast %246 : vector<1x16xf32> to vector<16x16xf32>
    %353 = arith.addf %351, %352 : vector<16x16xf32>
    %cst_336 = arith.constant dense<0.000000e+00> : vector<8x16xf32>
    %354 = tpu.matmul %6, %238, %cst_336 {dimension_numbers = #tpu.dot_dimension_numbers<[1], [0], [0], [1], [0, 0, 1, 1], [], []>} : vector<8x4xf32>, vector<4x16xf32>, vector<8x16xf32> -> vector<8x16xf32>
    %cst_337 = arith.constant dense<0.000000e+00> : vector<8x3xf32>
    %355 = tpu.matmul %6, %320, %cst_337 {dimension_numbers = #tpu.dot_dimension_numbers<[1], [0], [0], [1], [0, 0, 1, 1], [], []>} : vector<8x4xf32>, vector<4x3xf32>, vector<8x3xf32> -> vector<8x3xf32>
    %356 = arith.subf %319, %355 : vector<8x3xf32>
    %357 = arith.mulf %356, %356 : vector<8x3xf32>
    %cst_338 = arith.constant dense<0.000000e+00> : vector<8xf32>
    %358 = vector.multi_reduction <add>, %357, %cst_338 [1] : vector<8x3xf32> to vector<8xf32>
    %359 = vector.shape_cast %358 : vector<8xf32> to vector<8x1xf32>
    %cst_339 = arith.constant dense<0.000000e+00> : vector<8x32xf32>
    %360 = tpu.matmul %205, %292, %cst_339 {dimension_numbers = #tpu.dot_dimension_numbers<[1], [0], [0], [1], [0, 0, 1, 1], [], []>} : vector<8x16xf32>, vector<16x32xf32>, vector<8x32xf32> -> vector<8x32xf32>
    %cst_340 = arith.constant dense<0.000000e+00> : vector<8x32xf32>
    %361 = tpu.matmul %354, %288, %cst_340 {dimension_numbers = #tpu.dot_dimension_numbers<[1], [0], [0], [1], [0, 0, 1, 1], [], []>} : vector<8x16xf32>, vector<16x32xf32>, vector<8x32xf32> -> vector<8x32xf32>
    %362 = arith.addf %360, %361 : vector<8x32xf32>
    %363 = vector.broadcast %359 : vector<8x1xf32> to vector<8x32xf32>
    %364 = vector.broadcast %290 : vector<1x32xf32> to vector<8x32xf32>
    %365 = arith.mulf %363, %364 : vector<8x32xf32>
    %366 = arith.addf %362, %365 : vector<8x32xf32>
    %367 = vector.broadcast %286 : vector<1x32xf32> to vector<8x32xf32>
    %368 = arith.addf %366, %367 : vector<8x32xf32>
    %cst_341 = arith.constant 0.000000e+00 : f32
    %369 = vector.broadcast %cst_341 : f32 to vector<8x32xf32>
    %370 = arith.maximumf %368, %369 : vector<8x32xf32>
    %cst_342 = arith.constant dense<0.000000e+00> : vector<8x32xf32>
    %371 = tpu.matmul %370, %296, %cst_342 {dimension_numbers = #tpu.dot_dimension_numbers<[1], [0], [0], [1], [0, 0, 1, 1], [], []>} : vector<8x32xf32>, vector<32x32xf32>, vector<8x32xf32> -> vector<8x32xf32>
    %372 = vector.broadcast %294 : vector<1x32xf32> to vector<8x32xf32>
    %373 = arith.addf %371, %372 : vector<8x32xf32>
    %cst_343 = arith.constant 0.000000e+00 : f32
    %374 = vector.broadcast %cst_343 : f32 to vector<8x32xf32>
    %375 = arith.maximumf %373, %374 : vector<8x32xf32>
    %cst_344 = arith.constant dense<0.000000e+00> : vector<8x16xf32>
    %376 = tpu.matmul %5, %141, %cst_344 {dimension_numbers = #tpu.dot_dimension_numbers<[1], [0], [0], [1], [0, 0, 1, 1], [], []>} : vector<8x16xf32>, vector<16x16xf32>, vector<8x16xf32> -> vector<8x16xf32>
    %cst_345 = arith.constant dense<0.000000e+00> : vector<8x3xf32>
    %377 = tpu.matmul %5, %148, %cst_345 {dimension_numbers = #tpu.dot_dimension_numbers<[1], [0], [0], [1], [0, 0, 1, 1], [], []>} : vector<8x16xf32>, vector<16x3xf32>, vector<8x3xf32> -> vector<8x3xf32>
    %378 = arith.subf %319, %377 : vector<8x3xf32>
    %379 = arith.mulf %378, %378 : vector<8x3xf32>
    %cst_346 = arith.constant dense<0.000000e+00> : vector<8xf32>
    %380 = vector.multi_reduction <add>, %379, %cst_346 [1] : vector<8x3xf32> to vector<8xf32>
    %381 = vector.shape_cast %380 : vector<8xf32> to vector<8x1xf32>
    %cst_347 = arith.constant dense<0.000000e+00> : vector<8x32xf32>
    %382 = tpu.matmul %205, %268, %cst_347 {dimension_numbers = #tpu.dot_dimension_numbers<[1], [0], [0], [1], [0, 0, 1, 1], [], []>} : vector<8x16xf32>, vector<16x32xf32>, vector<8x32xf32> -> vector<8x32xf32>
    %cst_348 = arith.constant dense<0.000000e+00> : vector<8x32xf32>
    %383 = tpu.matmul %376, %264, %cst_348 {dimension_numbers = #tpu.dot_dimension_numbers<[1], [0], [0], [1], [0, 0, 1, 1], [], []>} : vector<8x16xf32>, vector<16x32xf32>, vector<8x32xf32> -> vector<8x32xf32>
    %384 = arith.addf %382, %383 : vector<8x32xf32>
    %385 = vector.broadcast %381 : vector<8x1xf32> to vector<8x32xf32>
    %386 = vector.broadcast %266 : vector<1x32xf32> to vector<8x32xf32>
    %387 = arith.mulf %385, %386 : vector<8x32xf32>
    %388 = arith.addf %384, %387 : vector<8x32xf32>
    %389 = vector.broadcast %262 : vector<1x32xf32> to vector<8x32xf32>
    %390 = arith.addf %388, %389 : vector<8x32xf32>
    %cst_349 = arith.constant 0.000000e+00 : f32
    %391 = vector.broadcast %cst_349 : f32 to vector<8x32xf32>
    %392 = arith.maximumf %390, %391 : vector<8x32xf32>
    %cst_350 = arith.constant dense<0.000000e+00> : vector<8x32xf32>
    %393 = tpu.matmul %392, %272, %cst_350 {dimension_numbers = #tpu.dot_dimension_numbers<[1], [0], [0], [1], [0, 0, 1, 1], [], []>} : vector<8x32xf32>, vector<32x32xf32>, vector<8x32xf32> -> vector<8x32xf32>
    %394 = vector.broadcast %270 : vector<1x32xf32> to vector<8x32xf32>
    %395 = arith.addf %393, %394 : vector<8x32xf32>
    %cst_351 = arith.constant 0.000000e+00 : f32
    %396 = vector.broadcast %cst_351 : f32 to vector<8x32xf32>
    %397 = arith.maximumf %395, %396 : vector<8x32xf32>
    %cst_352 = arith.constant dense<0.000000e+00> : vector<8x32xf32>
    %398 = tpu.matmul %205, %280, %cst_352 {dimension_numbers = #tpu.dot_dimension_numbers<[1], [0], [0], [1], [0, 0, 1, 1], [], []>} : vector<8x16xf32>, vector<16x32xf32>, vector<8x32xf32> -> vector<8x32xf32>
    %cst_353 = arith.constant dense<0.000000e+00> : vector<8x32xf32>
    %399 = tpu.matmul %375, %278, %cst_353 {dimension_numbers = #tpu.dot_dimension_numbers<[1], [0], [0], [1], [0, 0, 1, 1], [], []>} : vector<8x32xf32>, vector<32x32xf32>, vector<8x32xf32> -> vector<8x32xf32>
    %400 = arith.addf %398, %399 : vector<8x32xf32>
    %cst_354 = arith.constant dense<0.000000e+00> : vector<8x32xf32>
    %401 = tpu.matmul %397, %276, %cst_354 {dimension_numbers = #tpu.dot_dimension_numbers<[1], [0], [0], [1], [0, 0, 1, 1], [], []>} : vector<8x32xf32>, vector<32x32xf32>, vector<8x32xf32> -> vector<8x32xf32>
    %402 = arith.addf %400, %401 : vector<8x32xf32>
    %403 = vector.broadcast %274 : vector<1x32xf32> to vector<8x32xf32>
    %404 = arith.addf %402, %403 : vector<8x32xf32>
    %cst_355 = arith.constant 0.000000e+00 : f32
    %405 = vector.broadcast %cst_355 : f32 to vector<8x32xf32>
    %406 = arith.maximumf %404, %405 : vector<8x32xf32>
    %cst_356 = arith.constant dense<0.000000e+00> : vector<8x16xf32>
    %407 = tpu.matmul %406, %284, %cst_356 {dimension_numbers = #tpu.dot_dimension_numbers<[1], [0], [0], [1], [0, 0, 1, 1], [], []>} : vector<8x32xf32>, vector<32x16xf32>, vector<8x16xf32> -> vector<8x16xf32>
    %408 = arith.addf %205, %407 : vector<8x16xf32>
    %409 = vector.broadcast %282 : vector<1x16xf32> to vector<8x16xf32>
    %410 = arith.addf %408, %409 : vector<8x16xf32>
    %cst_357 = arith.constant dense<0.000000e+00> : vector<4x16xf32>
    %411 = tpu.matmul %7, %205, %cst_357 {dimension_numbers = #tpu.dot_dimension_numbers<[1], [0], [0], [1], [0, 0, 1, 1], [], []>} : vector<4x8xf32>, vector<8x16xf32>, vector<4x16xf32> -> vector<4x16xf32>
    %cst_358 = arith.constant dense<0.000000e+00> : vector<4x3xf32>
    %412 = tpu.matmul %7, %319, %cst_358 {dimension_numbers = #tpu.dot_dimension_numbers<[1], [0], [0], [1], [0, 0, 1, 1], [], []>} : vector<4x8xf32>, vector<8x3xf32>, vector<4x3xf32> -> vector<4x3xf32>
    %413 = arith.subf %320, %412 : vector<4x3xf32>
    %414 = arith.mulf %413, %413 : vector<4x3xf32>
    %cst_359 = arith.constant dense<0.000000e+00> : vector<4xf32>
    %415 = vector.multi_reduction <add>, %414, %cst_359 [1] : vector<4x3xf32> to vector<4xf32>
    %416 = vector.shape_cast %415 : vector<4xf32> to vector<4x1xf32>
    %cst_360 = arith.constant dense<0.000000e+00> : vector<4x32xf32>
    %417 = tpu.matmul %238, %304, %cst_360 {dimension_numbers = #tpu.dot_dimension_numbers<[1], [0], [0], [1], [0, 0, 1, 1], [], []>} : vector<4x16xf32>, vector<16x32xf32>, vector<4x32xf32> -> vector<4x32xf32>
    %cst_361 = arith.constant dense<0.000000e+00> : vector<4x32xf32>
    %418 = tpu.matmul %411, %300, %cst_361 {dimension_numbers = #tpu.dot_dimension_numbers<[1], [0], [0], [1], [0, 0, 1, 1], [], []>} : vector<4x16xf32>, vector<16x32xf32>, vector<4x32xf32> -> vector<4x32xf32>
    %419 = arith.addf %417, %418 : vector<4x32xf32>
    %420 = vector.broadcast %416 : vector<4x1xf32> to vector<4x32xf32>
    %421 = vector.broadcast %302 : vector<1x32xf32> to vector<4x32xf32>
    %422 = arith.mulf %420, %421 : vector<4x32xf32>
    %423 = arith.addf %419, %422 : vector<4x32xf32>
    %424 = vector.broadcast %298 : vector<1x32xf32> to vector<4x32xf32>
    %425 = arith.addf %423, %424 : vector<4x32xf32>
    %cst_362 = arith.constant 0.000000e+00 : f32
    %426 = vector.broadcast %cst_362 : f32 to vector<4x32xf32>
    %427 = arith.maximumf %425, %426 : vector<4x32xf32>
    %cst_363 = arith.constant dense<0.000000e+00> : vector<4x32xf32>
    %428 = tpu.matmul %427, %308, %cst_363 {dimension_numbers = #tpu.dot_dimension_numbers<[1], [0], [0], [1], [0, 0, 1, 1], [], []>} : vector<4x32xf32>, vector<32x32xf32>, vector<4x32xf32> -> vector<4x32xf32>
    %429 = vector.broadcast %306 : vector<1x32xf32> to vector<4x32xf32>
    %430 = arith.addf %428, %429 : vector<4x32xf32>
    %cst_364 = arith.constant 0.000000e+00 : f32
    %431 = vector.broadcast %cst_364 : f32 to vector<4x32xf32>
    %432 = arith.maximumf %430, %431 : vector<4x32xf32>
    %cst_365 = arith.constant dense<0.000000e+00> : vector<4x32xf32>
    %433 = tpu.matmul %238, %314, %cst_365 {dimension_numbers = #tpu.dot_dimension_numbers<[1], [0], [0], [1], [0, 0, 1, 1], [], []>} : vector<4x16xf32>, vector<16x32xf32>, vector<4x32xf32> -> vector<4x32xf32>
    %cst_366 = arith.constant dense<0.000000e+00> : vector<4x32xf32>
    %434 = tpu.matmul %432, %312, %cst_366 {dimension_numbers = #tpu.dot_dimension_numbers<[1], [0], [0], [1], [0, 0, 1, 1], [], []>} : vector<4x32xf32>, vector<32x32xf32>, vector<4x32xf32> -> vector<4x32xf32>
    %435 = arith.addf %433, %434 : vector<4x32xf32>
    %436 = vector.broadcast %310 : vector<1x32xf32> to vector<4x32xf32>
    %437 = arith.addf %435, %436 : vector<4x32xf32>
    %cst_367 = arith.constant 0.000000e+00 : f32
    %438 = vector.broadcast %cst_367 : f32 to vector<4x32xf32>
    %439 = arith.maximumf %437, %438 : vector<4x32xf32>
    %cst_368 = arith.constant dense<0.000000e+00> : vector<4x16xf32>
    %440 = tpu.matmul %439, %318, %cst_368 {dimension_numbers = #tpu.dot_dimension_numbers<[1], [0], [0], [1], [0, 0, 1, 1], [], []>} : vector<4x32xf32>, vector<32x16xf32>, vector<4x16xf32> -> vector<4x16xf32>
    %441 = arith.addf %238, %440 : vector<4x16xf32>
    %442 = vector.broadcast %316 : vector<1x16xf32> to vector<4x16xf32>
    %443 = arith.addf %441, %442 : vector<4x16xf32>
    %444 = tpu.iota {dimensions = array<i32: 1>} : vector<16x2xi32>
    %c0_369 = arith.constant 0 : index
    %c0_370 = arith.constant 0 : index
    %445 = vector.load %arg8[%c0_369, %c0_370] : memref<16x1xi32, #tpu.memory_space<vmem>>, vector<16x1xi32>
    %446 = vector.broadcast %445 : vector<16x1xi32> to vector<16x2xi32>
    %447 = arith.cmpi eq, %446, %444 : vector<16x2xi32>
    %448 = arith.extui %447 : vector<16x2xi1> to vector<16x2xi32>
    %449 = arith.sitofp %448 : vector<16x2xi32> to vector<16x2xf32>
    %450 = vector.extract_strided_slice %449 {offsets = [0, 0], sizes = [16, 1], strides = [1, 1]} : vector<16x2xf32> to vector<16x1xf32>
    %cst_371 = arith.constant dense<0xFF800000> : vector<1xf32>
    %451 = vector.multi_reduction <maximumf>, %450, %cst_371 [0] : vector<16x1xf32> to vector<1xf32>
    %452 = vector.shape_cast %451 : vector<1xf32> to vector<1x1xf32>
    %cst_372 = arith.constant 0.000000e+00 : f32
    %453 = vector.broadcast %cst_372 : f32 to vector<16x1xf32>
    %454 = arith.cmpf ogt, %450, %453 : vector<16x1xf32>
    %cst_373 = arith.constant -3.000000e+38 : f32
    %455 = vector.shape_cast %454 : vector<16x1xi1> to vector<16x1xi1>
    %456 = vector.broadcast %455 : vector<16x1xi1> to vector<16x16xi1>
    %457 = vector.broadcast %cst_373 : f32 to vector<16x16xf32>
    %458 = arith.select %456, %353, %457 : vector<16x16xi1>, vector<16x16xf32>
    %cst_374 = arith.constant dense<0xFF800000> : vector<16xf32>
    %459 = vector.multi_reduction <maximumf>, %458, %cst_374 [0] : vector<16x16xf32> to vector<16xf32>
    %460 = vector.shape_cast %459 : vector<16xf32> to vector<1x16xf32>
    %461 = vector.broadcast %452 : vector<1x1xf32> to vector<1x16xf32>
    %462 = arith.mulf %460, %461 : vector<1x16xf32>
    %463 = vector.extract_strided_slice %449 {offsets = [0, 1], sizes = [16, 1], strides = [1, 1]} : vector<16x2xf32> to vector<16x1xf32>
    %cst_375 = arith.constant dense<0xFF800000> : vector<1xf32>
    %464 = vector.multi_reduction <maximumf>, %463, %cst_375 [0] : vector<16x1xf32> to vector<1xf32>
    %465 = vector.shape_cast %464 : vector<1xf32> to vector<1x1xf32>
    %cst_376 = arith.constant 0.000000e+00 : f32
    %466 = vector.broadcast %cst_376 : f32 to vector<16x1xf32>
    %467 = arith.cmpf ogt, %463, %466 : vector<16x1xf32>
    %cst_377 = arith.constant -3.000000e+38 : f32
    %468 = vector.shape_cast %467 : vector<16x1xi1> to vector<16x1xi1>
    %469 = vector.broadcast %468 : vector<16x1xi1> to vector<16x16xi1>
    %470 = vector.broadcast %cst_377 : f32 to vector<16x16xf32>
    %471 = arith.select %469, %353, %470 : vector<16x16xi1>, vector<16x16xf32>
    %cst_378 = arith.constant dense<0xFF800000> : vector<16xf32>
    %472 = vector.multi_reduction <maximumf>, %471, %cst_378 [0] : vector<16x16xf32> to vector<16xf32>
    %473 = vector.shape_cast %472 : vector<16xf32> to vector<1x16xf32>
    %474 = vector.broadcast %465 : vector<1x1xf32> to vector<1x16xf32>
    %475 = arith.mulf %473, %474 : vector<1x16xf32>
    %476 = tpu.concatenate %462, %475 in 0 : vector<1x16xf32>, vector<1x16xf32> -> vector<2x16xf32>
    %477 = tpu.iota {dimensions = array<i32: 1>} : vector<8x2xi32>
    %c0_379 = arith.constant 0 : index
    %c0_380 = arith.constant 0 : index
    %478 = vector.load %arg9[%c0_379, %c0_380] : memref<8x1xi32, #tpu.memory_space<vmem>>, vector<8x1xi32>
    %479 = vector.broadcast %478 : vector<8x1xi32> to vector<8x2xi32>
    %480 = arith.cmpi eq, %479, %477 : vector<8x2xi32>
    %481 = arith.extui %480 : vector<8x2xi1> to vector<8x2xi32>
    %482 = arith.sitofp %481 : vector<8x2xi32> to vector<8x2xf32>
    %483 = vector.extract_strided_slice %482 {offsets = [0, 0], sizes = [8, 1], strides = [1, 1]} : vector<8x2xf32> to vector<8x1xf32>
    %cst_381 = arith.constant dense<0xFF800000> : vector<1xf32>
    %484 = vector.multi_reduction <maximumf>, %483, %cst_381 [0] : vector<8x1xf32> to vector<1xf32>
    %485 = vector.shape_cast %484 : vector<1xf32> to vector<1x1xf32>
    %cst_382 = arith.constant 0.000000e+00 : f32
    %486 = vector.broadcast %cst_382 : f32 to vector<8x1xf32>
    %487 = arith.cmpf ogt, %483, %486 : vector<8x1xf32>
    %cst_383 = arith.constant -3.000000e+38 : f32
    %488 = vector.shape_cast %487 : vector<8x1xi1> to vector<8x1xi1>
    %489 = vector.broadcast %488 : vector<8x1xi1> to vector<8x16xi1>
    %490 = vector.broadcast %cst_383 : f32 to vector<8x16xf32>
    %491 = arith.select %489, %410, %490 : vector<8x16xi1>, vector<8x16xf32>
    %cst_384 = arith.constant dense<0xFF800000> : vector<16xf32>
    %492 = vector.multi_reduction <maximumf>, %491, %cst_384 [0] : vector<8x16xf32> to vector<16xf32>
    %493 = vector.shape_cast %492 : vector<16xf32> to vector<1x16xf32>
    %494 = vector.broadcast %485 : vector<1x1xf32> to vector<1x16xf32>
    %495 = arith.mulf %493, %494 : vector<1x16xf32>
    %496 = vector.extract_strided_slice %482 {offsets = [0, 1], sizes = [8, 1], strides = [1, 1]} : vector<8x2xf32> to vector<8x1xf32>
    %cst_385 = arith.constant dense<0xFF800000> : vector<1xf32>
    %497 = vector.multi_reduction <maximumf>, %496, %cst_385 [0] : vector<8x1xf32> to vector<1xf32>
    %498 = vector.shape_cast %497 : vector<1xf32> to vector<1x1xf32>
    %cst_386 = arith.constant 0.000000e+00 : f32
    %499 = vector.broadcast %cst_386 : f32 to vector<8x1xf32>
    %500 = arith.cmpf ogt, %496, %499 : vector<8x1xf32>
    %cst_387 = arith.constant -3.000000e+38 : f32
    %501 = vector.shape_cast %500 : vector<8x1xi1> to vector<8x1xi1>
    %502 = vector.broadcast %501 : vector<8x1xi1> to vector<8x16xi1>
    %503 = vector.broadcast %cst_387 : f32 to vector<8x16xf32>
    %504 = arith.select %502, %410, %503 : vector<8x16xi1>, vector<8x16xf32>
    %cst_388 = arith.constant dense<0xFF800000> : vector<16xf32>
    %505 = vector.multi_reduction <maximumf>, %504, %cst_388 [0] : vector<8x16xf32> to vector<16xf32>
    %506 = vector.shape_cast %505 : vector<16xf32> to vector<1x16xf32>
    %507 = vector.broadcast %498 : vector<1x1xf32> to vector<1x16xf32>
    %508 = arith.mulf %506, %507 : vector<1x16xf32>
    %509 = tpu.concatenate %495, %508 in 0 : vector<1x16xf32>, vector<1x16xf32> -> vector<2x16xf32>
    %510 = tpu.iota {dimensions = array<i32: 1>} : vector<4x2xi32>
    %c0_389 = arith.constant 0 : index
    %c0_390 = arith.constant 0 : index
    %511 = vector.load %arg10[%c0_389, %c0_390] : memref<4x1xi32, #tpu.memory_space<vmem>>, vector<4x1xi32>
    %512 = vector.broadcast %511 : vector<4x1xi32> to vector<4x2xi32>
    %513 = arith.cmpi eq, %512, %510 : vector<4x2xi32>
    %514 = arith.extui %513 : vector<4x2xi1> to vector<4x2xi32>
    %515 = arith.sitofp %514 : vector<4x2xi32> to vector<4x2xf32>
    %516 = vector.extract_strided_slice %515 {offsets = [0, 0], sizes = [4, 1], strides = [1, 1]} : vector<4x2xf32> to vector<4x1xf32>
    %cst_391 = arith.constant dense<0xFF800000> : vector<1xf32>
    %517 = vector.multi_reduction <maximumf>, %516, %cst_391 [0] : vector<4x1xf32> to vector<1xf32>
    %518 = vector.shape_cast %517 : vector<1xf32> to vector<1x1xf32>
    %cst_392 = arith.constant 0.000000e+00 : f32
    %519 = vector.broadcast %cst_392 : f32 to vector<4x1xf32>
    %520 = arith.cmpf ogt, %516, %519 : vector<4x1xf32>
    %cst_393 = arith.constant -3.000000e+38 : f32
    %521 = vector.shape_cast %520 : vector<4x1xi1> to vector<4x1xi1>
    %522 = vector.broadcast %521 : vector<4x1xi1> to vector<4x16xi1>
    %523 = vector.broadcast %cst_393 : f32 to vector<4x16xf32>
    %524 = arith.select %522, %443, %523 : vector<4x16xi1>, vector<4x16xf32>
    %cst_394 = arith.constant dense<0xFF800000> : vector<16xf32>
    %525 = vector.multi_reduction <maximumf>, %524, %cst_394 [0] : vector<4x16xf32> to vector<16xf32>
    %526 = vector.shape_cast %525 : vector<16xf32> to vector<1x16xf32>
    %527 = vector.broadcast %518 : vector<1x1xf32> to vector<1x16xf32>
    %528 = arith.mulf %526, %527 : vector<1x16xf32>
    %529 = vector.extract_strided_slice %515 {offsets = [0, 1], sizes = [4, 1], strides = [1, 1]} : vector<4x2xf32> to vector<4x1xf32>
    %cst_395 = arith.constant dense<0xFF800000> : vector<1xf32>
    %530 = vector.multi_reduction <maximumf>, %529, %cst_395 [0] : vector<4x1xf32> to vector<1xf32>
    %531 = vector.shape_cast %530 : vector<1xf32> to vector<1x1xf32>
    %cst_396 = arith.constant 0.000000e+00 : f32
    %532 = vector.broadcast %cst_396 : f32 to vector<4x1xf32>
    %533 = arith.cmpf ogt, %529, %532 : vector<4x1xf32>
    %cst_397 = arith.constant -3.000000e+38 : f32
    %534 = vector.shape_cast %533 : vector<4x1xi1> to vector<4x1xi1>
    %535 = vector.broadcast %534 : vector<4x1xi1> to vector<4x16xi1>
    %536 = vector.broadcast %cst_397 : f32 to vector<4x16xf32>
    %537 = arith.select %535, %443, %536 : vector<4x16xi1>, vector<4x16xf32>
    %cst_398 = arith.constant dense<0xFF800000> : vector<16xf32>
    %538 = vector.multi_reduction <maximumf>, %537, %cst_398 [0] : vector<4x16xf32> to vector<16xf32>
    %539 = vector.shape_cast %538 : vector<16xf32> to vector<1x16xf32>
    %540 = vector.broadcast %531 : vector<1x1xf32> to vector<1x16xf32>
    %541 = arith.mulf %539, %540 : vector<1x16xf32>
    %542 = tpu.concatenate %528, %541 in 0 : vector<1x16xf32>, vector<1x16xf32> -> vector<2x16xf32>
    %c0_399 = arith.constant 0 : index
    %c0_400 = arith.constant 0 : index
    %543 = vector.load %arg14[%c0_399, %c0_400] : memref<16x32xf32, #tpu.memory_space<vmem>>, vector<16x32xf32>
    %cst_401 = arith.constant dense<0.000000e+00> : vector<2x32xf32>
    %544 = tpu.matmul %476, %543, %cst_401 {dimension_numbers = #tpu.dot_dimension_numbers<[1], [0], [0], [1], [0, 0, 1, 1], [], []>} : vector<2x16xf32>, vector<16x32xf32>, vector<2x32xf32> -> vector<2x32xf32>
    %c0_402 = arith.constant 0 : index
    %c0_403 = arith.constant 0 : index
    %545 = vector.load %arg15[%c0_402, %c0_403] : memref<16x32xf32, #tpu.memory_space<vmem>>, vector<16x32xf32>
    %cst_404 = arith.constant dense<0.000000e+00> : vector<2x32xf32>
    %546 = tpu.matmul %509, %545, %cst_404 {dimension_numbers = #tpu.dot_dimension_numbers<[1], [0], [0], [1], [0, 0, 1, 1], [], []>} : vector<2x16xf32>, vector<16x32xf32>, vector<2x32xf32> -> vector<2x32xf32>
    %547 = arith.addf %544, %546 : vector<2x32xf32>
    %c0_405 = arith.constant 0 : index
    %c0_406 = arith.constant 0 : index
    %548 = vector.load %arg16[%c0_405, %c0_406] : memref<16x32xf32, #tpu.memory_space<vmem>>, vector<16x32xf32>
    %cst_407 = arith.constant dense<0.000000e+00> : vector<2x32xf32>
    %549 = tpu.matmul %542, %548, %cst_407 {dimension_numbers = #tpu.dot_dimension_numbers<[1], [0], [0], [1], [0, 0, 1, 1], [], []>} : vector<2x16xf32>, vector<16x32xf32>, vector<2x32xf32> -> vector<2x32xf32>
    %550 = arith.addf %547, %549 : vector<2x32xf32>
    %c0_408 = arith.constant 0 : index
    %c0_409 = arith.constant 0 : index
    %551 = vector.load %arg11[%c0_408, %c0_409] : memref<1x32xf32, #tpu.memory_space<vmem>>, vector<1x32xf32>
    %552 = vector.broadcast %551 : vector<1x32xf32> to vector<2x32xf32>
    %553 = arith.addf %550, %552 : vector<2x32xf32>
    %c0_410 = arith.constant 0 : index
    %c0_411 = arith.constant 0 : index
    %554 = vector.load %arg17[%c0_410, %c0_411] : memref<32x64xf32, #tpu.memory_space<vmem>>, vector<32x64xf32>
    %cst_412 = arith.constant dense<0.000000e+00> : vector<2x64xf32>
    %555 = tpu.matmul %553, %554, %cst_412 {dimension_numbers = #tpu.dot_dimension_numbers<[1], [0], [0], [1], [0, 0, 1, 1], [], []>} : vector<2x32xf32>, vector<32x64xf32>, vector<2x64xf32> -> vector<2x64xf32>
    %c0_413 = arith.constant 0 : index
    %c0_414 = arith.constant 0 : index
    %556 = vector.load %arg12[%c0_413, %c0_414] : memref<1x64xf32, #tpu.memory_space<vmem>>, vector<1x64xf32>
    %557 = vector.broadcast %556 : vector<1x64xf32> to vector<2x64xf32>
    %558 = arith.addf %555, %557 : vector<2x64xf32>
    %cst_415 = arith.constant 0.000000e+00 : f32
    %559 = vector.broadcast %cst_415 : f32 to vector<2x64xf32>
    %560 = arith.maximumf %558, %559 : vector<2x64xf32>
    %c0_416 = arith.constant 0 : index
    %c0_417 = arith.constant 0 : index
    %561 = vector.load %arg18[%c0_416, %c0_417] : memref<64x4xf32, #tpu.memory_space<vmem>>, vector<64x4xf32>
    %cst_418 = arith.constant dense<0.000000e+00> : vector<2x4xf32>
    %562 = tpu.matmul %560, %561, %cst_418 {dimension_numbers = #tpu.dot_dimension_numbers<[1], [0], [0], [1], [0, 0, 1, 1], [], []>} : vector<2x64xf32>, vector<64x4xf32>, vector<2x4xf32> -> vector<2x4xf32>
    %c0_419 = arith.constant 0 : index
    %c0_420 = arith.constant 0 : index
    %563 = vector.load %arg13[%c0_419, %c0_420] : memref<1x4xf32, #tpu.memory_space<vmem>>, vector<1x4xf32>
    %564 = vector.broadcast %563 : vector<1x4xf32> to vector<2x4xf32>
    %565 = arith.addf %562, %564 : vector<2x4xf32>
    %cst_421 = arith.constant dense<0xFF800000> : vector<2xf32>
    %566 = vector.multi_reduction <maximumf>, %565, %cst_421 [1] : vector<2x4xf32> to vector<2xf32>
    %567 = vector.shape_cast %566 : vector<2xf32> to vector<2x1xf32>
    %568 = vector.broadcast %567 : vector<2x1xf32> to vector<2x4xf32>
    %569 = arith.subf %565, %568 : vector<2x4xf32>
    %570 = math.exp %569 : vector<2x4xf32>
    %cst_422 = arith.constant dense<0.000000e+00> : vector<2xf32>
    %571 = vector.multi_reduction <add>, %570, %cst_422 [1] : vector<2x4xf32> to vector<2xf32>
    %572 = vector.shape_cast %571 : vector<2xf32> to vector<2x1xf32>
    %573 = math.log %572 : vector<2x1xf32>
    %574 = vector.broadcast %573 : vector<2x1xf32> to vector<2x4xf32>
    %575 = arith.subf %569, %574 : vector<2x4xf32>
    %c0_423 = arith.constant 0 : index
    %c0_424 = arith.constant 0 : index
    %576 = vector.load %arg67[%c0_423, %c0_424] : memref<2x4xf32, #tpu.memory_space<vmem>>, vector<2x4xf32>
    tpu.vector_store %arg67[%c0_423, %c0_424], %575 {strides = array<i32>} : memref<2x4xf32, #tpu.memory_space<vmem>>, vector<2x4xf32>,
    return
  }
}

</mosaic_0001>

<llo_original>
// kernel: fwd.1
$region0: #{fwd.1}
  #allocation0 [shape = 'u32[]', space=smem, size = 0x4, offset = 0x4, fixed_abs, tag = 'smem constant byte address 0x4 - core index']
  #allocation1 [shape = 'u32[72,128]{1,0:T(1,128)}', space=vmem, size = 0x9000, scoped, tag = 'internal scratch']
  %s0 = inlined_call_operand.smem [shape: u32[68], index: -1, kind: input, shape index: {}]
  %s1 = sld [smem:[%s0]]
  %s2 = scalar_lea.smem %s0, 1
  %s3 = sld [smem:[%s2]]
  %s4 = scalar_lea.smem %s0, 2
  %s5 = sld [smem:[%s4]]
  %s6 = scalar_lea.smem %s0, 3
  %s7 = sld [smem:[%s6]]
  %s8 = scalar_lea.smem %s0, 4
  %s9 = sld [smem:[%s8]]
  %s10 = scalar_lea.smem %s0, 5
  %s11 = sld [smem:[%s10]]
  %s12 = scalar_lea.smem %s0, 6
  %s13 = sld [smem:[%s12]]
  %s14 = scalar_lea.smem %s0, 7
  %s15 = sld [smem:[%s14]]
  %s16 = scalar_lea.smem %s0, 8
  %s17 = sld [smem:[%s16]]
  %s18 = scalar_lea.smem %s0, 9
  %s19 = sld [smem:[%s18]]
  %s20 = scalar_lea.smem %s0, 10
  %s21 = sld [smem:[%s20]]
  %s22 = scalar_lea.smem %s0, 11
  %s23 = sld [smem:[%s22]]
  %s24 = scalar_lea.smem %s0, 12
  %s25 = sld [smem:[%s24]]
  %s26 = scalar_lea.smem %s0, 13
  %s27 = sld [smem:[%s26]]
  %s28 = scalar_lea.smem %s0, 14
  %s29 = sld [smem:[%s28]]
  %s30 = scalar_lea.smem %s0, 15
  %s31 = sld [smem:[%s30]]
  %s32 = scalar_lea.smem %s0, 16
  %s33 = sld [smem:[%s32]]
  %s34 = scalar_lea.smem %s0, 17
  %s35 = sld [smem:[%s34]]
  %s36 = scalar_lea.smem %s0, 18
  %s37 = sld [smem:[%s36]]
  %s38 = scalar_lea.smem %s0, 19
  %s39 = sld [smem:[%s38]]
  %s40 = scalar_lea.smem %s0, 20
  %s41 = sld [smem:[%s40]]
  %s42 = scalar_lea.smem %s0, 21
  %s43 = sld [smem:[%s42]]
  %s44 = scalar_lea.smem %s0, 22
  %s45 = sld [smem:[%s44]]
  %s46 = scalar_lea.smem %s0, 23
  %s47 = sld [smem:[%s46]]
  %s48 = scalar_lea.smem %s0, 24
  %s49 = sld [smem:[%s48]]
  %s50 = scalar_lea.smem %s0, 25
  %s51 = sld [smem:[%s50]]
  %s52 = scalar_lea.smem %s0, 26
  %s53 = sld [smem:[%s52]]
  %s54 = scalar_lea.smem %s0, 27
  %s55 = sld [smem:[%s54]]
  %s56 = scalar_lea.smem %s0, 28
  %s57 = sld [smem:[%s56]]
  %s58 = scalar_lea.smem %s0, 29
  %s59 = sld [smem:[%s58]]
  %s60 = scalar_lea.smem %s0, 30
  %s61 = sld [smem:[%s60]]
  %s62 = scalar_lea.smem %s0, 31
  %s63 = sld [smem:[%s62]]
  %s64 = scalar_lea.smem %s0, 32
  %s65 = sld [smem:[%s64]]
  %s66 = scalar_lea.smem %s0, 33
  %s67 = sld [smem:[%s66]]
  %s68 = scalar_lea.smem %s0, 34
  %s69 = sld [smem:[%s68]]
  %s70 = scalar_lea.smem %s0, 35
  %s71 = sld [smem:[%s70]]
  %s72 = scalar_lea.smem %s0, 36
  %s73 = sld [smem:[%s72]]
  %s74 = scalar_lea.smem %s0, 37
  %s75 = sld [smem:[%s74]]
  %s76 = scalar_lea.smem %s0, 38
  %s77 = sld [smem:[%s76]]
  %s78 = scalar_lea.smem %s0, 39
  %s79 = sld [smem:[%s78]]
  %s80 = scalar_lea.smem %s0, 40
  %s81 = sld [smem:[%s80]]
  %s82 = scalar_lea.smem %s0, 41
  %s83 = sld [smem:[%s82]]
  %s84 = scalar_lea.smem %s0, 42
  %s85 = sld [smem:[%s84]]
  %s86 = scalar_lea.smem %s0, 43
  %s87 = sld [smem:[%s86]]
  %s88 = scalar_lea.smem %s0, 44
  %s89 = sld [smem:[%s88]]
  %s90 = scalar_lea.smem %s0, 45
  %s91 = sld [smem:[%s90]]
  %s92 = scalar_lea.smem %s0, 46
  %s93 = sld [smem:[%s92]]
  %s94 = scalar_lea.smem %s0, 47
  %s95 = sld [smem:[%s94]]
  %s96 = scalar_lea.smem %s0, 48
  %s97 = sld [smem:[%s96]]
  %s98 = scalar_lea.smem %s0, 49
  %s99 = sld [smem:[%s98]]
  %s100 = scalar_lea.smem %s0, 50
  %s101 = sld [smem:[%s100]]
  %s102 = scalar_lea.smem %s0, 51
  %s103 = sld [smem:[%s102]]
  %s104 = scalar_lea.smem %s0, 52
  %s105 = sld [smem:[%s104]]
  %s106 = scalar_lea.smem %s0, 53
  %s107 = sld [smem:[%s106]]
  %s108 = scalar_lea.smem %s0, 54
  %s109 = sld [smem:[%s108]]
  %s110 = scalar_lea.smem %s0, 55
  %s111 = sld [smem:[%s110]]
  %s112 = scalar_lea.smem %s0, 56
  %s113 = sld [smem:[%s112]]
  %s114 = scalar_lea.smem %s0, 57
  %s115 = sld [smem:[%s114]]
  %s116 = scalar_lea.smem %s0, 58
  %s117 = sld [smem:[%s116]]
  %s118 = scalar_lea.smem %s0, 59
  %s119 = sld [smem:[%s118]]
  %s120 = scalar_lea.smem %s0, 60
  %s121 = sld [smem:[%s120]]
  %s122 = scalar_lea.smem %s0, 61
  %s123 = sld [smem:[%s122]]
  %s124 = scalar_lea.smem %s0, 62
  %s125 = sld [smem:[%s124]]
  %s126 = scalar_lea.smem %s0, 63
  %s127 = sld [smem:[%s126]]
  %s128 = scalar_lea.smem %s0, 64
  %s129 = sld [smem:[%s128]]
  %s130 = scalar_lea.smem %s0, 65
  %s131 = sld [smem:[%s130]]
  %s132 = scalar_lea.smem %s0, 66
  %s133 = sld [smem:[%s132]]
  %s134 = scalar_lea.smem %s0, 67
  %s135 = sld [smem:[%s134]]
  %s136 = sld [smem:[#allocation0]]
  $region438: #{fwd.1} parent=0
    _
  %s138 = ssub.s32 1, %s136
  %s139 = scalar_select 0, %s138, %s136
  $region1: #{fwd.1} parent=0
    #allocation2 [shape = 'u8[512]{0}', space=vmem, size = 0x400, scoped, tag = 'input window, operand 11, single buffered']
    #allocation3 [shape = 's32[1]{0}', space=sflag, size = 0x4, scoped, tag = 'scoped memory for fwd.1']
    #allocation4 [shape = 's32[1]{0}', space=sflag, size = 0x4, scoped, tag = 'scoped memory for fwd.1']
    #allocation5 [shape = 'u8[512]{0}', space=vmem, size = 0x400, scoped, tag = 'input window, operand 12, single buffered']
    #allocation6 [shape = 's32[1]{0}', space=sflag, size = 0x4, scoped, tag = 'scoped memory for fwd.1']
    #allocation7 [shape = 'u8[512]{0}', space=vmem, size = 0x400, scoped, tag = 'input window, operand 13, single buffered']
    #allocation8 [shape = 'u8[8192]{0}', space=vmem, size = 0x2000, scoped, tag = 'input window, operand 14, single buffered']
    #allocation9 [shape = 's32[1]{0}', space=sflag, size = 0x4, scoped, tag = 'scoped memory for fwd.1']
    #allocation10 [shape = 'u8[32768]{0}', space=vmem, size = 0x8000, scoped, tag = 'input window, operand 18, single buffered']
    #allocation11 [shape = 'u8[512]{0}', space=vmem, size = 0x400, scoped, tag = 'input window, operand 19, single buffered']
    #allocation12 [shape = 's32[1]{0}', space=sflag, size = 0x4, scoped, tag = 'scoped memory for fwd.1']
    #allocation13 [shape = 'u8[4096]{0}', space=vmem, size = 0x1000, scoped, tag = 'input window, operand 20, single buffered']
    #allocation14 [shape = 'u8[512]{0}', space=vmem, size = 0x400, scoped, tag = 'input window, operand 21, single buffered']
    #allocation15 [shape = 's32[1]{0}', space=sflag, size = 0x4, scoped, tag = 'scoped memory for fwd.1']
    #allocation16 [shape = 'u8[1024]{0}', space=vmem, size = 0x400, scoped, tag = 'input window, operand 25, single buffered']
    #allocation17 [shape = 'u8[32768]{0}', space=vmem, size = 0x8000, scoped, tag = 'input window, operand 26, single buffered']
    #allocation18 [shape = 's32[1]{0}', space=sflag, size = 0x4, scoped, tag = 'scoped memory for fwd.1']
    #allocation19 [shape = 'u8[16384]{0}', space=vmem, size = 0x4000, scoped, tag = 'input window, operand 27, single buffered']
    #allocation20 [shape = 'u8[1024]{0}', space=vmem, size = 0x400, scoped, tag = 'input window, operand 28, single buffered']
    #allocation21 [shape = 's32[1]{0}', space=sflag, size = 0x4, scoped, tag = 'scoped memory for fwd.1']
    #allocation22 [shape = 'u8[32768]{0}', space=vmem, size = 0x8000, scoped, tag = 'input window, operand 29, single buffered']
    #allocation23 [shape = 'u8[1024]{0}', space=vmem, size = 0x400, scoped, tag = 'input window, operand 30, single buffered']
    #allocation24 [shape = 's32[1]{0}', space=sflag, size = 0x4, scoped, tag = 'scoped memory for fwd.1']
    #allocation25 [shape = 'u8[16384]{0}', space=vmem, size = 0x4000, scoped, tag = 'input window, operand 31, single buffered']
    #allocation26 [shape = 'u8[1024]{0}', space=vmem, size = 0x400, scoped, tag = 'input window, operand 32, single buffered']
    #allocation27 [shape = 's32[1]{0}', space=sflag, size = 0x4, scoped, tag = 'scoped memory for fwd.1']
    #allocation28 [shape = 'u8[16384]{0}', space=vmem, size = 0x4000, scoped, tag = 'input window, operand 33, single buffered']
    #allocation29 [shape = 'u8[1024]{0}', space=vmem, size = 0x400, scoped, tag = 'input window, operand 34, single buffered']
    #allocation30 [shape = 's32[1]{0}', space=sflag, size = 0x4, scoped, tag = 'scoped memory for fwd.1']
    #allocation31 [shape = 'u8[32768]{0}', space=vmem, size = 0x8000, scoped, tag = 'input window, operand 35, single buffered']
    #allocation32 [shape = 'u8[1024]{0}', space=vmem, size = 0x400, scoped, tag = 'input window, operand 36, single buffered']
    #allocation33 [shape = 's32[1]{0}', space=sflag, size = 0x4, scoped, tag = 'scoped memory for fwd.1']
    #allocation34 [shape = 'u8[32768]{0}', space=vmem, size = 0x8000, scoped, tag = 'input window, operand 37, single buffered']
    #allocation35 [shape = 'u8[1024]{0}', space=vmem, size = 0x400, scoped, tag = 'input window, operand 38, single buffered']
    #allocation36 [shape = 's32[1]{0}', space=sflag, size = 0x4, scoped, tag = 'scoped memory for fwd.1']
    #allocation37 [shape = 'u8[16384]{0}', space=vmem, size = 0x4000, scoped, tag = 'input window, operand 39, single buffered']
    #allocation38 [shape = 'u8[1024]{0}', space=vmem, size = 0x400, scoped, tag = 'input window, operand 40, single buffered']
    #allocation39 [shape = 's32[1]{0}', space=sflag, size = 0x4, scoped, tag = 'scoped memory for fwd.1']
    #allocation40 [shape = 'u8[16384]{0}', space=vmem, size = 0x4000, scoped, tag = 'input window, operand 41, single buffered']
    #allocation41 [shape = 'u8[1024]{0}', space=vmem, size = 0x400, scoped, tag = 'input window, operand 42, single buffered']
    #allocation42 [shape = 's32[1]{0}', space=sflag, size = 0x4, scoped, tag = 'scoped memory for fwd.1']
    #allocation43 [shape = 'u8[32768]{0}', space=vmem, size = 0x8000, scoped, tag = 'input window, operand 43, single buffered']
    #allocation44 [shape = 'u8[1024]{0}', space=vmem, size = 0x400, scoped, tag = 'input window, operand 44, single buffered']
    #allocation45 [shape = 's32[1]{0}', space=sflag, size = 0x4, scoped, tag = 'scoped memory for fwd.1']
    #allocation46 [shape = 'u8[32768]{0}', space=vmem, size = 0x8000, scoped, tag = 'input window, operand 45, single buffered']
    #allocation47 [shape = 'u8[32768]{0}', space=vmem, size = 0x8000, scoped, tag = 'input window, operand 46, single buffered']
    #allocation48 [shape = 's32[1]{0}', space=sflag, size = 0x4, scoped, tag = 'scoped memory for fwd.1']
    #allocation49 [shape = 'u8[16384]{0}', space=vmem, size = 0x4000, scoped, tag = 'input window, operand 47, single buffered']
    #allocation50 [shape = 'u8[1024]{0}', space=vmem, size = 0x400, scoped, tag = 'input window, operand 48, single buffered']
    #allocation51 [shape = 's32[1]{0}', space=sflag, size = 0x4, scoped, tag = 'scoped memory for fwd.1']
    #allocation52 [shape = 'u8[32768]{0}', space=vmem, size = 0x8000, scoped, tag = 'input window, operand 49, single buffered']
    #allocation53 [shape = 'u8[1024]{0}', space=vmem, size = 0x400, scoped, tag = 'input window, operand 50, single buffered']
    #allocation54 [shape = 's32[1]{0}', space=sflag, size = 0x4, scoped, tag = 'scoped memory for fwd.1']
    #allocation55 [shape = 'u8[16384]{0}', space=vmem, size = 0x4000, scoped, tag = 'input window, operand 51, single buffered']
    #allocation56 [shape = 'u8[16384]{0}', space=vmem, size = 0x4000, scoped, tag = 'input window, operand 53, single buffered']
    #allocation57 [shape = 's32[1]{0}', space=sflag, size = 0x4, scoped, tag = 'scoped memory for fwd.1']
    #allocation58 [shape = 'u8[32768]{0}', space=vmem, size = 0x8000, scoped, tag = 'input window, operand 55, single buffered']
    #allocation59 [shape = 'u8[32768]{0}', space=vmem, size = 0x8000, scoped, tag = 'input window, operand 61, single buffered']
    #allocation60 [shape = 's32[1]{0}', space=sflag, size = 0x4, scoped, tag = 'scoped memory for fwd.1']
    #allocation61 [shape = 'u8[32768]{0}', space=vmem, size = 0x8000, scoped, tag = 'input window, operand 63, single buffered']
    #allocation62 [shape = 'u8[32768]{0}', space=vmem, size = 0x8000, scoped, tag = 'input window, operand 66, single buffered']
    #allocation63 [shape = 's32[1]{0}', space=sflag, size = 0x4, scoped, tag = 'scoped memory for fwd.1']
    #allocation64 [shape = 'u8[1024]{0}', space=vmem, size = 0x400, scoped, tag = 'output window, operand 0, single buffered']
    %140 = vsyncpa [#allocation3], 0
    %141 = vsyncpa [#allocation6], 0
    %142 = vsyncpa [#allocation9], 0
    %143 = vsyncpa [#allocation12], 0
    %144 = vsyncpa [#allocation15], 0
    %145 = vsyncpa [#allocation18], 0
    %146 = vsyncpa [#allocation21], 0
    %147 = vsyncpa [#allocation24], 0
    %148 = vsyncpa [#allocation27], 0
    %149 = vsyncpa [#allocation30], 0
    %150 = vsyncpa [#allocation33], 0
    %151 = vsyncpa [#allocation36], 0
    %152 = vsyncpa [#allocation39], 0
    %153 = vsyncpa [#allocation42], 0
    %154 = vsyncpa [#allocation45], 0
    %155 = vsyncpa [#allocation48], 0
    %156 = vsyncpa [#allocation51], 0
    %157 = vsyncpa [#allocation54], 0
    %158 = vsyncpa [#allocation57], 0
    %159 = vsyncpa [#allocation60], 0
    %160 = vsyncpa [#allocation63], 0
    %161 = vsyncpa [#allocation4], 0
    // Predicated region
    $region2: #{fwd.1} parent=1 // pred_check
      _
    $region3: #{fwd.1} parent=1 // pred_check_branch
      %163 = sbr.rel (0) target = $region5
    $region4: #{fwd.1} parent=1 // pred_region
      _
    $region5: #{fwd.1} parent=1 // pred_fallthru
      _
    // Predicated region
    $region6: #{fwd.1} parent=1 // pred_check
      _
    $region7: #{fwd.1} parent=1 // pred_check_branch
      %165 = sbr.rel (0) target = $region9
    $region8: #{fwd.1} parent=1 // pred_region
      _
    $region9: #{fwd.1} parent=1 // pred_fallthru
      _
    // Predicated region
    $region10: #{fwd.1} parent=1 // pred_check
      _
    $region11: #{fwd.1} parent=1 // pred_check_branch
      %167 = sbr.rel (0) target = $region13
    $region12: #{fwd.1} parent=1 // pred_region
      _
    $region13: #{fwd.1} parent=1 // pred_fallthru
      _
    // Predicated region
    $region14: #{fwd.1} parent=1 // pred_check
      _
    $region15: #{fwd.1} parent=1 // pred_check_branch
      %169 = sbr.rel (0) target = $region17
    $region16: #{fwd.1} parent=1 // pred_region
      _
    $region17: #{fwd.1} parent=1 // pred_fallthru
      _
    // Predicated region
    $region18: #{fwd.1} parent=1 // pred_check
      _
    $region19: #{fwd.1} parent=1 // pred_check_branch
      %171 = sbr.rel (0) target = $region21
    $region20: #{fwd.1} parent=1 // pred_region
      _
    $region21: #{fwd.1} parent=1 // pred_fallthru
      _
    // Predicated region
    $region22: #{fwd.1} parent=1 // pred_check
      _
    $region23: #{fwd.1} parent=1 // pred_check_branch
      %173 = sbr.rel (0) target = $region25
    $region24: #{fwd.1} parent=1 // pred_region
      _
    $region25: #{fwd.1} parent=1 // pred_fallthru
      _
    // Predicated region
    $region26: #{fwd.1} parent=1 // pred_check
      _
    $region27: #{fwd.1} parent=1 // pred_check_branch
      %175 = sbr.rel (0) target = $region29
    $region28: #{fwd.1} parent=1 // pred_region
      _
    $region29: #{fwd.1} parent=1 // pred_fallthru
      _
    // Predicated region
    $region30: #{fwd.1} parent=1 // pred_check
      _
    $region31: #{fwd.1} parent=1 // pred_check_branch
      %177 = sbr.rel (0) target = $region33
    $region32: #{fwd.1} parent=1 // pred_region
      _
    $region33: #{fwd.1} parent=1 // pred_fallthru
      _
    // Predicated region
    $region34: #{fwd.1} parent=1 // pred_check
      _
    $region35: #{fwd.1} parent=1 // pred_check_branch
      %179 = sbr.rel (0) target = $region37
    $region36: #{fwd.1} parent=1 // pred_region
      _
    $region37: #{fwd.1} parent=1 // pred_fallthru
      _
    // Predicated region
    $region38: #{fwd.1} parent=1 // pred_check
      _
    $region39: #{fwd.1} parent=1 // pred_check_branch
      %181 = sbr.rel (0) target = $region41
    $region40: #{fwd.1} parent=1 // pred_region
      _
    $region41: #{fwd.1} parent=1 // pred_fallthru
      _
    // Predicated region
    $region42: #{fwd.1} parent=1 // pred_check
      _
    $region43: #{fwd.1} parent=1 // pred_check_branch
      %183 = sbr.rel (0) target = $region45
    $region44: #{fwd.1} parent=1 // pred_region
      _
    $region45: #{fwd.1} parent=1 // pred_fallthru
      _
    // Predicated region
    $region46: #{fwd.1} parent=1 // pred_check
      _
    $region47: #{fwd.1} parent=1 // pred_check_branch
      %185 = sbr.rel (0) target = $region49
    $region48: #{fwd.1} parent=1 // pred_region
      %187 = vsyncadd [#allocation3], 0
      %s189 = sshll.u32 %s23, 4
      %s190 = int_to_ptr.hbm [resolvable:$true] %s189
      %s191 = sshll.u32 [#allocation2], 4
      %s192 = int_to_ptr.vmem [resolvable:$true] %s191
      %194 = dma.hbm_to_vmem [thread:$0]  %s190, 16, %s192, [#allocation3]
    $region49: #{fwd.1} parent=1 // pred_fallthru
      _
    // Predicated region
    $region50: #{fwd.1} parent=1 // pred_check
      _
    $region51: #{fwd.1} parent=1 // pred_check_branch
      %196 = sbr.rel (0) target = $region53
    $region52: #{fwd.1} parent=1 // pred_region
      %198 = vsyncadd [#allocation6], 0
      %s200 = sshll.u32 %s25, 4
      %s201 = int_to_ptr.hbm [resolvable:$true] %s200
      %s202 = sshll.u32 [#allocation5], 4
      %s203 = int_to_ptr.vmem [resolvable:$true] %s202
      %205 = dma.hbm_to_vmem [thread:$0]  %s201, 16, %s203, [#allocation6]
    $region53: #{fwd.1} parent=1 // pred_fallthru
      _
    // Predicated region
    $region54: #{fwd.1} parent=1 // pred_check
      _
    $region55: #{fwd.1} parent=1 // pred_check_branch
      %207 = sbr.rel (0) target = $region57
    $region56: #{fwd.1} parent=1 // pred_region
      %209 = vsyncadd [#allocation6], 0
      %s211 = sshll.u32 %s27, 4
      %s212 = int_to_ptr.hbm [resolvable:$true] %s211
      %s213 = sshll.u32 [#allocation7], 4
      %s214 = int_to_ptr.vmem [resolvable:$true] %s213
      %216 = dma.hbm_to_vmem [thread:$0]  %s212, 16, %s214, [#allocation6]
    $region57: #{fwd.1} parent=1 // pred_fallthru
      _
    // Predicated region
    $region58: #{fwd.1} parent=1 // pred_check
      _
    $region59: #{fwd.1} parent=1 // pred_check_branch
      %218 = sbr.rel (0) target = $region61
    $region60: #{fwd.1} parent=1 // pred_region
      %220 = vsyncadd [#allocation9], 0
      %s221 = sshll.u32 %s29, 4
      %s222 = int_to_ptr.hbm [resolvable:$true] %s221
      %s223 = sshll.u32 [#allocation8], 4
      %s224 = int_to_ptr.vmem [resolvable:$true] %s223
      %229 = dma.hbm_to_vmem [thread:$0]  %s222, 256, %s224, [#allocation9], 128, 128, 8
    $region61: #{fwd.1} parent=1 // pred_fallthru
      _
    // Predicated region
    $region62: #{fwd.1} parent=1 // pred_check
      _
    $region63: #{fwd.1} parent=1 // pred_check_branch
      %231 = sbr.rel (0) target = $region65
    $region64: #{fwd.1} parent=1 // pred_region
      _
    $region65: #{fwd.1} parent=1 // pred_fallthru
      _
    // Predicated region
    $region66: #{fwd.1} parent=1 // pred_check
      _
    $region67: #{fwd.1} parent=1 // pred_check_branch
      %233 = sbr.rel (0) target = $region69
    $region68: #{fwd.1} parent=1 // pred_region
      _
    $region69: #{fwd.1} parent=1 // pred_fallthru
      _
    // Predicated region
    $region70: #{fwd.1} parent=1 // pred_check
      _
    $region71: #{fwd.1} parent=1 // pred_check_branch
      %235 = sbr.rel (0) target = $region73
    $region72: #{fwd.1} parent=1 // pred_region
      _
    $region73: #{fwd.1} parent=1 // pred_fallthru
      _
    // Predicated region
    $region74: #{fwd.1} parent=1 // pred_check
      _
    $region75: #{fwd.1} parent=1 // pred_check_branch
      %237 = sbr.rel (0) target = $region77
    $region76: #{fwd.1} parent=1 // pred_region
      %239 = vsyncadd [#allocation9], 0
      %s240 = sshll.u32 %s37, 4
      %s241 = int_to_ptr.hbm [resolvable:$true] %s240
      %s242 = sshll.u32 [#allocation10], 4
      %s243 = int_to_ptr.vmem [resolvable:$true] %s242
      %248 = dma.hbm_to_vmem [thread:$0]  %s241, 1024, %s243, [#allocation9], 128, 128, 8
    $region77: #{fwd.1} parent=1 // pred_fallthru
      _
    // Predicated region
    $region78: #{fwd.1} parent=1 // pred_check
      _
    $region79: #{fwd.1} parent=1 // pred_check_branch
      %250 = sbr.rel (0) target = $region81
    $region80: #{fwd.1} parent=1 // pred_region
      %252 = vsyncadd [#allocation12], 0
      %s254 = sshll.u32 %s39, 4
      %s255 = int_to_ptr.hbm [resolvable:$true] %s254
      %s256 = sshll.u32 [#allocation11], 4
      %s257 = int_to_ptr.vmem [resolvable:$true] %s256
      %259 = dma.hbm_to_vmem [thread:$0]  %s255, 16, %s257, [#allocation12]
    $region81: #{fwd.1} parent=1 // pred_fallthru
      _
    // Predicated region
    $region82: #{fwd.1} parent=1 // pred_check
      _
    $region83: #{fwd.1} parent=1 // pred_check_branch
      %261 = sbr.rel (0) target = $region85
    $region84: #{fwd.1} parent=1 // pred_region
      %263 = vsyncadd [#allocation12], 0
      %s265 = sshll.u32 %s41, 4
      %s266 = int_to_ptr.hbm [resolvable:$true] %s265
      %s267 = sshll.u32 [#allocation13], 4
      %s268 = int_to_ptr.vmem [resolvable:$true] %s267
      %270 = dma.hbm_to_vmem [thread:$0]  %s266, 128, %s268, [#allocation12]
    $region85: #{fwd.1} parent=1 // pred_fallthru
      _
    // Predicated region
    $region86: #{fwd.1} parent=1 // pred_check
      _
    $region87: #{fwd.1} parent=1 // pred_check_branch
      %272 = sbr.rel (0) target = $region89
    $region88: #{fwd.1} parent=1 // pred_region
      %274 = vsyncadd [#allocation15], 0
      %s276 = sshll.u32 %s43, 4
      %s277 = int_to_ptr.hbm [resolvable:$true] %s276
      %s278 = sshll.u32 [#allocation14], 4
      %s279 = int_to_ptr.vmem [resolvable:$true] %s278
      %281 = dma.hbm_to_vmem [thread:$0]  %s277, 16, %s279, [#allocation15]
    $region89: #{fwd.1} parent=1 // pred_fallthru
      _
    // Predicated region
    $region90: #{fwd.1} parent=1 // pred_check
      _
    $region91: #{fwd.1} parent=1 // pred_check_branch
      %283 = sbr.rel (0) target = $region93
    $region92: #{fwd.1} parent=1 // pred_region
      _
    $region93: #{fwd.1} parent=1 // pred_fallthru
      _
    // Predicated region
    $region94: #{fwd.1} parent=1 // pred_check
      _
    $region95: #{fwd.1} parent=1 // pred_check_branch
      %285 = sbr.rel (0) target = $region97
    $region96: #{fwd.1} parent=1 // pred_region
      _
    $region97: #{fwd.1} parent=1 // pred_fallthru
      _
    // Predicated region
    $region98: #{fwd.1} parent=1 // pred_check
      _
    $region99: #{fwd.1} parent=1 // pred_check_branch
      %287 = sbr.rel (0) target = $region101
    $region100: #{fwd.1} parent=1 // pred_region
      _
    $region101: #{fwd.1} parent=1 // pred_fallthru
      _
    // Predicated region
    $region102: #{fwd.1} parent=1 // pred_check
      _
    $region103: #{fwd.1} parent=1 // pred_check_branch
      %289 = sbr.rel (0) target = $region105
    $region104: #{fwd.1} parent=1 // pred_region
      %291 = vsyncadd [#allocation15], 0
      %s292 = sshll.u32 %s51, 4
      %s293 = int_to_ptr.hbm [resolvable:$true] %s292
      %s294 = sshll.u32 [#allocation16], 4
      %s295 = int_to_ptr.vmem [resolvable:$true] %s294
      %300 = dma.hbm_to_vmem [thread:$0]  %s293, 32, %s295, [#allocation15], 16, 16, 1
    $region105: #{fwd.1} parent=1 // pred_fallthru
      _
    // Predicated region
    $region106: #{fwd.1} parent=1 // pred_check
      _
    $region107: #{fwd.1} parent=1 // pred_check_branch
      %302 = sbr.rel (0) target = $region109
    $region108: #{fwd.1} parent=1 // pred_region
      %304 = vsyncadd [#allocation18], 0
      %s305 = sshll.u32 %s53, 4
      %s306 = int_to_ptr.hbm [resolvable:$true] %s305
      %s307 = sshll.u32 [#allocation17], 4
      %s308 = int_to_ptr.vmem [resolvable:$true] %s307
      %313 = dma.hbm_to_vmem [thread:$0]  %s306, 1024, %s308, [#allocation18], 128, 128, 8
    $region109: #{fwd.1} parent=1 // pred_fallthru
      _
    // Predicated region
    $region110: #{fwd.1} parent=1 // pred_check
      _
    $region111: #{fwd.1} parent=1 // pred_check_branch
      %315 = sbr.rel (0) target = $region113
    $region112: #{fwd.1} parent=1 // pred_region
      %317 = vsyncadd [#allocation18], 0
      %s318 = sshll.u32 %s55, 4
      %s319 = int_to_ptr.hbm [resolvable:$true] %s318
      %s320 = sshll.u32 [#allocation19], 4
      %s321 = int_to_ptr.vmem [resolvable:$true] %s320
      %326 = dma.hbm_to_vmem [thread:$0]  %s319, 512, %s321, [#allocation18], 128, 128, 8
    $region113: #{fwd.1} parent=1 // pred_fallthru
      _
    // Predicated region
    $region114: #{fwd.1} parent=1 // pred_check
      _
    $region115: #{fwd.1} parent=1 // pred_check_branch
      %328 = sbr.rel (0) target = $region117
    $region116: #{fwd.1} parent=1 // pred_region
      %330 = vsyncadd [#allocation21], 0
      %s331 = sshll.u32 %s57, 4
      %s332 = int_to_ptr.hbm [resolvable:$true] %s331
      %s333 = sshll.u32 [#allocation20], 4
      %s334 = int_to_ptr.vmem [resolvable:$true] %s333
      %339 = dma.hbm_to_vmem [thread:$0]  %s332, 32, %s334, [#allocation21], 16, 16, 1
    $region117: #{fwd.1} parent=1 // pred_fallthru
      _
    // Predicated region
    $region118: #{fwd.1} parent=1 // pred_check
      _
    $region119: #{fwd.1} parent=1 // pred_check_branch
      %341 = sbr.rel (0) target = $region121
    $region120: #{fwd.1} parent=1 // pred_region
      %343 = vsyncadd [#allocation21], 0
      %s344 = sshll.u32 %s59, 4
      %s345 = int_to_ptr.hbm [resolvable:$true] %s344
      %s346 = sshll.u32 [#allocation22], 4
      %s347 = int_to_ptr.vmem [resolvable:$true] %s346
      %352 = dma.hbm_to_vmem [thread:$0]  %s345, 1024, %s347, [#allocation21], 128, 128, 8
    $region121: #{fwd.1} parent=1 // pred_fallthru
      _
    // Predicated region
    $region122: #{fwd.1} parent=1 // pred_check
      _
    $region123: #{fwd.1} parent=1 // pred_check_branch
      %354 = sbr.rel (0) target = $region125
    $region124: #{fwd.1} parent=1 // pred_region
      %356 = vsyncadd [#allocation24], 0
      %s357 = sshll.u32 %s61, 4
      %s358 = int_to_ptr.hbm [resolvable:$true] %s357
      %s359 = sshll.u32 [#allocation23], 4
      %s360 = int_to_ptr.vmem [resolvable:$true] %s359
      %365 = dma.hbm_to_vmem [thread:$0]  %s358, 32, %s360, [#allocation24], 16, 16, 1
    $region125: #{fwd.1} parent=1 // pred_fallthru
      _
    // Predicated region
    $region126: #{fwd.1} parent=1 // pred_check
      _
    $region127: #{fwd.1} parent=1 // pred_check_branch
      %367 = sbr.rel (0) target = $region129
    $region128: #{fwd.1} parent=1 // pred_region
      %369 = vsyncadd [#allocation24], 0
      %s370 = sshll.u32 %s63, 4
      %s371 = int_to_ptr.hbm [resolvable:$true] %s370
      %s372 = sshll.u32 [#allocation25], 4
      %s373 = int_to_ptr.vmem [resolvable:$true] %s372
      %378 = dma.hbm_to_vmem [thread:$0]  %s371, 512, %s373, [#allocation24], 128, 128, 8
    $region129: #{fwd.1} parent=1 // pred_fallthru
      _
    // Predicated region
    $region130: #{fwd.1} parent=1 // pred_check
      _
    $region131: #{fwd.1} parent=1 // pred_check_branch
      %380 = sbr.rel (0) target = $region133
    $region132: #{fwd.1} parent=1 // pred_region
      %382 = vsyncadd [#allocation27], 0
      %s383 = sshll.u32 %s65, 4
      %s384 = int_to_ptr.hbm [resolvable:$true] %s383
      %s385 = sshll.u32 [#allocation26], 4
      %s386 = int_to_ptr.vmem [resolvable:$true] %s385
      %391 = dma.hbm_to_vmem [thread:$0]  %s384, 32, %s386, [#allocation27], 16, 16, 1
    $region133: #{fwd.1} parent=1 // pred_fallthru
      _
    // Predicated region
    $region134: #{fwd.1} parent=1 // pred_check
      _
    $region135: #{fwd.1} parent=1 // pred_check_branch
      %393 = sbr.rel (0) target = $region137
    $region136: #{fwd.1} parent=1 // pred_region
      %395 = vsyncadd [#allocation27], 0
      %s396 = sshll.u32 %s67, 4
      %s397 = int_to_ptr.hbm [resolvable:$true] %s396
      %s398 = sshll.u32 [#allocation28], 4
      %s399 = int_to_ptr.vmem [resolvable:$true] %s398
      %404 = dma.hbm_to_vmem [thread:$0]  %s397, 512, %s399, [#allocation27], 128, 128, 8
    $region137: #{fwd.1} parent=1 // pred_fallthru
      _
    // Predicated region
    $region138: #{fwd.1} parent=1 // pred_check
      _
    $region139: #{fwd.1} parent=1 // pred_check_branch
      %406 = sbr.rel (0) target = $region141
    $region140: #{fwd.1} parent=1 // pred_region
      %408 = vsyncadd [#allocation30], 0
      %s409 = sshll.u32 %s69, 4
      %s410 = int_to_ptr.hbm [resolvable:$true] %s409
      %s411 = sshll.u32 [#allocation29], 4
      %s412 = int_to_ptr.vmem [resolvable:$true] %s411
      %417 = dma.hbm_to_vmem [thread:$0]  %s410, 32, %s412, [#allocation30], 16, 16, 1
    $region141: #{fwd.1} parent=1 // pred_fallthru
      _
    // Predicated region
    $region142: #{fwd.1} parent=1 // pred_check
      _
    $region143: #{fwd.1} parent=1 // pred_check_branch
      %419 = sbr.rel (0) target = $region145
    $region144: #{fwd.1} parent=1 // pred_region
      %421 = vsyncadd [#allocation30], 0
      %s422 = sshll.u32 %s71, 4
      %s423 = int_to_ptr.hbm [resolvable:$true] %s422
      %s424 = sshll.u32 [#allocation31], 4
      %s425 = int_to_ptr.vmem [resolvable:$true] %s424
      %430 = dma.hbm_to_vmem [thread:$0]  %s423, 1024, %s425, [#allocation30], 128, 128, 8
    $region145: #{fwd.1} parent=1 // pred_fallthru
      _
    // Predicated region
    $region146: #{fwd.1} parent=1 // pred_check
      _
    $region147: #{fwd.1} parent=1 // pred_check_branch
      %432 = sbr.rel (0) target = $region149
    $region148: #{fwd.1} parent=1 // pred_region
      %434 = vsyncadd [#allocation33], 0
      %s435 = sshll.u32 %s73, 4
      %s436 = int_to_ptr.hbm [resolvable:$true] %s435
      %s437 = sshll.u32 [#allocation32], 4
      %s438 = int_to_ptr.vmem [resolvable:$true] %s437
      %443 = dma.hbm_to_vmem [thread:$0]  %s436, 32, %s438, [#allocation33], 16, 16, 1
    $region149: #{fwd.1} parent=1 // pred_fallthru
      _
    // Predicated region
    $region150: #{fwd.1} parent=1 // pred_check
      _
    $region151: #{fwd.1} parent=1 // pred_check_branch
      %445 = sbr.rel (0) target = $region153
    $region152: #{fwd.1} parent=1 // pred_region
      %447 = vsyncadd [#allocation33], 0
      %s448 = sshll.u32 %s75, 4
      %s449 = int_to_ptr.hbm [resolvable:$true] %s448
      %s450 = sshll.u32 [#allocation34], 4
      %s451 = int_to_ptr.vmem [resolvable:$true] %s450
      %456 = dma.hbm_to_vmem [thread:$0]  %s449, 1024, %s451, [#allocation33], 128, 128, 8
    $region153: #{fwd.1} parent=1 // pred_fallthru
      _
    // Predicated region
    $region154: #{fwd.1} parent=1 // pred_check
      _
    $region155: #{fwd.1} parent=1 // pred_check_branch
      %458 = sbr.rel (0) target = $region157
    $region156: #{fwd.1} parent=1 // pred_region
      %460 = vsyncadd [#allocation36], 0
      %s461 = sshll.u32 %s77, 4
      %s462 = int_to_ptr.hbm [resolvable:$true] %s461
      %s463 = sshll.u32 [#allocation35], 4
      %s464 = int_to_ptr.vmem [resolvable:$true] %s463
      %469 = dma.hbm_to_vmem [thread:$0]  %s462, 32, %s464, [#allocation36], 16, 16, 1
    $region157: #{fwd.1} parent=1 // pred_fallthru
      _
    // Predicated region
    $region158: #{fwd.1} parent=1 // pred_check
      _
    $region159: #{fwd.1} parent=1 // pred_check_branch
      %471 = sbr.rel (0) target = $region161
    $region160: #{fwd.1} parent=1 // pred_region
      %473 = vsyncadd [#allocation36], 0
      %s474 = sshll.u32 %s79, 4
      %s475 = int_to_ptr.hbm [resolvable:$true] %s474
      %s476 = sshll.u32 [#allocation37], 4
      %s477 = int_to_ptr.vmem [resolvable:$true] %s476
      %482 = dma.hbm_to_vmem [thread:$0]  %s475, 512, %s477, [#allocation36], 128, 128, 8
    $region161: #{fwd.1} parent=1 // pred_fallthru
      _
    // Predicated region
    $region162: #{fwd.1} parent=1 // pred_check
      _
    $region163: #{fwd.1} parent=1 // pred_check_branch
      %484 = sbr.rel (0) target = $region165
    $region164: #{fwd.1} parent=1 // pred_region
      %486 = vsyncadd [#allocation39], 0
      %s487 = sshll.u32 %s81, 4
      %s488 = int_to_ptr.hbm [resolvable:$true] %s487
      %s489 = sshll.u32 [#allocation38], 4
      %s490 = int_to_ptr.vmem [resolvable:$true] %s489
      %495 = dma.hbm_to_vmem [thread:$0]  %s488, 32, %s490, [#allocation39], 16, 16, 1
    $region165: #{fwd.1} parent=1 // pred_fallthru
      _
    // Predicated region
    $region166: #{fwd.1} parent=1 // pred_check
      _
    $region167: #{fwd.1} parent=1 // pred_check_branch
      %497 = sbr.rel (0) target = $region169
    $region168: #{fwd.1} parent=1 // pred_region
      %499 = vsyncadd [#allocation39], 0
      %s500 = sshll.u32 %s83, 4
      %s501 = int_to_ptr.hbm [resolvable:$true] %s500
      %s502 = sshll.u32 [#allocation40], 4
      %s503 = int_to_ptr.vmem [resolvable:$true] %s502
      %508 = dma.hbm_to_vmem [thread:$0]  %s501, 512, %s503, [#allocation39], 128, 128, 8
    $region169: #{fwd.1} parent=1 // pred_fallthru
      _
    // Predicated region
    $region170: #{fwd.1} parent=1 // pred_check
      _
    $region171: #{fwd.1} parent=1 // pred_check_branch
      %510 = sbr.rel (0) target = $region173
    $region172: #{fwd.1} parent=1 // pred_region
      %512 = vsyncadd [#allocation42], 0
      %s513 = sshll.u32 %s85, 4
      %s514 = int_to_ptr.hbm [resolvable:$true] %s513
      %s515 = sshll.u32 [#allocation41], 4
      %s516 = int_to_ptr.vmem [resolvable:$true] %s515
      %521 = dma.hbm_to_vmem [thread:$0]  %s514, 32, %s516, [#allocation42], 16, 16, 1
    $region173: #{fwd.1} parent=1 // pred_fallthru
      _
    // Predicated region
    $region174: #{fwd.1} parent=1 // pred_check
      _
    $region175: #{fwd.1} parent=1 // pred_check_branch
      %523 = sbr.rel (0) target = $region177
    $region176: #{fwd.1} parent=1 // pred_region
      %525 = vsyncadd [#allocation42], 0
      %s526 = sshll.u32 %s87, 4
      %s527 = int_to_ptr.hbm [resolvable:$true] %s526
      %s528 = sshll.u32 [#allocation43], 4
      %s529 = int_to_ptr.vmem [resolvable:$true] %s528
      %534 = dma.hbm_to_vmem [thread:$0]  %s527, 1024, %s529, [#allocation42], 128, 128, 8
    $region177: #{fwd.1} parent=1 // pred_fallthru
      _
    // Predicated region
    $region178: #{fwd.1} parent=1 // pred_check
      _
    $region179: #{fwd.1} parent=1 // pred_check_branch
      %536 = sbr.rel (0) target = $region181
    $region180: #{fwd.1} parent=1 // pred_region
      %538 = vsyncadd [#allocation45], 0
      %s539 = sshll.u32 %s89, 4
      %s540 = int_to_ptr.hbm [resolvable:$true] %s539
      %s541 = sshll.u32 [#allocation44], 4
      %s542 = int_to_ptr.vmem [resolvable:$true] %s541
      %547 = dma.hbm_to_vmem [thread:$0]  %s540, 32, %s542, [#allocation45], 16, 16, 1
    $region181: #{fwd.1} parent=1 // pred_fallthru
      _
    // Predicated region
    $region182: #{fwd.1} parent=1 // pred_check
      _
    $region183: #{fwd.1} parent=1 // pred_check_branch
      %549 = sbr.rel (0) target = $region185
    $region184: #{fwd.1} parent=1 // pred_region
      %551 = vsyncadd [#allocation45], 0
      %s552 = sshll.u32 %s91, 4
      %s553 = int_to_ptr.hbm [resolvable:$true] %s552
      %s554 = sshll.u32 [#allocation46], 4
      %s555 = int_to_ptr.vmem [resolvable:$true] %s554
      %560 = dma.hbm_to_vmem [thread:$0]  %s553, 1024, %s555, [#allocation45], 128, 128, 8
    $region185: #{fwd.1} parent=1 // pred_fallthru
      _
    // Predicated region
    $region186: #{fwd.1} parent=1 // pred_check
      _
    $region187: #{fwd.1} parent=1 // pred_check_branch
      %562 = sbr.rel (0) target = $region189
    $region188: #{fwd.1} parent=1 // pred_region
      %564 = vsyncadd [#allocation48], 0
      %s565 = sshll.u32 %s93, 4
      %s566 = int_to_ptr.hbm [resolvable:$true] %s565
      %s567 = sshll.u32 [#allocation47], 4
      %s568 = int_to_ptr.vmem [resolvable:$true] %s567
      %573 = dma.hbm_to_vmem [thread:$0]  %s566, 1024, %s568, [#allocation48], 128, 128, 8
    $region189: #{fwd.1} parent=1 // pred_fallthru
      _
    // Predicated region
    $region190: #{fwd.1} parent=1 // pred_check
      _
    $region191: #{fwd.1} parent=1 // pred_check_branch
      %575 = sbr.rel (0) target = $region193
    $region192: #{fwd.1} parent=1 // pred_region
      %577 = vsyncadd [#allocation48], 0
      %s578 = sshll.u32 %s95, 4
      %s579 = int_to_ptr.hbm [resolvable:$true] %s578
      %s580 = sshll.u32 [#allocation49], 4
      %s581 = int_to_ptr.vmem [resolvable:$true] %s580
      %586 = dma.hbm_to_vmem [thread:$0]  %s579, 512, %s581, [#allocation48], 128, 128, 8
    $region193: #{fwd.1} parent=1 // pred_fallthru
      _
    // Predicated region
    $region194: #{fwd.1} parent=1 // pred_check
      _
    $region195: #{fwd.1} parent=1 // pred_check_branch
      %588 = sbr.rel (0) target = $region197
    $region196: #{fwd.1} parent=1 // pred_region
      %590 = vsyncadd [#allocation51], 0
      %s591 = sshll.u32 %s97, 4
      %s592 = int_to_ptr.hbm [resolvable:$true] %s591
      %s593 = sshll.u32 [#allocation50], 4
      %s594 = int_to_ptr.vmem [resolvable:$true] %s593
      %599 = dma.hbm_to_vmem [thread:$0]  %s592, 32, %s594, [#allocation51], 16, 16, 1
    $region197: #{fwd.1} parent=1 // pred_fallthru
      _
    // Predicated region
    $region198: #{fwd.1} parent=1 // pred_check
      _
    $region199: #{fwd.1} parent=1 // pred_check_branch
      %601 = sbr.rel (0) target = $region201
    $region200: #{fwd.1} parent=1 // pred_region
      %603 = vsyncadd [#allocation51], 0
      %s604 = sshll.u32 %s99, 4
      %s605 = int_to_ptr.hbm [resolvable:$true] %s604
      %s606 = sshll.u32 [#allocation52], 4
      %s607 = int_to_ptr.vmem [resolvable:$true] %s606
      %612 = dma.hbm_to_vmem [thread:$0]  %s605, 1024, %s607, [#allocation51], 128, 128, 8
    $region201: #{fwd.1} parent=1 // pred_fallthru
      _
    // Predicated region
    $region202: #{fwd.1} parent=1 // pred_check
      _
    $region203: #{fwd.1} parent=1 // pred_check_branch
      %614 = sbr.rel (0) target = $region205
    $region204: #{fwd.1} parent=1 // pred_region
      %616 = vsyncadd [#allocation54], 0
      %s617 = sshll.u32 %s101, 4
      %s618 = int_to_ptr.hbm [resolvable:$true] %s617
      %s619 = sshll.u32 [#allocation53], 4
      %s620 = int_to_ptr.vmem [resolvable:$true] %s619
      %625 = dma.hbm_to_vmem [thread:$0]  %s618, 32, %s620, [#allocation54], 16, 16, 1
    $region205: #{fwd.1} parent=1 // pred_fallthru
      _
    // Predicated region
    $region206: #{fwd.1} parent=1 // pred_check
      _
    $region207: #{fwd.1} parent=1 // pred_check_branch
      %627 = sbr.rel (0) target = $region209
    $region208: #{fwd.1} parent=1 // pred_region
      %629 = vsyncadd [#allocation54], 0
      %s630 = sshll.u32 %s103, 4
      %s631 = int_to_ptr.hbm [resolvable:$true] %s630
      %s632 = sshll.u32 [#allocation55], 4
      %s633 = int_to_ptr.vmem [resolvable:$true] %s632
      %638 = dma.hbm_to_vmem [thread:$0]  %s631, 512, %s633, [#allocation54], 128, 128, 8
    $region209: #{fwd.1} parent=1 // pred_fallthru
      _
    // Predicated region
    $region210: #{fwd.1} parent=1 // pred_check
      _
    $region211: #{fwd.1} parent=1 // pred_check_branch
      %640 = sbr.rel (0) target = $region213
    $region212: #{fwd.1} parent=1 // pred_region
      _
    $region213: #{fwd.1} parent=1 // pred_fallthru
      _
    // Predicated region
    $region214: #{fwd.1} parent=1 // pred_check
      _
    $region215: #{fwd.1} parent=1 // pred_check_branch
      %642 = sbr.rel (0) target = $region217
    $region216: #{fwd.1} parent=1 // pred_region
      %644 = vsyncadd [#allocation57], 0
      %s645 = sshll.u32 %s107, 4
      %s646 = int_to_ptr.hbm [resolvable:$true] %s645
      %s647 = sshll.u32 [#allocation56], 4
      %s648 = int_to_ptr.vmem [resolvable:$true] %s647
      %653 = dma.hbm_to_vmem [thread:$0]  %s646, 512, %s648, [#allocation57], 128, 128, 8
    $region217: #{fwd.1} parent=1 // pred_fallthru
      _
    // Predicated region
    $region218: #{fwd.1} parent=1 // pred_check
      _
    $region219: #{fwd.1} parent=1 // pred_check_branch
      %655 = sbr.rel (0) target = $region221
    $region220: #{fwd.1} parent=1 // pred_region
      _
    $region221: #{fwd.1} parent=1 // pred_fallthru
      _
    // Predicated region
    $region222: #{fwd.1} parent=1 // pred_check
      _
    $region223: #{fwd.1} parent=1 // pred_check_branch
      %657 = sbr.rel (0) target = $region225
    $region224: #{fwd.1} parent=1 // pred_region
      %659 = vsyncadd [#allocation57], 0
      %s660 = sshll.u32 %s111, 4
      %s661 = int_to_ptr.hbm [resolvable:$true] %s660
      %s662 = sshll.u32 [#allocation58], 4
      %s663 = int_to_ptr.vmem [resolvable:$true] %s662
      %668 = dma.hbm_to_vmem [thread:$0]  %s661, 1024, %s663, [#allocation57], 128, 128, 8
    $region225: #{fwd.1} parent=1 // pred_fallthru
      _
    // Predicated region
    $region226: #{fwd.1} parent=1 // pred_check
      _
    $region227: #{fwd.1} parent=1 // pred_check_branch
      %670 = sbr.rel (0) target = $region229
    $region228: #{fwd.1} parent=1 // pred_region
      _
    $region229: #{fwd.1} parent=1 // pred_fallthru
      _
    // Predicated region
    $region230: #{fwd.1} parent=1 // pred_check
      _
    $region231: #{fwd.1} parent=1 // pred_check_branch
      %672 = sbr.rel (0) target = $region233
    $region232: #{fwd.1} parent=1 // pred_region
      _
    $region233: #{fwd.1} parent=1 // pred_fallthru
      _
    // Predicated region
    $region234: #{fwd.1} parent=1 // pred_check
      _
    $region235: #{fwd.1} parent=1 // pred_check_branch
      %674 = sbr.rel (0) target = $region237
    $region236: #{fwd.1} parent=1 // pred_region
      _
    $region237: #{fwd.1} parent=1 // pred_fallthru
      _
    // Predicated region
    $region238: #{fwd.1} parent=1 // pred_check
      _
    $region239: #{fwd.1} parent=1 // pred_check_branch
      %676 = sbr.rel (0) target = $region241
    $region240: #{fwd.1} parent=1 // pred_region
      _
    $region241: #{fwd.1} parent=1 // pred_fallthru
      _
    // Predicated region
    $region242: #{fwd.1} parent=1 // pred_check
      _
    $region243: #{fwd.1} parent=1 // pred_check_branch
      %678 = sbr.rel (0) target = $region245
    $region244: #{fwd.1} parent=1 // pred_region
      _
    $region245: #{fwd.1} parent=1 // pred_fallthru
      _
    // Predicated region
    $region246: #{fwd.1} parent=1 // pred_check
      _
    $region247: #{fwd.1} parent=1 // pred_check_branch
      %680 = sbr.rel (0) target = $region249
    $region248: #{fwd.1} parent=1 // pred_region
      %682 = vsyncadd [#allocation60], 0
      %s683 = sshll.u32 %s123, 4
      %s684 = int_to_ptr.hbm [resolvable:$true] %s683
      %s685 = sshll.u32 [#allocation59], 4
      %s686 = int_to_ptr.vmem [resolvable:$true] %s685
      %691 = dma.hbm_to_vmem [thread:$0]  %s684, 1024, %s686, [#allocation60], 128, 128, 8
    $region249: #{fwd.1} parent=1 // pred_fallthru
      _
    // Predicated region
    $region250: #{fwd.1} parent=1 // pred_check
      _
    $region251: #{fwd.1} parent=1 // pred_check_branch
      %693 = sbr.rel (0) target = $region253
    $region252: #{fwd.1} parent=1 // pred_region
      _
    $region253: #{fwd.1} parent=1 // pred_fallthru
      _
    // Predicated region
    $region254: #{fwd.1} parent=1 // pred_check
      _
    $region255: #{fwd.1} parent=1 // pred_check_branch
      %695 = sbr.rel (0) target = $region257
    $region256: #{fwd.1} parent=1 // pred_region
      %697 = vsyncadd [#allocation60], 0
      %s698 = sshll.u32 %s127, 4
      %s699 = int_to_ptr.hbm [resolvable:$true] %s698
      %s700 = sshll.u32 [#allocation61], 4
      %s701 = int_to_ptr.vmem [resolvable:$true] %s700
      %706 = dma.hbm_to_vmem [thread:$0]  %s699, 1024, %s701, [#allocation60], 128, 128, 8
    $region257: #{fwd.1} parent=1 // pred_fallthru
      _
    // Predicated region
    $region258: #{fwd.1} parent=1 // pred_check
      _
    $region259: #{fwd.1} parent=1 // pred_check_branch
      %708 = sbr.rel (0) target = $region261
    $region260: #{fwd.1} parent=1 // pred_region
      _
    $region261: #{fwd.1} parent=1 // pred_fallthru
      _
    // Predicated region
    $region262: #{fwd.1} parent=1 // pred_check
      _
    $region263: #{fwd.1} parent=1 // pred_check_branch
      %710 = sbr.rel (0) target = $region265
    $region264: #{fwd.1} parent=1 // pred_region
      _
    $region265: #{fwd.1} parent=1 // pred_fallthru
      _
    // Predicated region
    $region266: #{fwd.1} parent=1 // pred_check
      _
    $region267: #{fwd.1} parent=1 // pred_check_branch
      %712 = sbr.rel (0) target = $region269
    $region268: #{fwd.1} parent=1 // pred_region
      %714 = vsyncadd [#allocation63], 0
      %s715 = sshll.u32 %s133, 4
      %s716 = int_to_ptr.hbm [resolvable:$true] %s715
      %s717 = sshll.u32 [#allocation62], 4
      %s718 = int_to_ptr.vmem [resolvable:$true] %s717
      %723 = dma.hbm_to_vmem [thread:$0]  %s716, 1024, %s718, [#allocation63], 128, 128, 8
    $region269: #{fwd.1} parent=1 // pred_fallthru
      _
    // Predicated region
    $region270: #{fwd.1} parent=1 // pred_check
      _
    $region271: #{fwd.1} parent=1 // pred_check_branch
      %725 = sbr.rel (0) target = $region273
    $region272: #{fwd.1} parent=1 // pred_region
      %727 = dma.done [#allocation3], 16
    $region273: #{fwd.1} parent=1 // pred_fallthru
      _
    // Predicated region
    $region274: #{fwd.1} parent=1 // pred_check
      _
    $region275: #{fwd.1} parent=1 // pred_check_branch
      %729 = sbr.rel (0) target = $region277
    $region276: #{fwd.1} parent=1 // pred_region
      %731 = dma.done [#allocation6], 16
    $region277: #{fwd.1} parent=1 // pred_fallthru
      _
    // Predicated region
    $region278: #{fwd.1} parent=1 // pred_check
      _
    $region279: #{fwd.1} parent=1 // pred_check_branch
      %733 = sbr.rel (0) target = $region281
    $region280: #{fwd.1} parent=1 // pred_region
      %735 = dma.done [#allocation6], 16
    $region281: #{fwd.1} parent=1 // pred_fallthru
      _
    // Predicated region
    $region282: #{fwd.1} parent=1 // pred_check
      _
    $region283: #{fwd.1} parent=1 // pred_check_branch
      %737 = sbr.rel (0) target = $region285
    $region284: #{fwd.1} parent=1 // pred_region
      %739 = dma.done [#allocation9], 256
    $region285: #{fwd.1} parent=1 // pred_fallthru
      _
    // Predicated region
    $region286: #{fwd.1} parent=1 // pred_check
      _
    $region287: #{fwd.1} parent=1 // pred_check_branch
      %741 = sbr.rel (0) target = $region289
    $region288: #{fwd.1} parent=1 // pred_region
      %743 = dma.done [#allocation9], 1024
    $region289: #{fwd.1} parent=1 // pred_fallthru
      _
    // Predicated region
    $region290: #{fwd.1} parent=1 // pred_check
      _
    $region291: #{fwd.1} parent=1 // pred_check_branch
      %745 = sbr.rel (0) target = $region293
    $region292: #{fwd.1} parent=1 // pred_region
      %747 = dma.done [#allocation12], 16
    $region293: #{fwd.1} parent=1 // pred_fallthru
      _
    // Predicated region
    $region294: #{fwd.1} parent=1 // pred_check
      _
    $region295: #{fwd.1} parent=1 // pred_check_branch
      %749 = sbr.rel (0) target = $region297
    $region296: #{fwd.1} parent=1 // pred_region
      %751 = dma.done [#allocation12], 128
    $region297: #{fwd.1} parent=1 // pred_fallthru
      _
    // Predicated region
    $region298: #{fwd.1} parent=1 // pred_check
      _
    $region299: #{fwd.1} parent=1 // pred_check_branch
      %753 = sbr.rel (0) target = $region301
    $region300: #{fwd.1} parent=1 // pred_region
      %755 = dma.done [#allocation15], 16
    $region301: #{fwd.1} parent=1 // pred_fallthru
      _
    // Predicated region
    $region302: #{fwd.1} parent=1 // pred_check
      _
    $region303: #{fwd.1} parent=1 // pred_check_branch
      %757 = sbr.rel (0) target = $region305
    $region304: #{fwd.1} parent=1 // pred_region
      %759 = dma.done [#allocation15], 32
    $region305: #{fwd.1} parent=1 // pred_fallthru
      _
    // Predicated region
    $region306: #{fwd.1} parent=1 // pred_check
      _
    $region307: #{fwd.1} parent=1 // pred_check_branch
      %761 = sbr.rel (0) target = $region309
    $region308: #{fwd.1} parent=1 // pred_region
      %763 = dma.done [#allocation18], 1024
    $region309: #{fwd.1} parent=1 // pred_fallthru
      _
    // Predicated region
    $region310: #{fwd.1} parent=1 // pred_check
      _
    $region311: #{fwd.1} parent=1 // pred_check_branch
      %765 = sbr.rel (0) target = $region313
    $region312: #{fwd.1} parent=1 // pred_region
      %767 = dma.done [#allocation18], 512
    $region313: #{fwd.1} parent=1 // pred_fallthru
      _
    // Predicated region
    $region314: #{fwd.1} parent=1 // pred_check
      _
    $region315: #{fwd.1} parent=1 // pred_check_branch
      %769 = sbr.rel (0) target = $region317
    $region316: #{fwd.1} parent=1 // pred_region
      %771 = dma.done [#allocation21], 32
    $region317: #{fwd.1} parent=1 // pred_fallthru
      _
    // Predicated region
    $region318: #{fwd.1} parent=1 // pred_check
      _
    $region319: #{fwd.1} parent=1 // pred_check_branch
      %773 = sbr.rel (0) target = $region321
    $region320: #{fwd.1} parent=1 // pred_region
      %775 = dma.done [#allocation21], 1024
    $region321: #{fwd.1} parent=1 // pred_fallthru
      _
    // Predicated region
    $region322: #{fwd.1} parent=1 // pred_check
      _
    $region323: #{fwd.1} parent=1 // pred_check_branch
      %777 = sbr.rel (0) target = $region325
    $region324: #{fwd.1} parent=1 // pred_region
      %779 = dma.done [#allocation24], 32
    $region325: #{fwd.1} parent=1 // pred_fallthru
      _
    // Predicated region
    $region326: #{fwd.1} parent=1 // pred_check
      _
    $region327: #{fwd.1} parent=1 // pred_check_branch
      %781 = sbr.rel (0) target = $region329
    $region328: #{fwd.1} parent=1 // pred_region
      %783 = dma.done [#allocation24], 512
    $region329: #{fwd.1} parent=1 // pred_fallthru
      _
    // Predicated region
    $region330: #{fwd.1} parent=1 // pred_check
      _
    $region331: #{fwd.1} parent=1 // pred_check_branch
      %785 = sbr.rel (0) target = $region333
    $region332: #{fwd.1} parent=1 // pred_region
      %787 = dma.done [#allocation27], 32
    $region333: #{fwd.1} parent=1 // pred_fallthru
      _
    // Predicated region
    $region334: #{fwd.1} parent=1 // pred_check
      _
    $region335: #{fwd.1} parent=1 // pred_check_branch
      %789 = sbr.rel (0) target = $region337
    $region336: #{fwd.1} parent=1 // pred_region
      %791 = dma.done [#allocation27], 512
    $region337: #{fwd.1} parent=1 // pred_fallthru
      _
    // Predicated region
    $region338: #{fwd.1} parent=1 // pred_check
      _
    $region339: #{fwd.1} parent=1 // pred_check_branch
      %793 = sbr.rel (0) target = $region341
    $region340: #{fwd.1} parent=1 // pred_region
      %795 = dma.done [#allocation30], 32
    $region341: #{fwd.1} parent=1 // pred_fallthru
      _
    // Predicated region
    $region342: #{fwd.1} parent=1 // pred_check
      _
    $region343: #{fwd.1} parent=1 // pred_check_branch
      %797 = sbr.rel (0) target = $region345
    $region344: #{fwd.1} parent=1 // pred_region
      %799 = dma.done [#allocation30], 1024
    $region345: #{fwd.1} parent=1 // pred_fallthru
      _
    // Predicated region
    $region346: #{fwd.1} parent=1 // pred_check
      _
    $region347: #{fwd.1} parent=1 // pred_check_branch
      %801 = sbr.rel (0) target = $region349
    $region348: #{fwd.1} parent=1 // pred_region
      %803 = dma.done [#allocation33], 32
    $region349: #{fwd.1} parent=1 // pred_fallthru
      _
    // Predicated region
    $region350: #{fwd.1} parent=1 // pred_check
      _
    $region351: #{fwd.1} parent=1 // pred_check_branch
      %805 = sbr.rel (0) target = $region353
    $region352: #{fwd.1} parent=1 // pred_region
      %807 = dma.done [#allocation33], 1024
    $region353: #{fwd.1} parent=1 // pred_fallthru
      _
    // Predicated region
    $region354: #{fwd.1} parent=1 // pred_check
      _
    $region355: #{fwd.1} parent=1 // pred_check_branch
      %809 = sbr.rel (0) target = $region357
    $region356: #{fwd.1} parent=1 // pred_region
      %811 = dma.done [#allocation36], 32
    $region357: #{fwd.1} parent=1 // pred_fallthru
      _
    // Predicated region
    $region358: #{fwd.1} parent=1 // pred_check
      _
    $region359: #{fwd.1} parent=1 // pred_check_branch
      %813 = sbr.rel (0) target = $region361
    $region360: #{fwd.1} parent=1 // pred_region
      %815 = dma.done [#allocation36], 512
    $region361: #{fwd.1} parent=1 // pred_fallthru
      _
    // Predicated region
    $region362: #{fwd.1} parent=1 // pred_check
      _
    $region363: #{fwd.1} parent=1 // pred_check_branch
      %817 = sbr.rel (0) target = $region365
    $region364: #{fwd.1} parent=1 // pred_region
      %819 = dma.done [#allocation39], 32
    $region365: #{fwd.1} parent=1 // pred_fallthru
      _
    // Predicated region
    $region366: #{fwd.1} parent=1 // pred_check
      _
    $region367: #{fwd.1} parent=1 // pred_check_branch
      %821 = sbr.rel (0) target = $region369
    $region368: #{fwd.1} parent=1 // pred_region
      %823 = dma.done [#allocation39], 512
    $region369: #{fwd.1} parent=1 // pred_fallthru
      _
    // Predicated region
    $region370: #{fwd.1} parent=1 // pred_check
      _
    $region371: #{fwd.1} parent=1 // pred_check_branch
      %825 = sbr.rel (0) target = $region373
    $region372: #{fwd.1} parent=1 // pred_region
      %827 = dma.done [#allocation42], 32
    $region373: #{fwd.1} parent=1 // pred_fallthru
      _
    // Predicated region
    $region374: #{fwd.1} parent=1 // pred_check
      _
    $region375: #{fwd.1} parent=1 // pred_check_branch
      %829 = sbr.rel (0) target = $region377
    $region376: #{fwd.1} parent=1 // pred_region
      %831 = dma.done [#allocation42], 1024
    $region377: #{fwd.1} parent=1 // pred_fallthru
      _
    // Predicated region
    $region378: #{fwd.1} parent=1 // pred_check
      _
    $region379: #{fwd.1} parent=1 // pred_check_branch
      %833 = sbr.rel (0) target = $region381
    $region380: #{fwd.1} parent=1 // pred_region
      %835 = dma.done [#allocation45], 32
    $region381: #{fwd.1} parent=1 // pred_fallthru
      _
    // Predicated region
    $region382: #{fwd.1} parent=1 // pred_check
      _
    $region383: #{fwd.1} parent=1 // pred_check_branch
      %837 = sbr.rel (0) target = $region385
    $region384: #{fwd.1} parent=1 // pred_region
      %839 = dma.done [#allocation45], 1024
    $region385: #{fwd.1} parent=1 // pred_fallthru
      _
    // Predicated region
    $region386: #{fwd.1} parent=1 // pred_check
      _
    $region387: #{fwd.1} parent=1 // pred_check_branch
      %841 = sbr.rel (0) target = $region389
    $region388: #{fwd.1} parent=1 // pred_region
      %843 = dma.done [#allocation48], 1024
    $region389: #{fwd.1} parent=1 // pred_fallthru
      _
    // Predicated region
    $region390: #{fwd.1} parent=1 // pred_check
      _
    $region391: #{fwd.1} parent=1 // pred_check_branch
      %845 = sbr.rel (0) target = $region393
    $region392: #{fwd.1} parent=1 // pred_region
      %847 = dma.done [#allocation48], 512
    $region393: #{fwd.1} parent=1 // pred_fallthru
      _
    // Predicated region
    $region394: #{fwd.1} parent=1 // pred_check
      _
    $region395: #{fwd.1} parent=1 // pred_check_branch
      %849 = sbr.rel (0) target = $region397
    $region396: #{fwd.1} parent=1 // pred_region
      %851 = dma.done [#allocation51], 32
    $region397: #{fwd.1} parent=1 // pred_fallthru
      _
    // Predicated region
    $region398: #{fwd.1} parent=1 // pred_check
      _
    $region399: #{fwd.1} parent=1 // pred_check_branch
      %853 = sbr.rel (0) target = $region401
    $region400: #{fwd.1} parent=1 // pred_region
      %855 = dma.done [#allocation51], 1024
    $region401: #{fwd.1} parent=1 // pred_fallthru
      _
    // Predicated region
    $region402: #{fwd.1} parent=1 // pred_check
      _
    $region403: #{fwd.1} parent=1 // pred_check_branch
      %857 = sbr.rel (0) target = $region405
    $region404: #{fwd.1} parent=1 // pred_region
      %859 = dma.done [#allocation54], 32
    $region405: #{fwd.1} parent=1 // pred_fallthru
      _
    // Predicated region
    $region406: #{fwd.1} parent=1 // pred_check
      _
    $region407: #{fwd.1} parent=1 // pred_check_branch
      %861 = sbr.rel (0) target = $region409
    $region408: #{fwd.1} parent=1 // pred_region
      %863 = dma.done [#allocation54], 512
    $region409: #{fwd.1} parent=1 // pred_fallthru
      _
    // Predicated region
    $region410: #{fwd.1} parent=1 // pred_check
      _
    $region411: #{fwd.1} parent=1 // pred_check_branch
      %865 = sbr.rel (0) target = $region413
    $region412: #{fwd.1} parent=1 // pred_region
      %867 = dma.done [#allocation57], 512
    $region413: #{fwd.1} parent=1 // pred_fallthru
      _
    // Predicated region
    $region414: #{fwd.1} parent=1 // pred_check
      _
    $region415: #{fwd.1} parent=1 // pred_check_branch
      %869 = sbr.rel (0) target = $region417
    $region416: #{fwd.1} parent=1 // pred_region
      %871 = dma.done [#allocation57], 1024
    $region417: #{fwd.1} parent=1 // pred_fallthru
      _
    // Predicated region
    $region418: #{fwd.1} parent=1 // pred_check
      _
    $region419: #{fwd.1} parent=1 // pred_check_branch
      %873 = sbr.rel (0) target = $region421
    $region420: #{fwd.1} parent=1 // pred_region
      %875 = dma.done [#allocation60], 1024
    $region421: #{fwd.1} parent=1 // pred_fallthru
      _
    // Predicated region
    $region422: #{fwd.1} parent=1 // pred_check
      _
    $region423: #{fwd.1} parent=1 // pred_check_branch
      %877 = sbr.rel (0) target = $region425
    $region424: #{fwd.1} parent=1 // pred_region
      %879 = dma.done [#allocation60], 1024
    $region425: #{fwd.1} parent=1 // pred_fallthru
      _
    // Predicated region
    $region426: #{fwd.1} parent=1 // pred_check
      _
    $region427: #{fwd.1} parent=1 // pred_check_branch
      %881 = sbr.rel (0) target = $region429
    $region428: #{fwd.1} parent=1 // pred_region
      %883 = dma.done [#allocation63], 1024
    $region429: #{fwd.1} parent=1 // pred_fallthru
      _
    %v884 = vld [vmem:[%s1] sm:$0xff]
    %v885 = vld [vmem:[%s1 + $0x8] sm:$0xff]
    %v886 = vld [vmem:[%s3] sm:$0xff]
    %v887 = vld [vmem:[%s5] sm:$0xf]
    %v888 = vld [vmem:[%s7] sm:$0xff]
    %v889 = vld [vmem:[%s7 + $0x8] sm:$0xff]
    %v890 = vld [vmem:[%s9] sm:$0xff]
    %v891 = vld [vmem:[%s9 + $0x8] sm:$0xff]
    %v892 = vld [vmem:[%s11] sm:$0xff]
    %v893 = vld [vmem:[%s13] sm:$0xff]
    %v894 = vld [vmem:[%s15] sm:$0xf]
    %v895 = vld [vmem:[#allocation13] sm:$0xff]
    %v896 = vld [vmem:[#allocation11] sm:$0x1]
    %v898 = vperm.slane %v896, 0
    %vm900 = vcmask 64512
    %v902 = vsel %vm900, %v884, 0
    %v905 = vsel %vm900, %v885, 0
    %907 = vmatpush.msra.mxu0 0.0
    %908 = vmatpush.msra.mxu0 0.0
    %909 = vmatpush.msra.mxu0 0.0
    %910 = vmatpush.msra.mxu0 0.0
    %911 = vmatpush.msra.mxu0 0.0
    %912 = vmatpush.msra.mxu0 0.0
    %913 = vmatpush.msra.mxu0 0.0
    %914 = vmatpush.msra.mxu0 0.0
    %915 = vmatpush.msra.mxu0 0.0
    %916 = vmatpush.msra.mxu0 0.0
    %917 = vmatpush.msra.mxu0 0.0
    %918 = vmatpush.msra.mxu0 0.0
    %919 = vmatpush.msra.mxu0 0.0
    %920 = vmatpush.msra.mxu0 0.0
    %921 = vmatpush.msra.mxu0 0.0
    %922 = vmatpush.msra.mxu0 %v895
    %923 = vmatmul.f32.gmra.mxu0 %v902
    %v924 = vpop.f32.mrf.mxu0
    %v925 = vadd.f32 %v898, %v924
    %926 = vmatmul.f32.gmra.mxu0 %v905
    %v927 = vpop.f32.mrf.mxu0
    %v928 = vadd.f32 %v898, %v927
    %929 = vdwg.mxu0
    %v930 = vld [vmem:[%s45] sm:$0xff]
    %v931 = vld [vmem:[#allocation14] sm:$0x1]
    %v933 = vperm.slane %v931, 0
    %v936 = vsel %vm900, %v886, 0
    %938 = vmatpush.msra.mxu0 0.0
    %939 = vmatpush.msra.mxu0 0.0
    %940 = vmatpush.msra.mxu0 0.0
    %941 = vmatpush.msra.mxu0 0.0
    %942 = vmatpush.msra.mxu0 0.0
    %943 = vmatpush.msra.mxu0 0.0
    %944 = vmatpush.msra.mxu0 0.0
    %945 = vmatpush.msra.mxu0 0.0
    %946 = vmatpush.msra.mxu0 0.0
    %947 = vmatpush.msra.mxu0 0.0
    %948 = vmatpush.msra.mxu0 0.0
    %949 = vmatpush.msra.mxu0 0.0
    %950 = vmatpush.msra.mxu0 0.0
    %951 = vmatpush.msra.mxu0 0.0
    %952 = vmatpush.msra.mxu0 0.0
    %953 = vmatpush.msra.mxu0 %v930
    %954 = vmatmul.f32.gmra.mxu0 %v936
    %v955 = vpop.f32.mrf.mxu0
    %v956 = vadd.f32 %v933, %v955
    %957 = vdwg.mxu0
    %v958 = vld [vmem:[%s49] sm:$0xff]
    %v959 = vld [vmem:[%s47] sm:$0x1]
    %v961 = vperm.slane %v959, 0
    %v964 = vsel %vm900, %v887, 0
    %966 = vmatpush.msra.mxu0 0.0
    %967 = vmatpush.msra.mxu0 0.0
    %968 = vmatpush.msra.mxu0 0.0
    %969 = vmatpush.msra.mxu0 0.0
    %970 = vmatpush.msra.mxu0 0.0
    %971 = vmatpush.msra.mxu0 0.0
    %972 = vmatpush.msra.mxu0 0.0
    %973 = vmatpush.msra.mxu0 0.0
    %974 = vmatpush.msra.mxu0 0.0
    %975 = vmatpush.msra.mxu0 0.0
    %976 = vmatpush.msra.mxu0 0.0
    %977 = vmatpush.msra.mxu0 0.0
    %978 = vmatpush.msra.mxu0 0.0
    %979 = vmatpush.msra.mxu0 0.0
    %980 = vmatpush.msra.mxu0 0.0
    %981 = vmatpush.msra.mxu0 %v958
    %982 = vmatmul.f32.gmra.mxu0 %v964
    %v983 = vpop.f32.mrf.mxu0
    %v984 = vadd.f32 %v961, %v983
    %985 = vdwg.mxu0
    %v986 = vld [vmem:[#allocation16] sm:$0x1]
    %v987 = vld [vmem:[#allocation17] sm:$0xff]
    %v988 = vld [vmem:[#allocation17 + $0x8] sm:$0xff]
    %v989 = vld [vmem:[#allocation17 + $0x10] sm:$0xff]
    %v990 = vld [vmem:[#allocation17 + $0x18] sm:$0xff]
    %v991 = vld [vmem:[#allocation19] sm:$0xff]
    %v992 = vld [vmem:[#allocation19 + $0x8] sm:$0xff]
    %v993 = vld [vmem:[#allocation20] sm:$0x1]
    %v994 = vld [vmem:[#allocation22] sm:$0xff]
    %v995 = vld [vmem:[#allocation22 + $0x8] sm:$0xff]
    %v996 = vld [vmem:[#allocation22 + $0x10] sm:$0xff]
    %v997 = vld [vmem:[#allocation22 + $0x18] sm:$0xff]
    %v998 = vld [vmem:[#allocation23] sm:$0x1]
    %v999 = vld [vmem:[#allocation25] sm:$0xff]
    %v1000 = vld [vmem:[#allocation25 + $0x8] sm:$0xff]
    %v1001 = vld [vmem:[#allocation26] sm:$0x1]
    %v1002 = vld [vmem:[#allocation28] sm:$0xff]
    %v1003 = vld [vmem:[#allocation28 + $0x8] sm:$0xff]
    %v1004 = vld [vmem:[#allocation29] sm:$0x1]
    %v1005 = vld [vmem:[#allocation31] sm:$0xff]
    %v1006 = vld [vmem:[#allocation31 + $0x8] sm:$0xff]
    %v1007 = vld [vmem:[#allocation31 + $0x10] sm:$0xff]
    %v1008 = vld [vmem:[#allocation31 + $0x18] sm:$0xff]
    %v1009 = vld [vmem:[#allocation32] sm:$0x1]
    %v1010 = vld [vmem:[#allocation34] sm:$0xff]
    %v1011 = vld [vmem:[#allocation34 + $0x8] sm:$0xff]
    %v1012 = vld [vmem:[#allocation34 + $0x10] sm:$0xff]
    %v1013 = vld [vmem:[#allocation34 + $0x18] sm:$0xff]
    %v1014 = vld [vmem:[#allocation35] sm:$0x1]
    %v1015 = vld [vmem:[#allocation37] sm:$0xff]
    %v1016 = vld [vmem:[#allocation37 + $0x8] sm:$0xff]
    %v1017 = vld [vmem:[#allocation38] sm:$0x1]
    %v1018 = vld [vmem:[#allocation40] sm:$0xff]
    %v1019 = vld [vmem:[#allocation40 + $0x8] sm:$0xff]
    %v1020 = vld [vmem:[#allocation41] sm:$0x1]
    %v1021 = vld [vmem:[#allocation43] sm:$0xff]
    %v1022 = vld [vmem:[#allocation43 + $0x8] sm:$0xff]
    %v1023 = vld [vmem:[#allocation43 + $0x10] sm:$0xff]
    %v1024 = vld [vmem:[#allocation43 + $0x18] sm:$0xff]
    %v1025 = vld [vmem:[#allocation44] sm:$0x1]
    %v1026 = vld [vmem:[#allocation46] sm:$0xff]
    %v1027 = vld [vmem:[#allocation46 + $0x8] sm:$0xff]
    %v1028 = vld [vmem:[#allocation46 + $0x10] sm:$0xff]
    %v1029 = vld [vmem:[#allocation46 + $0x18] sm:$0xff]
    %v1030 = vld [vmem:[#allocation47] sm:$0xff]
    %v1031 = vld [vmem:[#allocation47 + $0x8] sm:$0xff]
    %v1032 = vld [vmem:[#allocation47 + $0x10] sm:$0xff]
    %v1033 = vld [vmem:[#allocation47 + $0x18] sm:$0xff]
    %v1034 = vld [vmem:[#allocation49] sm:$0xff]
    %v1035 = vld [vmem:[#allocation49 + $0x8] sm:$0xff]
    %v1036 = vld [vmem:[#allocation50] sm:$0x1]
    %v1037 = vld [vmem:[#allocation52] sm:$0xff]
    %v1038 = vld [vmem:[#allocation52 + $0x8] sm:$0xff]
    %v1039 = vld [vmem:[#allocation52 + $0x10] sm:$0xff]
    %v1040 = vld [vmem:[#allocation52 + $0x18] sm:$0xff]
    %v1041 = vld [vmem:[#allocation53] sm:$0x1]
    %v1042 = vld [vmem:[#allocation55] sm:$0xff]
    %v1043 = vld [vmem:[#allocation55 + $0x8] sm:$0xff]
    %v1044 = vld [vmem:[%s105] sm:$0x1]
    %v1045 = vld [vmem:[#allocation56] sm:$0xff]
    %v1046 = vld [vmem:[#allocation56 + $0x8] sm:$0xff]
    %v1047 = vld [vmem:[%s109] sm:$0x1]
    %v1048 = vld [vmem:[#allocation58] sm:$0xff]
    %v1049 = vld [vmem:[#allocation58 + $0x8] sm:$0xff]
    %v1050 = vld [vmem:[#allocation58 + $0x10] sm:$0xff]
    %v1051 = vld [vmem:[#allocation58 + $0x18] sm:$0xff]
    %v1052 = vld [vmem:[%s113] sm:$0x1]
    %v1053 = vld [vmem:[%s115] sm:$0xff]
    %v1054 = vld [vmem:[%s115 + $0x8] sm:$0xff]
    %v1055 = vld [vmem:[%s117] sm:$0x1]
    %v1056 = vld [vmem:[%s119] sm:$0xff]
    %v1057 = vld [vmem:[%s119 + $0x8] sm:$0xff]
    %v1058 = vld [vmem:[%s121] sm:$0x1]
    %v1059 = vld [vmem:[#allocation59] sm:$0xff]
    %v1060 = vld [vmem:[#allocation59 + $0x8] sm:$0xff]
    %v1061 = vld [vmem:[#allocation59 + $0x10] sm:$0xff]
    %v1062 = vld [vmem:[#allocation59 + $0x18] sm:$0xff]
    %v1063 = vld [vmem:[%s125] sm:$0x1]
    %v1064 = vld [vmem:[#allocation61] sm:$0xff]
    %v1065 = vld [vmem:[#allocation61 + $0x8] sm:$0xff]
    %v1066 = vld [vmem:[#allocation61 + $0x10] sm:$0xff]
    %v1067 = vld [vmem:[#allocation61 + $0x18] sm:$0xff]
    %v1068 = vld [vmem:[%s129] sm:$0xff]
    %v1069 = vld [vmem:[%s129 + $0x8] sm:$0xff]
    %v1070 = vld [vmem:[%s131] sm:$0x1]
    %v1071 = vld [vmem:[#allocation62] sm:$0xff]
    %v1072 = vld [vmem:[#allocation62 + $0x8] sm:$0xff]
    %v1073 = vld [vmem:[#allocation62 + $0x10] sm:$0xff]
    %v1074 = vld [vmem:[#allocation62 + $0x18] sm:$0xff]
    %vm1075 = vcmask 130048
    %v1077 = vsel %vm1075, %v892, 0
    %1079 = vmatpush.msra.mxu0 0.0
    %1080 = vmatpush.msra.mxu0 0.0
    %1081 = vmatpush.msra.mxu0 0.0
    %1082 = vmatpush.msra.mxu0 0.0
    %1083 = vmatpush.msra.mxu0 0.0
    %1084 = vmatpush.msra.mxu0 0.0
    %1085 = vmatpush.msra.mxu0 0.0
    %1086 = vmatpush.msra.mxu0 0.0
    %1087 = vmatpush.msra.mxu0 0.0
    %1088 = vmatpush.msra.mxu0 0.0
    %1089 = vmatpush.msra.mxu0 0.0
    %1090 = vmatpush.msra.mxu0 0.0
    %1091 = vmatpush.msra.mxu0 0.0
    %1092 = vmatpush.msra.mxu0 0.0
    %1093 = vmatpush.msra.mxu0 %v889
    %1094 = vmatpush.msra.mxu0 %v888
    %1095 = vmatmul.f32.gmra.mxu0 %v1077
    %v1096 = vpop.f32.mrf.mxu0
    %v1097 = vadd.f32 0.0, %v1096
    %1098 = vdwg.mxu0
    %v1100 = vsel %vm900, %v894, 0
    %1102 = vmatpush.msra.mxu0 0.0
    %1103 = vmatpush.msra.mxu0 0.0
    %1104 = vmatpush.msra.mxu0 0.0
    %1105 = vmatpush.msra.mxu0 0.0
    %1106 = vmatpush.msra.mxu0 0.0
    %1107 = vmatpush.msra.mxu0 0.0
    %1108 = vmatpush.msra.mxu0 0.0
    %1109 = vmatpush.msra.mxu0 0.0
    %1110 = vmatpush.msra.mxu0 0.0
    %1111 = vmatpush.msra.mxu0 0.0
    %1112 = vmatpush.msra.mxu0 0.0
    %1113 = vmatpush.msra.mxu0 0.0
    %1114 = vmatpush.msra.mxu0 0.0
    %1115 = vmatpush.msra.mxu0 0.0
    %1116 = vmatpush.msra.mxu0 0.0
    %1117 = vmatpush.msra.mxu0 %v1097
    %1118 = vmatmul.f32.gmra.mxu0 %v1100
    %v1119 = vpop.f32.mrf.mxu0
    %v1120 = vadd.f32 0.0, %v1119
    %1121 = vdwg.mxu0
    %v1123 = vsel %vm900, %v890, 0
    %v1126 = vsel %vm900, %v891, 0
    %1128 = vmatpush.msra.mxu0 0.0
    %1129 = vmatpush.msra.mxu0 0.0
    %1130 = vmatpush.msra.mxu0 0.0
    %1131 = vmatpush.msra.mxu0 0.0
    %1132 = vmatpush.msra.mxu0 0.0
    %1133 = vmatpush.msra.mxu0 0.0
    %1134 = vmatpush.msra.mxu0 0.0
    %1135 = vmatpush.msra.mxu0 0.0
    %1136 = vmatpush.msra.mxu0 0.0
    %1137 = vmatpush.msra.mxu0 0.0
    %1138 = vmatpush.msra.mxu0 0.0
    %1139 = vmatpush.msra.mxu0 0.0
    %1140 = vmatpush.msra.mxu0 0.0
    %1141 = vmatpush.msra.mxu0 0.0
    %1142 = vmatpush.msra.mxu0 0.0
    %1143 = vmatpush.msra.mxu0 %v956
    %1144 = vmatmul.f32.gmra.mxu0 %v1123
    %v1145 = vpop.f32.mrf.mxu0
    %v1146 = vadd.f32 0.0, %v1145
    %1147 = vmatmul.f32.gmra.mxu0 %v1126
    %v1148 = vpop.f32.mrf.mxu0
    %v1149 = vadd.f32 0.0, %v1148
    %1150 = vdwg.mxu0
    %1151 = vmatpush.msra.mxu0 0.0
    %1152 = vmatpush.msra.mxu0 0.0
    %1153 = vmatpush.msra.mxu0 0.0
    %1154 = vmatpush.msra.mxu0 0.0
    %1155 = vmatpush.msra.mxu0 0.0
    %1156 = vmatpush.msra.mxu0 0.0
    %1157 = vmatpush.msra.mxu0 0.0
    %1158 = vmatpush.msra.mxu0 0.0
    %1159 = vmatpush.msra.mxu0 0.0
    %1160 = vmatpush.msra.mxu0 0.0
    %1161 = vmatpush.msra.mxu0 0.0
    %1162 = vmatpush.msra.mxu0 0.0
    %1163 = vmatpush.msra.mxu0 0.0
    %1164 = vmatpush.msra.mxu0 0.0
    %1165 = vmatpush.msra.mxu0 0.0
    %1166 = vmatpush.msra.mxu0 %v1097
    %1167 = vmatmul.f32.gmra.mxu0 %v1123
    %v1168 = vpop.f32.mrf.mxu0
    %v1169 = vadd.f32 0.0, %v1168
    %1170 = vmatmul.f32.gmra.mxu0 %v1126
    %v1171 = vpop.f32.mrf.mxu0
    %v1172 = vadd.f32 0.0, %v1171
    %1173 = vdwg.mxu0
    %v1174 = vsub.f32 %v888, %v1169
    %v1175 = vsub.f32 %v889, %v1172
    %v1176 = vmul.f32 %v1174, %v1174
    %v1177 = vmul.f32 %v1175, %v1175
    %vm1178 = vcmask 23552
    %v1179 = vsel %vm1178, %v1176, 0.0
    %1180 = vadd.xlane.f32.xlu0 %v1179
    %v1181 = vpop.xlane.xlu0 %1180
    %v1182 = vsel %vm1178, %v1177, 0.0
    %1183 = vadd.xlane.f32.xlu0 %v1182
    %v1184 = vpop.xlane.xlu0 %1183
    %v1186 = vsel %vm1075, %v1146, 0
    %v1189 = vsel %vm1075, %v1149, 0
    %1191 = vmatpush.msra.mxu0 0.0
    %1192 = vmatpush.msra.mxu0 0.0
    %1193 = vmatpush.msra.mxu0 0.0
    %1194 = vmatpush.msra.mxu0 0.0
    %1195 = vmatpush.msra.mxu0 0.0
    %1196 = vmatpush.msra.mxu0 0.0
    %1197 = vmatpush.msra.mxu0 0.0
    %1198 = vmatpush.msra.mxu0 0.0
    %1199 = vmatpush.msra.mxu0 0.0
    %1200 = vmatpush.msra.mxu0 0.0
    %1201 = vmatpush.msra.mxu0 0.0
    %1202 = vmatpush.msra.mxu0 0.0
    %1203 = vmatpush.msra.mxu0 0.0
    %1204 = vmatpush.msra.mxu0 0.0
    %1205 = vmatpush.msra.mxu0 %v1000
    %1206 = vmatpush.msra.mxu0 %v999
    %1207 = vmatmul.f32.gmra.mxu0 %v1186
    %v1208 = vpop.f32.mrf.mxu0
    %v1209 = vadd.f32 0.0, %v1208
    %1210 = vmatmul.f32.gmra.mxu0 %v1189
    %v1211 = vpop.f32.mrf.mxu0
    %v1212 = vadd.f32 0.0, %v1211
    %1213 = vdwg.mxu0
    %v1215 = vsel %vm1075, %v925, 0
    %v1218 = vsel %vm1075, %v928, 0
    %1220 = vmatpush.msra.mxu0 0.0
    %1221 = vmatpush.msra.mxu0 0.0
    %1222 = vmatpush.msra.mxu0 0.0
    %1223 = vmatpush.msra.mxu0 0.0
    %1224 = vmatpush.msra.mxu0 0.0
    %1225 = vmatpush.msra.mxu0 0.0
    %1226 = vmatpush.msra.mxu0 0.0
    %1227 = vmatpush.msra.mxu0 0.0
    %1228 = vmatpush.msra.mxu0 0.0
    %1229 = vmatpush.msra.mxu0 0.0
    %1230 = vmatpush.msra.mxu0 0.0
    %1231 = vmatpush.msra.mxu0 0.0
    %1232 = vmatpush.msra.mxu0 0.0
    %1233 = vmatpush.msra.mxu0 0.0
    %1234 = vmatpush.msra.mxu0 %v1003
    %1235 = vmatpush.msra.mxu0 %v1002
    %1236 = vmatmul.f32.gmra.mxu0 %v1215
    %v1237 = vpop.f32.mrf.mxu0
    %v1238 = vadd.f32 %v1209, %v1237
    %1239 = vmatmul.f32.gmra.mxu0 %v1218
    %v1240 = vpop.f32.mrf.mxu0
    %v1241 = vadd.f32 %v1212, %v1240
    %1242 = vdwg.mxu0
    %v1244 = vperm.slane %v1001, 0
    %v1246 = vmul.f32 %v1181, %v1244
    %v1247 = vmul.f32 %v1184, %v1244
    %v1248 = vadd.f32 %v1238, %v1246
    %v1249 = vadd.f32 %v1241, %v1247
    %v1251 = vperm.slane %v998, 0
    %v1253 = vadd.f32 %v1248, %v1251
    %v1254 = vadd.f32 %v1249, %v1251
    %v1255 = vmax.f32 %v1253, 0.0
    %v1256 = vmax.f32 %v1254, 0.0
    %v1258 = vperm.slane %v1004, 0
    %vm1260 = vcmask 261120
    %v1262 = vsel %vm1260, %v1255, 0
    %v1265 = vsel %vm1260, %v1256, 0
    %1267 = vmatpush.msra.mxu0 0.0
    %1268 = vmatpush.msra.mxu0 0.0
    %1269 = vmatpush.msra.mxu0 0.0
    %1270 = vmatpush.msra.mxu0 0.0
    %1271 = vmatpush.msra.mxu0 0.0
    %1272 = vmatpush.msra.mxu0 0.0
    %1273 = vmatpush.msra.mxu0 0.0
    %1274 = vmatpush.msra.mxu0 0.0
    %1275 = vmatpush.msra.mxu0 0.0
    %1276 = vmatpush.msra.mxu0 0.0
    %1277 = vmatpush.msra.mxu0 0.0
    %1278 = vmatpush.msra.mxu0 0.0
    %1279 = vmatpush.msra.mxu0 %v1008
    %1280 = vmatpush.msra.mxu0 %v1007
    %1281 = vmatpush.msra.mxu0 %v1006
    %1282 = vmatpush.msra.mxu0 %v1005
    %1283 = vmatmul.f32.gmra.mxu0 %v1262
    %v1284 = vpop.f32.mrf.mxu0
    %v1285 = vadd.f32 %v1258, %v1284
    %1286 = vmatmul.f32.gmra.mxu0 %v1265
    %v1287 = vpop.f32.mrf.mxu0
    %v1288 = vadd.f32 %v1258, %v1287
    %1289 = vdwg.mxu0
    %v1290 = vmax.f32 %v1285, 0.0
    %v1291 = vmax.f32 %v1288, 0.0
    %v1293 = vsel %vm1260, %v1290, 0
    %v1296 = vsel %vm1260, %v1291, 0
    %1298 = vmatpush.msra.mxu0 0.0
    %1299 = vmatpush.msra.mxu0 0.0
    %1300 = vmatpush.msra.mxu0 0.0
    %1301 = vmatpush.msra.mxu0 0.0
    %1302 = vmatpush.msra.mxu0 0.0
    %1303 = vmatpush.msra.mxu0 0.0
    %1304 = vmatpush.msra.mxu0 0.0
    %1305 = vmatpush.msra.mxu0 0.0
    %1306 = vmatpush.msra.mxu0 0.0
    %1307 = vmatpush.msra.mxu0 0.0
    %1308 = vmatpush.msra.mxu0 0.0
    %1309 = vmatpush.msra.mxu0 0.0
    %1310 = vmatpush.msra.mxu0 %v990
    %1311 = vmatpush.msra.mxu0 %v989
    %1312 = vmatpush.msra.mxu0 %v988
    %1313 = vmatpush.msra.mxu0 %v987
    %1314 = vmatmul.f32.gmra.mxu0 %v1293
    %v1315 = vpop.f32.mrf.mxu0
    %v1316 = vadd.f32 0.0, %v1315
    %1317 = vmatmul.f32.gmra.mxu0 %v1296
    %v1318 = vpop.f32.mrf.mxu0
    %v1319 = vadd.f32 0.0, %v1318
    %1320 = vdwg.mxu0
    %1321 = vmatpush.msra.mxu0 0.0
    %1322 = vmatpush.msra.mxu0 0.0
    %1323 = vmatpush.msra.mxu0 0.0
    %1324 = vmatpush.msra.mxu0 0.0
    %1325 = vmatpush.msra.mxu0 0.0
    %1326 = vmatpush.msra.mxu0 0.0
    %1327 = vmatpush.msra.mxu0 0.0
    %1328 = vmatpush.msra.mxu0 0.0
    %1329 = vmatpush.msra.mxu0 0.0
    %1330 = vmatpush.msra.mxu0 0.0
    %1331 = vmatpush.msra.mxu0 0.0
    %1332 = vmatpush.msra.mxu0 0.0
    %1333 = vmatpush.msra.mxu0 0.0
    %1334 = vmatpush.msra.mxu0 0.0
    %1335 = vmatpush.msra.mxu0 %v992
    %1336 = vmatpush.msra.mxu0 %v991
    %1337 = vmatmul.f32.gmra.mxu0 %v1215
    %v1338 = vpop.f32.mrf.mxu0
    %v1339 = vadd.f32 %v1316, %v1338
    %1340 = vmatmul.f32.gmra.mxu0 %v1218
    %v1341 = vpop.f32.mrf.mxu0
    %v1342 = vadd.f32 %v1319, %v1341
    %1343 = vdwg.mxu0
    %v1345 = vperm.slane %v986, 0
    %v1347 = vadd.f32 %v1339, %v1345
    %v1348 = vadd.f32 %v1342, %v1345
    %v1349 = vmax.f32 %v1347, 0.0
    %v1350 = vmax.f32 %v1348, 0.0
    %v1352 = vsel %vm1260, %v1349, 0
    %v1355 = vsel %vm1260, %v1350, 0
    %1357 = vmatpush.msra.mxu0 0.0
    %1358 = vmatpush.msra.mxu0 0.0
    %1359 = vmatpush.msra.mxu0 0.0
    %1360 = vmatpush.msra.mxu0 0.0
    %1361 = vmatpush.msra.mxu0 0.0
    %1362 = vmatpush.msra.mxu0 0.0
    %1363 = vmatpush.msra.mxu0 0.0
    %1364 = vmatpush.msra.mxu0 0.0
    %1365 = vmatpush.msra.mxu0 0.0
    %1366 = vmatpush.msra.mxu0 0.0
    %1367 = vmatpush.msra.mxu0 0.0
    %1368 = vmatpush.msra.mxu0 0.0
    %1369 = vmatpush.msra.mxu0 %v997
    %1370 = vmatpush.msra.mxu0 %v996
    %1371 = vmatpush.msra.mxu0 %v995
    %1372 = vmatpush.msra.mxu0 %v994
    %1373 = vmatmul.f32.gmra.mxu0 %v1352
    %v1374 = vpop.f32.mrf.mxu0
    %v1375 = vadd.f32 0.0, %v1374
    %1376 = vmatmul.f32.gmra.mxu0 %v1355
    %v1377 = vpop.f32.mrf.mxu0
    %v1378 = vadd.f32 0.0, %v1377
    %1379 = vdwg.mxu0
    %v1380 = vadd.f32 %v925, %v1375
    %v1381 = vadd.f32 %v928, %v1378
    %v1383 = vperm.slane %v993, 0
    %v1385 = vadd.f32 %v1380, %v1383
    %v1386 = vadd.f32 %v1381, %v1383
    %v1388 = vperm.slane %v1009, 0
    %1390 = vmatpush.msra.mxu0 0.0
    %1391 = vmatpush.msra.mxu0 0.0
    %1392 = vmatpush.msra.mxu0 0.0
    %1393 = vmatpush.msra.mxu0 0.0
    %1394 = vmatpush.msra.mxu0 0.0
    %1395 = vmatpush.msra.mxu0 0.0
    %1396 = vmatpush.msra.mxu0 0.0
    %1397 = vmatpush.msra.mxu0 0.0
    %1398 = vmatpush.msra.mxu0 0.0
    %1399 = vmatpush.msra.mxu0 0.0
    %1400 = vmatpush.msra.mxu0 0.0
    %1401 = vmatpush.msra.mxu0 0.0
    %1402 = vmatpush.msra.mxu0 %v1013
    %1403 = vmatpush.msra.mxu0 %v1012
    %1404 = vmatpush.msra.mxu0 %v1011
    %1405 = vmatpush.msra.mxu0 %v1010
    %1406 = vmatmul.f32.gmra.mxu0 %v1293
    %v1407 = vpop.f32.mrf.mxu0
    %v1408 = vadd.f32 %v1388, %v1407
    %1409 = vmatmul.f32.gmra.mxu0 %v1296
    %v1410 = vpop.f32.mrf.mxu0
    %v1411 = vadd.f32 %v1388, %v1410
    %1412 = vdwg.mxu0
    %1414 = vset.pattern.permute.xlu0 0
    %1415 = vperm.xlu0 %1414, %v1408
    %v1416 = vpop.permute.xlu0 %1415
    %1419 = vset.pattern.permute.xlu0 0
    %1420 = vperm.xlu0 %1419, %v1411
    %v1421 = vpop.permute.xlu0 %1420
    %v1423 = vmul.f32 %v1174, %v1416
    %v1424 = vmul.f32 %v1175, %v1421
    %v1425 = vadd.f32 %v888, %v1423
    %v1426 = vadd.f32 %v889, %v1424
    %vm1427 = vcmask 31744
    %v1429 = vsel %vm1427, %v893, 0
    %vm1431 = vcmask 1043456
    %v1433 = vsel %vm1431, %v984, 0
    %1435 = vmatpush.msra.mxu0 0.0
    %1436 = vmatpush.msra.mxu0 0.0
    %1437 = vmatpush.msra.mxu0 0.0
    %1438 = vmatpush.msra.mxu0 0.0
    %1439 = vmatpush.msra.mxu0 0.0
    %1440 = vmatpush.msra.mxu0 0.0
    %1441 = vmatpush.msra.mxu0 0.0
    %1442 = vmatpush.msra.mxu0 0.0
    %1443 = vmatpush.msra.mxu0 0.0
    %1444 = vmatpush.msra.mxu0 0.0
    %1445 = vmatpush.msra.mxu0 0.0
    %1446 = vmatpush.msra.mxu0 0.0
    %1447 = vmatpush.msra.mxu0 0.0
    %1448 = vmatpush.msra.mxu0 0.0
    %1449 = vmatpush.msra.mxu0 0.0
    %1450 = vmatpush.msra.mxu0 %v1433
    %1451 = vmatmul.f32.gmra.mxu0 %v1429
    %v1452 = vpop.f32.mrf.mxu0
    %v1453 = vadd.f32 0.0, %v1452
    %1454 = vdwg.mxu0
    %v1456 = vsel %vm1431, %v1120, 0
    %1458 = vmatpush.msra.mxu0 0.0
    %1459 = vmatpush.msra.mxu0 0.0
    %1460 = vmatpush.msra.mxu0 0.0
    %1461 = vmatpush.msra.mxu0 0.0
    %1462 = vmatpush.msra.mxu0 0.0
    %1463 = vmatpush.msra.mxu0 0.0
    %1464 = vmatpush.msra.mxu0 0.0
    %1465 = vmatpush.msra.mxu0 0.0
    %1466 = vmatpush.msra.mxu0 0.0
    %1467 = vmatpush.msra.mxu0 0.0
    %1468 = vmatpush.msra.mxu0 0.0
    %1469 = vmatpush.msra.mxu0 0.0
    %1470 = vmatpush.msra.mxu0 0.0
    %1471 = vmatpush.msra.mxu0 0.0
    %1472 = vmatpush.msra.mxu0 0.0
    %1473 = vmatpush.msra.mxu0 %v1456
    %1474 = vmatmul.f32.gmra.mxu0 %v1429
    %v1475 = vpop.f32.mrf.mxu0
    %v1476 = vadd.f32 0.0, %v1475
    %1477 = vdwg.mxu0
    %v1478 = vsub.f32 %v1097, %v1476
    %v1479 = vmul.f32 %v1478, %v1478
    %v1480 = vsel %vm1178, %v1479, 0.0
    %1481 = vadd.xlane.f32.xlu0 %v1480
    %v1482 = vpop.xlane.xlu0 %1481
    %v1484 = vsel %vm1075, %v1453, 0
    %1486 = vmatpush.msra.mxu0 0.0
    %1487 = vmatpush.msra.mxu0 0.0
    %1488 = vmatpush.msra.mxu0 0.0
    %1489 = vmatpush.msra.mxu0 0.0
    %1490 = vmatpush.msra.mxu0 0.0
    %1491 = vmatpush.msra.mxu0 0.0
    %1492 = vmatpush.msra.mxu0 0.0
    %1493 = vmatpush.msra.mxu0 0.0
    %1494 = vmatpush.msra.mxu0 0.0
    %1495 = vmatpush.msra.mxu0 0.0
    %1496 = vmatpush.msra.mxu0 0.0
    %1497 = vmatpush.msra.mxu0 0.0
    %1498 = vmatpush.msra.mxu0 0.0
    %1499 = vmatpush.msra.mxu0 0.0
    %1500 = vmatpush.msra.mxu0 %v1043
    %1501 = vmatpush.msra.mxu0 %v1042
    %1502 = vmatmul.f32.gmra.mxu0 %v1484
    %v1503 = vpop.f32.mrf.mxu0
    %v1504 = vadd.f32 0.0, %v1503
    %1505 = vdwg.mxu0
    %v1507 = vsel %vm1075, %v956, 0
    %1509 = vmatpush.msra.mxu0 0.0
    %1510 = vmatpush.msra.mxu0 0.0
    %1511 = vmatpush.msra.mxu0 0.0
    %1512 = vmatpush.msra.mxu0 0.0
    %1513 = vmatpush.msra.mxu0 0.0
    %1514 = vmatpush.msra.mxu0 0.0
    %1515 = vmatpush.msra.mxu0 0.0
    %1516 = vmatpush.msra.mxu0 0.0
    %1517 = vmatpush.msra.mxu0 0.0
    %1518 = vmatpush.msra.mxu0 0.0
    %1519 = vmatpush.msra.mxu0 0.0
    %1520 = vmatpush.msra.mxu0 0.0
    %1521 = vmatpush.msra.mxu0 0.0
    %1522 = vmatpush.msra.mxu0 0.0
    %1523 = vmatpush.msra.mxu0 %v1046
    %1524 = vmatpush.msra.mxu0 %v1045
    %1525 = vmatmul.f32.gmra.mxu0 %v1507
    %v1526 = vpop.f32.mrf.mxu0
    %v1527 = vadd.f32 %v1504, %v1526
    %1528 = vdwg.mxu0
    %v1530 = vperm.slane %v1044, 0
    %v1532 = vmul.f32 %v1482, %v1530
    %v1533 = vadd.f32 %v1527, %v1532
    %v1535 = vperm.slane %v1041, 0
    %v1537 = vadd.f32 %v1533, %v1535
    %v1538 = vmax.f32 %v1537, 0.0
    %v1540 = vperm.slane %v1047, 0
    %v1543 = vsel %vm1260, %v1538, 0
    %1545 = vmatpush.msra.mxu0 0.0
    %1546 = vmatpush.msra.mxu0 0.0
    %1547 = vmatpush.msra.mxu0 0.0
    %1548 = vmatpush.msra.mxu0 0.0
    %1549 = vmatpush.msra.mxu0 0.0
    %1550 = vmatpush.msra.mxu0 0.0
    %1551 = vmatpush.msra.mxu0 0.0
    %1552 = vmatpush.msra.mxu0 0.0
    %1553 = vmatpush.msra.mxu0 0.0
    %1554 = vmatpush.msra.mxu0 0.0
    %1555 = vmatpush.msra.mxu0 0.0
    %1556 = vmatpush.msra.mxu0 0.0
    %1557 = vmatpush.msra.mxu0 %v1051
    %1558 = vmatpush.msra.mxu0 %v1050
    %1559 = vmatpush.msra.mxu0 %v1049
    %1560 = vmatpush.msra.mxu0 %v1048
    %1561 = vmatmul.f32.gmra.mxu0 %v1543
    %v1562 = vpop.f32.mrf.mxu0
    %v1563 = vadd.f32 %v1540, %v1562
    %1564 = vdwg.mxu0
    %v1565 = vmax.f32 %v1563, 0.0
    %1566 = vmatpush.msra.mxu0 0.0
    %1567 = vmatpush.msra.mxu0 0.0
    %1568 = vmatpush.msra.mxu0 0.0
    %1569 = vmatpush.msra.mxu0 0.0
    %1570 = vmatpush.msra.mxu0 0.0
    %1571 = vmatpush.msra.mxu0 0.0
    %1572 = vmatpush.msra.mxu0 0.0
    %1573 = vmatpush.msra.mxu0 0.0
    %1574 = vmatpush.msra.mxu0 0.0
    %1575 = vmatpush.msra.mxu0 0.0
    %1576 = vmatpush.msra.mxu0 0.0
    %1577 = vmatpush.msra.mxu0 0.0
    %1578 = vmatpush.msra.mxu0 0.0
    %1579 = vmatpush.msra.mxu0 0.0
    %1580 = vmatpush.msra.mxu0 %v928
    %1581 = vmatpush.msra.mxu0 %v925
    %1582 = vmatmul.f32.gmra.mxu0 %v1077
    %v1583 = vpop.f32.mrf.mxu0
    %v1584 = vadd.f32 0.0, %v1583
    %1585 = vdwg.mxu0
    %v1586 = vsub.f32 %v1097, %v1097
    %v1587 = vmul.f32 %v1586, %v1586
    %v1588 = vsel %vm1178, %v1587, 0.0
    %1589 = vadd.xlane.f32.xlu0 %v1588
    %v1590 = vpop.xlane.xlu0 %1589
    %v1592 = vsel %vm1075, %v1584, 0
    %1594 = vmatpush.msra.mxu0 0.0
    %1595 = vmatpush.msra.mxu0 0.0
    %1596 = vmatpush.msra.mxu0 0.0
    %1597 = vmatpush.msra.mxu0 0.0
    %1598 = vmatpush.msra.mxu0 0.0
    %1599 = vmatpush.msra.mxu0 0.0
    %1600 = vmatpush.msra.mxu0 0.0
    %1601 = vmatpush.msra.mxu0 0.0
    %1602 = vmatpush.msra.mxu0 0.0
    %1603 = vmatpush.msra.mxu0 0.0
    %1604 = vmatpush.msra.mxu0 0.0
    %1605 = vmatpush.msra.mxu0 0.0
    %1606 = vmatpush.msra.mxu0 0.0
    %1607 = vmatpush.msra.mxu0 0.0
    %1608 = vmatpush.msra.mxu0 %v1016
    %1609 = vmatpush.msra.mxu0 %v1015
    %1610 = vmatmul.f32.gmra.mxu0 %v1592
    %v1611 = vpop.f32.mrf.mxu0
    %v1612 = vadd.f32 0.0, %v1611
    %1613 = vdwg.mxu0
    %1614 = vmatpush.msra.mxu0 0.0
    %1615 = vmatpush.msra.mxu0 0.0
    %1616 = vmatpush.msra.mxu0 0.0
    %1617 = vmatpush.msra.mxu0 0.0
    %1618 = vmatpush.msra.mxu0 0.0
    %1619 = vmatpush.msra.mxu0 0.0
    %1620 = vmatpush.msra.mxu0 0.0
    %1621 = vmatpush.msra.mxu0 0.0
    %1622 = vmatpush.msra.mxu0 0.0
    %1623 = vmatpush.msra.mxu0 0.0
    %1624 = vmatpush.msra.mxu0 0.0
    %1625 = vmatpush.msra.mxu0 0.0
    %1626 = vmatpush.msra.mxu0 0.0
    %1627 = vmatpush.msra.mxu0 0.0
    %1628 = vmatpush.msra.mxu0 %v1019
    %1629 = vmatpush.msra.mxu0 %v1018
    %1630 = vmatmul.f32.gmra.mxu0 %v1507
    %v1631 = vpop.f32.mrf.mxu0
    %v1632 = vadd.f32 %v1612, %v1631
    %1633 = vdwg.mxu0
    %v1635 = vperm.slane %v1017, 0
    %v1637 = vmul.f32 %v1590, %v1635
    %v1638 = vadd.f32 %v1632, %v1637
    %v1640 = vperm.slane %v1014, 0
    %v1642 = vadd.f32 %v1638, %v1640
    %v1643 = vmax.f32 %v1642, 0.0
    %v1645 = vperm.slane %v1020, 0
    %v1648 = vsel %vm1260, %v1643, 0
    %1650 = vmatpush.msra.mxu0 0.0
    %1651 = vmatpush.msra.mxu0 0.0
    %1652 = vmatpush.msra.mxu0 0.0
    %1653 = vmatpush.msra.mxu0 0.0
    %1654 = vmatpush.msra.mxu0 0.0
    %1655 = vmatpush.msra.mxu0 0.0
    %1656 = vmatpush.msra.mxu0 0.0
    %1657 = vmatpush.msra.mxu0 0.0
    %1658 = vmatpush.msra.mxu0 0.0
    %1659 = vmatpush.msra.mxu0 0.0
    %1660 = vmatpush.msra.mxu0 0.0
    %1661 = vmatpush.msra.mxu0 0.0
    %1662 = vmatpush.msra.mxu0 %v1024
    %1663 = vmatpush.msra.mxu0 %v1023
    %1664 = vmatpush.msra.mxu0 %v1022
    %1665 = vmatpush.msra.mxu0 %v1021
    %1666 = vmatmul.f32.gmra.mxu0 %v1648
    %v1667 = vpop.f32.mrf.mxu0
    %v1668 = vadd.f32 %v1645, %v1667
    %1669 = vdwg.mxu0
    %v1670 = vmax.f32 %v1668, 0.0
    %v1672 = vsel %vm1260, %v1565, 0
    %1674 = vmatpush.msra.mxu0 0.0
    %1675 = vmatpush.msra.mxu0 0.0
    %1676 = vmatpush.msra.mxu0 0.0
    %1677 = vmatpush.msra.mxu0 0.0
    %1678 = vmatpush.msra.mxu0 0.0
    %1679 = vmatpush.msra.mxu0 0.0
    %1680 = vmatpush.msra.mxu0 0.0
    %1681 = vmatpush.msra.mxu0 0.0
    %1682 = vmatpush.msra.mxu0 0.0
    %1683 = vmatpush.msra.mxu0 0.0
    %1684 = vmatpush.msra.mxu0 0.0
    %1685 = vmatpush.msra.mxu0 0.0
    %1686 = vmatpush.msra.mxu0 %v1033
    %1687 = vmatpush.msra.mxu0 %v1032
    %1688 = vmatpush.msra.mxu0 %v1031
    %1689 = vmatpush.msra.mxu0 %v1030
    %1690 = vmatmul.f32.gmra.mxu0 %v1672
    %v1691 = vpop.f32.mrf.mxu0
    %v1692 = vadd.f32 0.0, %v1691
    %1693 = vdwg.mxu0
    %1694 = vmatpush.msra.mxu0 0.0
    %1695 = vmatpush.msra.mxu0 0.0
    %1696 = vmatpush.msra.mxu0 0.0
    %1697 = vmatpush.msra.mxu0 0.0
    %1698 = vmatpush.msra.mxu0 0.0
    %1699 = vmatpush.msra.mxu0 0.0
    %1700 = vmatpush.msra.mxu0 0.0
    %1701 = vmatpush.msra.mxu0 0.0
    %1702 = vmatpush.msra.mxu0 0.0
    %1703 = vmatpush.msra.mxu0 0.0
    %1704 = vmatpush.msra.mxu0 0.0
    %1705 = vmatpush.msra.mxu0 0.0
    %1706 = vmatpush.msra.mxu0 0.0
    %1707 = vmatpush.msra.mxu0 0.0
    %1708 = vmatpush.msra.mxu0 %v1035
    %1709 = vmatpush.msra.mxu0 %v1034
    %1710 = vmatmul.f32.gmra.mxu0 %v1507
    %v1711 = vpop.f32.mrf.mxu0
    %v1712 = vadd.f32 %v1692, %v1711
    %1713 = vdwg.mxu0
    %v1715 = vsel %vm1260, %v1670, 0
    %1717 = vmatpush.msra.mxu0 0.0
    %1718 = vmatpush.msra.mxu0 0.0
    %1719 = vmatpush.msra.mxu0 0.0
    %1720 = vmatpush.msra.mxu0 0.0
    %1721 = vmatpush.msra.mxu0 0.0
    %1722 = vmatpush.msra.mxu0 0.0
    %1723 = vmatpush.msra.mxu0 0.0
    %1724 = vmatpush.msra.mxu0 0.0
    %1725 = vmatpush.msra.mxu0 0.0
    %1726 = vmatpush.msra.mxu0 0.0
    %1727 = vmatpush.msra.mxu0 0.0
    %1728 = vmatpush.msra.mxu0 0.0
    %1729 = vmatpush.msra.mxu0 %v1029
    %1730 = vmatpush.msra.mxu0 %v1028
    %1731 = vmatpush.msra.mxu0 %v1027
    %1732 = vmatpush.msra.mxu0 %v1026
    %1733 = vmatmul.f32.gmra.mxu0 %v1715
    %v1734 = vpop.f32.mrf.mxu0
    %v1735 = vadd.f32 0.0, %v1734
    %1736 = vdwg.mxu0
    %v1737 = vadd.f32 %v1712, %v1735
    %v1739 = vperm.slane %v1025, 0
    %v1741 = vadd.f32 %v1737, %v1739
    %v1742 = vmax.f32 %v1741, 0.0
    %v1744 = vsel %vm1260, %v1742, 0
    %1746 = vmatpush.msra.mxu0 0.0
    %1747 = vmatpush.msra.mxu0 0.0
    %1748 = vmatpush.msra.mxu0 0.0
    %1749 = vmatpush.msra.mxu0 0.0
    %1750 = vmatpush.msra.mxu0 0.0
    %1751 = vmatpush.msra.mxu0 0.0
    %1752 = vmatpush.msra.mxu0 0.0
    %1753 = vmatpush.msra.mxu0 0.0
    %1754 = vmatpush.msra.mxu0 0.0
    %1755 = vmatpush.msra.mxu0 0.0
    %1756 = vmatpush.msra.mxu0 0.0
    %1757 = vmatpush.msra.mxu0 0.0
    %1758 = vmatpush.msra.mxu0 %v1040
    %1759 = vmatpush.msra.mxu0 %v1039
    %1760 = vmatpush.msra.mxu0 %v1038
    %1761 = vmatpush.msra.mxu0 %v1037
    %1762 = vmatmul.f32.gmra.mxu0 %v1744
    %v1763 = vpop.f32.mrf.mxu0
    %v1764 = vadd.f32 0.0, %v1763
    %1765 = vdwg.mxu0
    %v1766 = vadd.f32 %v956, %v1764
    %v1768 = vperm.slane %v1036, 0
    %v1770 = vadd.f32 %v1766, %v1768
    %1771 = vmatpush.msra.mxu0 0.0
    %1772 = vmatpush.msra.mxu0 0.0
    %1773 = vmatpush.msra.mxu0 0.0
    %1774 = vmatpush.msra.mxu0 0.0
    %1775 = vmatpush.msra.mxu0 0.0
    %1776 = vmatpush.msra.mxu0 0.0
    %1777 = vmatpush.msra.mxu0 0.0
    %1778 = vmatpush.msra.mxu0 0.0
    %1779 = vmatpush.msra.mxu0 0.0
    %1780 = vmatpush.msra.mxu0 0.0
    %1781 = vmatpush.msra.mxu0 0.0
    %1782 = vmatpush.msra.mxu0 0.0
    %1783 = vmatpush.msra.mxu0 0.0
    %1784 = vmatpush.msra.mxu0 0.0
    %1785 = vmatpush.msra.mxu0 0.0
    %1786 = vmatpush.msra.mxu0 %v956
    %1787 = vmatmul.f32.gmra.mxu0 %v1100
    %v1788 = vpop.f32.mrf.mxu0
    %v1789 = vadd.f32 0.0, %v1788
    %1790 = vdwg.mxu0
    %v1791 = vsub.f32 %v1120, %v1120
    %v1792 = vmul.f32 %v1791, %v1791
    %vm1793 = vcmask 19456
    %v1794 = vsel %vm1793, %v1792, 0.0
    %1795 = vadd.xlane.f32.xlu0 %v1794
    %v1796 = vpop.xlane.xlu0 %1795
    %v1798 = vsel %vm1075, %v1789, 0
    %1800 = vmatpush.msra.mxu0 0.0
    %1801 = vmatpush.msra.mxu0 0.0
    %1802 = vmatpush.msra.mxu0 0.0
    %1803 = vmatpush.msra.mxu0 0.0
    %1804 = vmatpush.msra.mxu0 0.0
    %1805 = vmatpush.msra.mxu0 0.0
    %1806 = vmatpush.msra.mxu0 0.0
    %1807 = vmatpush.msra.mxu0 0.0
    %1808 = vmatpush.msra.mxu0 0.0
    %1809 = vmatpush.msra.mxu0 0.0
    %1810 = vmatpush.msra.mxu0 0.0
    %1811 = vmatpush.msra.mxu0 0.0
    %1812 = vmatpush.msra.mxu0 0.0
    %1813 = vmatpush.msra.mxu0 0.0
    %1814 = vmatpush.msra.mxu0 %v1054
    %1815 = vmatpush.msra.mxu0 %v1053
    %1816 = vmatmul.f32.gmra.mxu0 %v1798
    %v1817 = vpop.f32.mrf.mxu0
    %v1818 = vadd.f32 0.0, %v1817
    %1819 = vdwg.mxu0
    %v1820 = vsel %vm1075, %v984, 0
    %1822 = vmatpush.msra.mxu0 0.0
    %1823 = vmatpush.msra.mxu0 0.0
    %1824 = vmatpush.msra.mxu0 0.0
    %1825 = vmatpush.msra.mxu0 0.0
    %1826 = vmatpush.msra.mxu0 0.0
    %1827 = vmatpush.msra.mxu0 0.0
    %1828 = vmatpush.msra.mxu0 0.0
    %1829 = vmatpush.msra.mxu0 0.0
    %1830 = vmatpush.msra.mxu0 0.0
    %1831 = vmatpush.msra.mxu0 0.0
    %1832 = vmatpush.msra.mxu0 0.0
    %1833 = vmatpush.msra.mxu0 0.0
    %1834 = vmatpush.msra.mxu0 0.0
    %1835 = vmatpush.msra.mxu0 0.0
    %1836 = vmatpush.msra.mxu0 %v1057
    %1837 = vmatpush.msra.mxu0 %v1056
    %1838 = vmatmul.f32.gmra.mxu0 %v1820
    %v1839 = vpop.f32.mrf.mxu0
    %v1840 = vadd.f32 %v1818, %v1839
    %1841 = vdwg.mxu0
    %v1843 = vperm.slane %v1055, 0
    %v1845 = vmul.f32 %v1796, %v1843
    %v1846 = vadd.f32 %v1840, %v1845
    %v1848 = vperm.slane %v1052, 0
    %v1850 = vadd.f32 %v1846, %v1848
    %v1851 = vmax.f32 %v1850, 0.0
    %v1853 = vperm.slane %v1058, 0
    %v1856 = vsel %vm1260, %v1851, 0
    %1858 = vmatpush.msra.mxu0 0.0
    %1859 = vmatpush.msra.mxu0 0.0
    %1860 = vmatpush.msra.mxu0 0.0
    %1861 = vmatpush.msra.mxu0 0.0
    %1862 = vmatpush.msra.mxu0 0.0
    %1863 = vmatpush.msra.mxu0 0.0
    %1864 = vmatpush.msra.mxu0 0.0
    %1865 = vmatpush.msra.mxu0 0.0
    %1866 = vmatpush.msra.mxu0 0.0
    %1867 = vmatpush.msra.mxu0 0.0
    %1868 = vmatpush.msra.mxu0 0.0
    %1869 = vmatpush.msra.mxu0 0.0
    %1870 = vmatpush.msra.mxu0 %v1062
    %1871 = vmatpush.msra.mxu0 %v1061
    %1872 = vmatpush.msra.mxu0 %v1060
    %1873 = vmatpush.msra.mxu0 %v1059
    %1874 = vmatmul.f32.gmra.mxu0 %v1856
    %v1875 = vpop.f32.mrf.mxu0
    %v1876 = vadd.f32 %v1853, %v1875
    %1877 = vdwg.mxu0
    %v1878 = vmax.f32 %v1876, 0.0
    %v1880 = vsel %vm1260, %v1878, 0
    %1882 = vmatpush.msra.mxu0 0.0
    %1883 = vmatpush.msra.mxu0 0.0
    %1884 = vmatpush.msra.mxu0 0.0
    %1885 = vmatpush.msra.mxu0 0.0
    %1886 = vmatpush.msra.mxu0 0.0
    %1887 = vmatpush.msra.mxu0 0.0
    %1888 = vmatpush.msra.mxu0 0.0
    %1889 = vmatpush.msra.mxu0 0.0
    %1890 = vmatpush.msra.mxu0 0.0
    %1891 = vmatpush.msra.mxu0 0.0
    %1892 = vmatpush.msra.mxu0 0.0
    %1893 = vmatpush.msra.mxu0 0.0
    %1894 = vmatpush.msra.mxu0 %v1067
    %1895 = vmatpush.msra.mxu0 %v1066
    %1896 = vmatpush.msra.mxu0 %v1065
    %1897 = vmatpush.msra.mxu0 %v1064
    %1898 = vmatmul.f32.gmra.mxu0 %v1880
    %v1899 = vpop.f32.mrf.mxu0
    %v1900 = vadd.f32 0.0, %v1899
    %1901 = vdwg.mxu0
    %1902 = vmatpush.msra.mxu0 0.0
    %1903 = vmatpush.msra.mxu0 0.0
    %1904 = vmatpush.msra.mxu0 0.0
    %1905 = vmatpush.msra.mxu0 0.0
    %1906 = vmatpush.msra.mxu0 0.0
    %1907 = vmatpush.msra.mxu0 0.0
    %1908 = vmatpush.msra.mxu0 0.0
    %1909 = vmatpush.msra.mxu0 0.0
    %1910 = vmatpush.msra.mxu0 0.0
    %1911 = vmatpush.msra.mxu0 0.0
    %1912 = vmatpush.msra.mxu0 0.0
    %1913 = vmatpush.msra.mxu0 0.0
    %1914 = vmatpush.msra.mxu0 0.0
    %1915 = vmatpush.msra.mxu0 0.0
    %1916 = vmatpush.msra.mxu0 %v1069
    %1917 = vmatpush.msra.mxu0 %v1068
    %1918 = vmatmul.f32.gmra.mxu0 %v1820
    %v1919 = vpop.f32.mrf.mxu0
    %v1920 = vadd.f32 %v1900, %v1919
    %1921 = vdwg.mxu0
    %v1923 = vperm.slane %v1063, 0
    %v1925 = vadd.f32 %v1920, %v1923
    %v1926 = vmax.f32 %v1925, 0.0
    %v1928 = vsel %vm1260, %v1926, 0
    %1930 = vmatpush.msra.mxu0 0.0
    %1931 = vmatpush.msra.mxu0 0.0
    %1932 = vmatpush.msra.mxu0 0.0
    %1933 = vmatpush.msra.mxu0 0.0
    %1934 = vmatpush.msra.mxu0 0.0
    %1935 = vmatpush.msra.mxu0 0.0
    %1936 = vmatpush.msra.mxu0 0.0
    %1937 = vmatpush.msra.mxu0 0.0
    %1938 = vmatpush.msra.mxu0 0.0
    %1939 = vmatpush.msra.mxu0 0.0
    %1940 = vmatpush.msra.mxu0 0.0
    %1941 = vmatpush.msra.mxu0 0.0
    %1942 = vmatpush.msra.mxu0 %v1074
    %1943 = vmatpush.msra.mxu0 %v1073
    %1944 = vmatpush.msra.mxu0 %v1072
    %1945 = vmatpush.msra.mxu0 %v1071
    %1946 = vmatmul.f32.gmra.mxu0 %v1928
    %v1947 = vpop.f32.mrf.mxu0
    %v1948 = vadd.f32 0.0, %v1947
    %1949 = vdwg.mxu0
    %v1950 = vadd.f32 %v984, %v1948
    %v1952 = vperm.slane %v1070, 0
    %v1954 = vadd.f32 %v1950, %v1952
    %s1955 = scalar_lea.vmem [#allocation16], 1
    %v1956 = vld [vmem:[%s1955] sm:$0x1]
    %s1957 = scalar_lea.vmem [#allocation17], 32
    %v1958 = vld [vmem:[%s1957] sm:$0xff]
    %v1959 = vld [vmem:[%s1957 + $0x8] sm:$0xff]
    %v1960 = vld [vmem:[%s1957 + $0x10] sm:$0xff]
    %v1961 = vld [vmem:[%s1957 + $0x18] sm:$0xff]
    %s1962 = scalar_lea.vmem [#allocation19], 16
    %v1963 = vld [vmem:[%s1962] sm:$0xff]
    %v1964 = vld [vmem:[%s1962 + $0x8] sm:$0xff]
    %s1965 = scalar_lea.vmem [#allocation20], 1
    %v1966 = vld [vmem:[%s1965] sm:$0x1]
    %s1967 = scalar_lea.vmem [#allocation22], 32
    %v1968 = vld [vmem:[%s1967] sm:$0xff]
    %v1969 = vld [vmem:[%s1967 + $0x8] sm:$0xff]
    %v1970 = vld [vmem:[%s1967 + $0x10] sm:$0xff]
    %v1971 = vld [vmem:[%s1967 + $0x18] sm:$0xff]
    %s1972 = scalar_lea.vmem [#allocation23], 1
    %v1973 = vld [vmem:[%s1972] sm:$0x1]
    %s1974 = scalar_lea.vmem [#allocation25], 16
    %v1975 = vld [vmem:[%s1974] sm:$0xff]
    %v1976 = vld [vmem:[%s1974 + $0x8] sm:$0xff]
    %s1977 = scalar_lea.vmem [#allocation26], 1
    %v1978 = vld [vmem:[%s1977] sm:$0x1]
    %s1979 = scalar_lea.vmem [#allocation28], 16
    %v1980 = vld [vmem:[%s1979] sm:$0xff]
    %v1981 = vld [vmem:[%s1979 + $0x8] sm:$0xff]
    %s1982 = scalar_lea.vmem [#allocation29], 1
    %v1983 = vld [vmem:[%s1982] sm:$0x1]
    %s1984 = scalar_lea.vmem [#allocation31], 32
    %v1985 = vld [vmem:[%s1984] sm:$0xff]
    %v1986 = vld [vmem:[%s1984 + $0x8] sm:$0xff]
    %v1987 = vld [vmem:[%s1984 + $0x10] sm:$0xff]
    %v1988 = vld [vmem:[%s1984 + $0x18] sm:$0xff]
    %s1989 = scalar_lea.vmem [#allocation35], 1
    %v1990 = vld [vmem:[%s1989] sm:$0x1]
    %s1991 = scalar_lea.vmem [#allocation37], 16
    %v1992 = vld [vmem:[%s1991] sm:$0xff]
    %v1993 = vld [vmem:[%s1991 + $0x8] sm:$0xff]
    %s1994 = scalar_lea.vmem [#allocation38], 1
    %v1995 = vld [vmem:[%s1994] sm:$0x1]
    %s1996 = scalar_lea.vmem [#allocation40], 16
    %v1997 = vld [vmem:[%s1996] sm:$0xff]
    %v1998 = vld [vmem:[%s1996 + $0x8] sm:$0xff]
    %s1999 = scalar_lea.vmem [#allocation41], 1
    %v2000 = vld [vmem:[%s1999] sm:$0x1]
    %s2001 = scalar_lea.vmem [#allocation43], 32
    %v2002 = vld [vmem:[%s2001] sm:$0xff]
    %v2003 = vld [vmem:[%s2001 + $0x8] sm:$0xff]
    %v2004 = vld [vmem:[%s2001 + $0x10] sm:$0xff]
    %v2005 = vld [vmem:[%s2001 + $0x18] sm:$0xff]
    %s2006 = scalar_lea.vmem [#allocation44], 1
    %v2007 = vld [vmem:[%s2006] sm:$0x1]
    %s2008 = scalar_lea.vmem [#allocation46], 32
    %v2009 = vld [vmem:[%s2008] sm:$0xff]
    %v2010 = vld [vmem:[%s2008 + $0x8] sm:$0xff]
    %v2011 = vld [vmem:[%s2008 + $0x10] sm:$0xff]
    %v2012 = vld [vmem:[%s2008 + $0x18] sm:$0xff]
    %s2013 = scalar_lea.vmem [#allocation47], 32
    %v2014 = vld [vmem:[%s2013] sm:$0xff]
    %v2015 = vld [vmem:[%s2013 + $0x8] sm:$0xff]
    %v2016 = vld [vmem:[%s2013 + $0x10] sm:$0xff]
    %v2017 = vld [vmem:[%s2013 + $0x18] sm:$0xff]
    %s2018 = scalar_lea.vmem [#allocation49], 16
    %v2019 = vld [vmem:[%s2018] sm:$0xff]
    %v2020 = vld [vmem:[%s2018 + $0x8] sm:$0xff]
    %s2021 = scalar_lea.vmem [#allocation50], 1
    %v2022 = vld [vmem:[%s2021] sm:$0x1]
    %s2023 = scalar_lea.vmem [#allocation52], 32
    %v2024 = vld [vmem:[%s2023] sm:$0xff]
    %v2025 = vld [vmem:[%s2023 + $0x8] sm:$0xff]
    %v2026 = vld [vmem:[%s2023 + $0x10] sm:$0xff]
    %v2027 = vld [vmem:[%s2023 + $0x18] sm:$0xff]
    %s2028 = scalar_lea.vmem [#allocation53], 1
    %v2029 = vld [vmem:[%s2028] sm:$0x1]
    %s2030 = scalar_lea.vmem [#allocation55], 16
    %v2031 = vld [vmem:[%s2030] sm:$0xff]
    %v2032 = vld [vmem:[%s2030 + $0x8] sm:$0xff]
    %s2033 = scalar_lea.vmem %s105, 1
    %v2034 = vld [vmem:[%s2033] sm:$0x1]
    %s2035 = scalar_lea.vmem [#allocation56], 16
    %v2036 = vld [vmem:[%s2035] sm:$0xff]
    %v2037 = vld [vmem:[%s2035 + $0x8] sm:$0xff]
    %s2038 = scalar_lea.vmem %s109, 1
    %v2039 = vld [vmem:[%s2038] sm:$0x1]
    %s2040 = scalar_lea.vmem [#allocation58], 32
    %v2041 = vld [vmem:[%s2040] sm:$0xff]
    %v2042 = vld [vmem:[%s2040 + $0x8] sm:$0xff]
    %v2043 = vld [vmem:[%s2040 + $0x10] sm:$0xff]
    %v2044 = vld [vmem:[%s2040 + $0x18] sm:$0xff]
    %s2045 = scalar_lea.vmem %s113, 1
    %v2046 = vld [vmem:[%s2045] sm:$0x1]
    %s2047 = scalar_lea.vmem %s115, 16
    %v2048 = vld [vmem:[%s2047] sm:$0xff]
    %v2049 = vld [vmem:[%s2047 + $0x8] sm:$0xff]
    %s2050 = scalar_lea.vmem %s117, 1
    %v2051 = vld [vmem:[%s2050] sm:$0x1]
    %s2052 = scalar_lea.vmem %s119, 16
    %v2053 = vld [vmem:[%s2052] sm:$0xff]
    %v2054 = vld [vmem:[%s2052 + $0x8] sm:$0xff]
    %s2055 = scalar_lea.vmem %s121, 1
    %v2056 = vld [vmem:[%s2055] sm:$0x1]
    %s2057 = scalar_lea.vmem [#allocation59], 32
    %v2058 = vld [vmem:[%s2057] sm:$0xff]
    %v2059 = vld [vmem:[%s2057 + $0x8] sm:$0xff]
    %v2060 = vld [vmem:[%s2057 + $0x10] sm:$0xff]
    %v2061 = vld [vmem:[%s2057 + $0x18] sm:$0xff]
    %s2062 = scalar_lea.vmem %s125, 1
    %v2063 = vld [vmem:[%s2062] sm:$0x1]
    %s2064 = scalar_lea.vmem [#allocation61], 32
    %v2065 = vld [vmem:[%s2064] sm:$0xff]
    %v2066 = vld [vmem:[%s2064 + $0x8] sm:$0xff]
    %v2067 = vld [vmem:[%s2064 + $0x10] sm:$0xff]
    %v2068 = vld [vmem:[%s2064 + $0x18] sm:$0xff]
    %s2069 = scalar_lea.vmem %s129, 16
    %v2070 = vld [vmem:[%s2069] sm:$0xff]
    %v2071 = vld [vmem:[%s2069 + $0x8] sm:$0xff]
    %s2072 = scalar_lea.vmem %s131, 1
    %v2073 = vld [vmem:[%s2072] sm:$0x1]
    %s2074 = scalar_lea.vmem [#allocation62], 32
    %v2075 = vld [vmem:[%s2074] sm:$0xff]
    %v2076 = vld [vmem:[%s2074 + $0x8] sm:$0xff]
    %v2077 = vld [vmem:[%s2074 + $0x10] sm:$0xff]
    %v2078 = vld [vmem:[%s2074 + $0x18] sm:$0xff]
    %2079 = vmatpush.msra.mxu0 0.0
    %2080 = vmatpush.msra.mxu0 0.0
    %2081 = vmatpush.msra.mxu0 0.0
    %2082 = vmatpush.msra.mxu0 0.0
    %2083 = vmatpush.msra.mxu0 0.0
    %2084 = vmatpush.msra.mxu0 0.0
    %2085 = vmatpush.msra.mxu0 0.0
    %2086 = vmatpush.msra.mxu0 0.0
    %2087 = vmatpush.msra.mxu0 0.0
    %2088 = vmatpush.msra.mxu0 0.0
    %2089 = vmatpush.msra.mxu0 0.0
    %2090 = vmatpush.msra.mxu0 0.0
    %2091 = vmatpush.msra.mxu0 0.0
    %2092 = vmatpush.msra.mxu0 0.0
    %2093 = vmatpush.msra.mxu0 %v1426
    %2094 = vmatpush.msra.mxu0 %v1425
    %2095 = vmatmul.f32.gmra.mxu0 %v1077
    %v2096 = vpop.f32.mrf.mxu0
    %v2097 = vadd.f32 0.0, %v2096
    %2098 = vdwg.mxu0
    %2099 = vmatpush.msra.mxu0 0.0
    %2100 = vmatpush.msra.mxu0 0.0
    %2101 = vmatpush.msra.mxu0 0.0
    %2102 = vmatpush.msra.mxu0 0.0
    %2103 = vmatpush.msra.mxu0 0.0
    %2104 = vmatpush.msra.mxu0 0.0
    %2105 = vmatpush.msra.mxu0 0.0
    %2106 = vmatpush.msra.mxu0 0.0
    %2107 = vmatpush.msra.mxu0 0.0
    %2108 = vmatpush.msra.mxu0 0.0
    %2109 = vmatpush.msra.mxu0 0.0
    %2110 = vmatpush.msra.mxu0 0.0
    %2111 = vmatpush.msra.mxu0 0.0
    %2112 = vmatpush.msra.mxu0 0.0
    %2113 = vmatpush.msra.mxu0 0.0
    %2114 = vmatpush.msra.mxu0 %v2097
    %2115 = vmatmul.f32.gmra.mxu0 %v1100
    %v2116 = vpop.f32.mrf.mxu0
    %v2117 = vadd.f32 0.0, %v2116
    %2118 = vdwg.mxu0
    %2119 = vmatpush.msra.mxu0 0.0
    %2120 = vmatpush.msra.mxu0 0.0
    %2121 = vmatpush.msra.mxu0 0.0
    %2122 = vmatpush.msra.mxu0 0.0
    %2123 = vmatpush.msra.mxu0 0.0
    %2124 = vmatpush.msra.mxu0 0.0
    %2125 = vmatpush.msra.mxu0 0.0
    %2126 = vmatpush.msra.mxu0 0.0
    %2127 = vmatpush.msra.mxu0 0.0
    %2128 = vmatpush.msra.mxu0 0.0
    %2129 = vmatpush.msra.mxu0 0.0
    %2130 = vmatpush.msra.mxu0 0.0
    %2131 = vmatpush.msra.mxu0 0.0
    %2132 = vmatpush.msra.mxu0 0.0
    %2133 = vmatpush.msra.mxu0 0.0
    %2134 = vmatpush.msra.mxu0 %v1770
    %2135 = vmatmul.f32.gmra.mxu0 %v1123
    %v2136 = vpop.f32.mrf.mxu0
    %v2137 = vadd.f32 0.0, %v2136
    %2138 = vmatmul.f32.gmra.mxu0 %v1126
    %v2139 = vpop.f32.mrf.mxu0
    %v2140 = vadd.f32 0.0, %v2139
    %2141 = vdwg.mxu0
    %2142 = vmatpush.msra.mxu0 0.0
    %2143 = vmatpush.msra.mxu0 0.0
    %2144 = vmatpush.msra.mxu0 0.0
    %2145 = vmatpush.msra.mxu0 0.0
    %2146 = vmatpush.msra.mxu0 0.0
    %2147 = vmatpush.msra.mxu0 0.0
    %2148 = vmatpush.msra.mxu0 0.0
    %2149 = vmatpush.msra.mxu0 0.0
    %2150 = vmatpush.msra.mxu0 0.0
    %2151 = vmatpush.msra.mxu0 0.0
    %2152 = vmatpush.msra.mxu0 0.0
    %2153 = vmatpush.msra.mxu0 0.0
    %2154 = vmatpush.msra.mxu0 0.0
    %2155 = vmatpush.msra.mxu0 0.0
    %2156 = vmatpush.msra.mxu0 0.0
    %2157 = vmatpush.msra.mxu0 %v2097
    %2158 = vmatmul.f32.gmra.mxu0 %v1123
    %v2159 = vpop.f32.mrf.mxu0
    %v2160 = vadd.f32 0.0, %v2159
    %2161 = vmatmul.f32.gmra.mxu0 %v1126
    %v2162 = vpop.f32.mrf.mxu0
    %v2163 = vadd.f32 0.0, %v2162
    %2164 = vdwg.mxu0
    %v2165 = vsub.f32 %v1425, %v2160
    %v2166 = vsub.f32 %v1426, %v2163
    %v2167 = vmul.f32 %v2165, %v2165
    %v2168 = vmul.f32 %v2166, %v2166
    %v2169 = vsel %vm1178, %v2167, 0.0
    %2170 = vadd.xlane.f32.xlu0 %v2169
    %v2171 = vpop.xlane.xlu0 %2170
    %v2172 = vsel %vm1178, %v2168, 0.0
    %2173 = vadd.xlane.f32.xlu0 %v2172
    %v2174 = vpop.xlane.xlu0 %2173
    %v2176 = vsel %vm1075, %v2137, 0
    %v2179 = vsel %vm1075, %v2140, 0
    %2181 = vmatpush.msra.mxu0 0.0
    %2182 = vmatpush.msra.mxu0 0.0
    %2183 = vmatpush.msra.mxu0 0.0
    %2184 = vmatpush.msra.mxu0 0.0
    %2185 = vmatpush.msra.mxu0 0.0
    %2186 = vmatpush.msra.mxu0 0.0
    %2187 = vmatpush.msra.mxu0 0.0
    %2188 = vmatpush.msra.mxu0 0.0
    %2189 = vmatpush.msra.mxu0 0.0
    %2190 = vmatpush.msra.mxu0 0.0
    %2191 = vmatpush.msra.mxu0 0.0
    %2192 = vmatpush.msra.mxu0 0.0
    %2193 = vmatpush.msra.mxu0 0.0
    %2194 = vmatpush.msra.mxu0 0.0
    %2195 = vmatpush.msra.mxu0 %v1976
    %2196 = vmatpush.msra.mxu0 %v1975
    %2197 = vmatmul.f32.gmra.mxu0 %v2176
    %v2198 = vpop.f32.mrf.mxu0
    %v2199 = vadd.f32 0.0, %v2198
    %2200 = vmatmul.f32.gmra.mxu0 %v2179
    %v2201 = vpop.f32.mrf.mxu0
    %v2202 = vadd.f32 0.0, %v2201
    %2203 = vdwg.mxu0
    %v2205 = vsel %vm1075, %v1385, 0
    %v2208 = vsel %vm1075, %v1386, 0
    %2210 = vmatpush.msra.mxu0 0.0
    %2211 = vmatpush.msra.mxu0 0.0
    %2212 = vmatpush.msra.mxu0 0.0
    %2213 = vmatpush.msra.mxu0 0.0
    %2214 = vmatpush.msra.mxu0 0.0
    %2215 = vmatpush.msra.mxu0 0.0
    %2216 = vmatpush.msra.mxu0 0.0
    %2217 = vmatpush.msra.mxu0 0.0
    %2218 = vmatpush.msra.mxu0 0.0
    %2219 = vmatpush.msra.mxu0 0.0
    %2220 = vmatpush.msra.mxu0 0.0
    %2221 = vmatpush.msra.mxu0 0.0
    %2222 = vmatpush.msra.mxu0 0.0
    %2223 = vmatpush.msra.mxu0 0.0
    %2224 = vmatpush.msra.mxu0 %v1981
    %2225 = vmatpush.msra.mxu0 %v1980
    %2226 = vmatmul.f32.gmra.mxu0 %v2205
    %v2227 = vpop.f32.mrf.mxu0
    %v2228 = vadd.f32 %v2199, %v2227
    %2229 = vmatmul.f32.gmra.mxu0 %v2208
    %v2230 = vpop.f32.mrf.mxu0
    %v2231 = vadd.f32 %v2202, %v2230
    %2232 = vdwg.mxu0
    %v2234 = vperm.slane %v1978, 0
    %v2236 = vmul.f32 %v2171, %v2234
    %v2237 = vmul.f32 %v2174, %v2234
    %v2238 = vadd.f32 %v2228, %v2236
    %v2239 = vadd.f32 %v2231, %v2237
    %v2241 = vperm.slane %v1973, 0
    %v2243 = vadd.f32 %v2238, %v2241
    %v2244 = vadd.f32 %v2239, %v2241
    %v2245 = vmax.f32 %v2243, 0.0
    %v2246 = vmax.f32 %v2244, 0.0
    %v2248 = vperm.slane %v1983, 0
    %v2251 = vsel %vm1260, %v2245, 0
    %v2254 = vsel %vm1260, %v2246, 0
    %2256 = vmatpush.msra.mxu0 0.0
    %2257 = vmatpush.msra.mxu0 0.0
    %2258 = vmatpush.msra.mxu0 0.0
    %2259 = vmatpush.msra.mxu0 0.0
    %2260 = vmatpush.msra.mxu0 0.0
    %2261 = vmatpush.msra.mxu0 0.0
    %2262 = vmatpush.msra.mxu0 0.0
    %2263 = vmatpush.msra.mxu0 0.0
    %2264 = vmatpush.msra.mxu0 0.0
    %2265 = vmatpush.msra.mxu0 0.0
    %2266 = vmatpush.msra.mxu0 0.0
    %2267 = vmatpush.msra.mxu0 0.0
    %2268 = vmatpush.msra.mxu0 %v1988
    %2269 = vmatpush.msra.mxu0 %v1987
    %2270 = vmatpush.msra.mxu0 %v1986
    %2271 = vmatpush.msra.mxu0 %v1985
    %2272 = vmatmul.f32.gmra.mxu0 %v2251
    %v2273 = vpop.f32.mrf.mxu0
    %v2274 = vadd.f32 %v2248, %v2273
    %2275 = vmatmul.f32.gmra.mxu0 %v2254
    %v2276 = vpop.f32.mrf.mxu0
    %v2277 = vadd.f32 %v2248, %v2276
    %2278 = vdwg.mxu0
    %v2279 = vmax.f32 %v2274, 0.0
    %v2280 = vmax.f32 %v2277, 0.0
    %v2282 = vsel %vm1260, %v2279, 0
    %v2285 = vsel %vm1260, %v2280, 0
    %2287 = vmatpush.msra.mxu0 0.0
    %2288 = vmatpush.msra.mxu0 0.0
    %2289 = vmatpush.msra.mxu0 0.0
    %2290 = vmatpush.msra.mxu0 0.0
    %2291 = vmatpush.msra.mxu0 0.0
    %2292 = vmatpush.msra.mxu0 0.0
    %2293 = vmatpush.msra.mxu0 0.0
    %2294 = vmatpush.msra.mxu0 0.0
    %2295 = vmatpush.msra.mxu0 0.0
    %2296 = vmatpush.msra.mxu0 0.0
    %2297 = vmatpush.msra.mxu0 0.0
    %2298 = vmatpush.msra.mxu0 0.0
    %2299 = vmatpush.msra.mxu0 %v1961
    %2300 = vmatpush.msra.mxu0 %v1960
    %2301 = vmatpush.msra.mxu0 %v1959
    %2302 = vmatpush.msra.mxu0 %v1958
    %2303 = vmatmul.f32.gmra.mxu0 %v2282
    %v2304 = vpop.f32.mrf.mxu0
    %v2305 = vadd.f32 0.0, %v2304
    %2306 = vmatmul.f32.gmra.mxu0 %v2285
    %v2307 = vpop.f32.mrf.mxu0
    %v2308 = vadd.f32 0.0, %v2307
    %2309 = vdwg.mxu0
    %2310 = vmatpush.msra.mxu0 0.0
    %2311 = vmatpush.msra.mxu0 0.0
    %2312 = vmatpush.msra.mxu0 0.0
    %2313 = vmatpush.msra.mxu0 0.0
    %2314 = vmatpush.msra.mxu0 0.0
    %2315 = vmatpush.msra.mxu0 0.0
    %2316 = vmatpush.msra.mxu0 0.0
    %2317 = vmatpush.msra.mxu0 0.0
    %2318 = vmatpush.msra.mxu0 0.0
    %2319 = vmatpush.msra.mxu0 0.0
    %2320 = vmatpush.msra.mxu0 0.0
    %2321 = vmatpush.msra.mxu0 0.0
    %2322 = vmatpush.msra.mxu0 0.0
    %2323 = vmatpush.msra.mxu0 0.0
    %2324 = vmatpush.msra.mxu0 %v1964
    %2325 = vmatpush.msra.mxu0 %v1963
    %2326 = vmatmul.f32.gmra.mxu0 %v2205
    %v2327 = vpop.f32.mrf.mxu0
    %v2328 = vadd.f32 %v2305, %v2327
    %2329 = vmatmul.f32.gmra.mxu0 %v2208
    %v2330 = vpop.f32.mrf.mxu0
    %v2331 = vadd.f32 %v2308, %v2330
    %2332 = vdwg.mxu0
    %v2334 = vperm.slane %v1956, 0
    %v2336 = vadd.f32 %v2328, %v2334
    %v2337 = vadd.f32 %v2331, %v2334
    %v2338 = vmax.f32 %v2336, 0.0
    %v2339 = vmax.f32 %v2337, 0.0
    %v2341 = vsel %vm1260, %v2338, 0
    %v2344 = vsel %vm1260, %v2339, 0
    %2346 = vmatpush.msra.mxu0 0.0
    %2347 = vmatpush.msra.mxu0 0.0
    %2348 = vmatpush.msra.mxu0 0.0
    %2349 = vmatpush.msra.mxu0 0.0
    %2350 = vmatpush.msra.mxu0 0.0
    %2351 = vmatpush.msra.mxu0 0.0
    %2352 = vmatpush.msra.mxu0 0.0
    %2353 = vmatpush.msra.mxu0 0.0
    %2354 = vmatpush.msra.mxu0 0.0
    %2355 = vmatpush.msra.mxu0 0.0
    %2356 = vmatpush.msra.mxu0 0.0
    %2357 = vmatpush.msra.mxu0 0.0
    %2358 = vmatpush.msra.mxu0 %v1971
    %2359 = vmatpush.msra.mxu0 %v1970
    %2360 = vmatpush.msra.mxu0 %v1969
    %2361 = vmatpush.msra.mxu0 %v1968
    %2362 = vmatmul.f32.gmra.mxu0 %v2341
    %v2363 = vpop.f32.mrf.mxu0
    %v2364 = vadd.f32 0.0, %v2363
    %2365 = vmatmul.f32.gmra.mxu0 %v2344
    %v2366 = vpop.f32.mrf.mxu0
    %v2367 = vadd.f32 0.0, %v2366
    %2368 = vdwg.mxu0
    %v2369 = vadd.f32 %v1385, %v2364
    %v2370 = vadd.f32 %v1386, %v2367
    %v2372 = vperm.slane %v1966, 0
    %v2374 = vadd.f32 %v2369, %v2372
    %v2375 = vadd.f32 %v2370, %v2372
    %v2377 = vsel %vm1431, %v1954, 0
    %2379 = vmatpush.msra.mxu0 0.0
    %2380 = vmatpush.msra.mxu0 0.0
    %2381 = vmatpush.msra.mxu0 0.0
    %2382 = vmatpush.msra.mxu0 0.0
    %2383 = vmatpush.msra.mxu0 0.0
    %2384 = vmatpush.msra.mxu0 0.0
    %2385 = vmatpush.msra.mxu0 0.0
    %2386 = vmatpush.msra.mxu0 0.0
    %2387 = vmatpush.msra.mxu0 0.0
    %2388 = vmatpush.msra.mxu0 0.0
    %2389 = vmatpush.msra.mxu0 0.0
    %2390 = vmatpush.msra.mxu0 0.0
    %2391 = vmatpush.msra.mxu0 0.0
    %2392 = vmatpush.msra.mxu0 0.0
    %2393 = vmatpush.msra.mxu0 0.0
    %2394 = vmatpush.msra.mxu0 %v2377
    %2395 = vmatmul.f32.gmra.mxu0 %v1429
    %v2396 = vpop.f32.mrf.mxu0
    %v2397 = vadd.f32 0.0, %v2396
    %2398 = vdwg.mxu0
    %v2400 = vsel %vm1431, %v2117, 0
    %2402 = vmatpush.msra.mxu0 0.0
    %2403 = vmatpush.msra.mxu0 0.0
    %2404 = vmatpush.msra.mxu0 0.0
    %2405 = vmatpush.msra.mxu0 0.0
    %2406 = vmatpush.msra.mxu0 0.0
    %2407 = vmatpush.msra.mxu0 0.0
    %2408 = vmatpush.msra.mxu0 0.0
    %2409 = vmatpush.msra.mxu0 0.0
    %2410 = vmatpush.msra.mxu0 0.0
    %2411 = vmatpush.msra.mxu0 0.0
    %2412 = vmatpush.msra.mxu0 0.0
    %2413 = vmatpush.msra.mxu0 0.0
    %2414 = vmatpush.msra.mxu0 0.0
    %2415 = vmatpush.msra.mxu0 0.0
    %2416 = vmatpush.msra.mxu0 0.0
    %2417 = vmatpush.msra.mxu0 %v2400
    %2418 = vmatmul.f32.gmra.mxu0 %v1429
    %v2419 = vpop.f32.mrf.mxu0
    %v2420 = vadd.f32 0.0, %v2419
    %2421 = vdwg.mxu0
    %v2422 = vsub.f32 %v2097, %v2420
    %v2423 = vmul.f32 %v2422, %v2422
    %v2424 = vsel %vm1178, %v2423, 0.0
    %2425 = vadd.xlane.f32.xlu0 %v2424
    %v2426 = vpop.xlane.xlu0 %2425
    %v2428 = vsel %vm1075, %v2397, 0
    %2430 = vmatpush.msra.mxu0 0.0
    %2431 = vmatpush.msra.mxu0 0.0
    %2432 = vmatpush.msra.mxu0 0.0
    %2433 = vmatpush.msra.mxu0 0.0
    %2434 = vmatpush.msra.mxu0 0.0
    %2435 = vmatpush.msra.mxu0 0.0
    %2436 = vmatpush.msra.mxu0 0.0
    %2437 = vmatpush.msra.mxu0 0.0
    %2438 = vmatpush.msra.mxu0 0.0
    %2439 = vmatpush.msra.mxu0 0.0
    %2440 = vmatpush.msra.mxu0 0.0
    %2441 = vmatpush.msra.mxu0 0.0
    %2442 = vmatpush.msra.mxu0 0.0
    %2443 = vmatpush.msra.mxu0 0.0
    %2444 = vmatpush.msra.mxu0 %v2032
    %2445 = vmatpush.msra.mxu0 %v2031
    %2446 = vmatmul.f32.gmra.mxu0 %v2428
    %v2447 = vpop.f32.mrf.mxu0
    %v2448 = vadd.f32 0.0, %v2447
    %2449 = vdwg.mxu0
    %v2451 = vsel %vm1075, %v1770, 0
    %2453 = vmatpush.msra.mxu0 0.0
    %2454 = vmatpush.msra.mxu0 0.0
    %2455 = vmatpush.msra.mxu0 0.0
    %2456 = vmatpush.msra.mxu0 0.0
    %2457 = vmatpush.msra.mxu0 0.0
    %2458 = vmatpush.msra.mxu0 0.0
    %2459 = vmatpush.msra.mxu0 0.0
    %2460 = vmatpush.msra.mxu0 0.0
    %2461 = vmatpush.msra.mxu0 0.0
    %2462 = vmatpush.msra.mxu0 0.0
    %2463 = vmatpush.msra.mxu0 0.0
    %2464 = vmatpush.msra.mxu0 0.0
    %2465 = vmatpush.msra.mxu0 0.0
    %2466 = vmatpush.msra.mxu0 0.0
    %2467 = vmatpush.msra.mxu0 %v2037
    %2468 = vmatpush.msra.mxu0 %v2036
    %2469 = vmatmul.f32.gmra.mxu0 %v2451
    %v2470 = vpop.f32.mrf.mxu0
    %v2471 = vadd.f32 %v2448, %v2470
    %2472 = vdwg.mxu0
    %v2474 = vperm.slane %v2034, 0
    %v2476 = vmul.f32 %v2426, %v2474
    %v2477 = vadd.f32 %v2471, %v2476
    %v2479 = vperm.slane %v2029, 0
    %v2481 = vadd.f32 %v2477, %v2479
    %v2482 = vmax.f32 %v2481, 0.0
    %v2484 = vperm.slane %v2039, 0
    %v2487 = vsel %vm1260, %v2482, 0
    %2489 = vmatpush.msra.mxu0 0.0
    %2490 = vmatpush.msra.mxu0 0.0
    %2491 = vmatpush.msra.mxu0 0.0
    %2492 = vmatpush.msra.mxu0 0.0
    %2493 = vmatpush.msra.mxu0 0.0
    %2494 = vmatpush.msra.mxu0 0.0
    %2495 = vmatpush.msra.mxu0 0.0
    %2496 = vmatpush.msra.mxu0 0.0
    %2497 = vmatpush.msra.mxu0 0.0
    %2498 = vmatpush.msra.mxu0 0.0
    %2499 = vmatpush.msra.mxu0 0.0
    %2500 = vmatpush.msra.mxu0 0.0
    %2501 = vmatpush.msra.mxu0 %v2044
    %2502 = vmatpush.msra.mxu0 %v2043
    %2503 = vmatpush.msra.mxu0 %v2042
    %2504 = vmatpush.msra.mxu0 %v2041
    %2505 = vmatmul.f32.gmra.mxu0 %v2487
    %v2506 = vpop.f32.mrf.mxu0
    %v2507 = vadd.f32 %v2484, %v2506
    %2508 = vdwg.mxu0
    %v2509 = vmax.f32 %v2507, 0.0
    %2510 = vmatpush.msra.mxu0 0.0
    %2511 = vmatpush.msra.mxu0 0.0
    %2512 = vmatpush.msra.mxu0 0.0
    %2513 = vmatpush.msra.mxu0 0.0
    %2514 = vmatpush.msra.mxu0 0.0
    %2515 = vmatpush.msra.mxu0 0.0
    %2516 = vmatpush.msra.mxu0 0.0
    %2517 = vmatpush.msra.mxu0 0.0
    %2518 = vmatpush.msra.mxu0 0.0
    %2519 = vmatpush.msra.mxu0 0.0
    %2520 = vmatpush.msra.mxu0 0.0
    %2521 = vmatpush.msra.mxu0 0.0
    %2522 = vmatpush.msra.mxu0 0.0
    %2523 = vmatpush.msra.mxu0 0.0
    %2524 = vmatpush.msra.mxu0 %v1386
    %2525 = vmatpush.msra.mxu0 %v1385
    %2526 = vmatmul.f32.gmra.mxu0 %v1077
    %v2527 = vpop.f32.mrf.mxu0
    %v2528 = vadd.f32 0.0, %v2527
    %2529 = vdwg.mxu0
    %v2530 = vsub.f32 %v2097, %v2097
    %v2531 = vmul.f32 %v2530, %v2530
    %v2532 = vsel %vm1178, %v2531, 0.0
    %2533 = vadd.xlane.f32.xlu0 %v2532
    %v2534 = vpop.xlane.xlu0 %2533
    %v2536 = vsel %vm1075, %v2528, 0
    %2538 = vmatpush.msra.mxu0 0.0
    %2539 = vmatpush.msra.mxu0 0.0
    %2540 = vmatpush.msra.mxu0 0.0
    %2541 = vmatpush.msra.mxu0 0.0
    %2542 = vmatpush.msra.mxu0 0.0
    %2543 = vmatpush.msra.mxu0 0.0
    %2544 = vmatpush.msra.mxu0 0.0
    %2545 = vmatpush.msra.mxu0 0.0
    %2546 = vmatpush.msra.mxu0 0.0
    %2547 = vmatpush.msra.mxu0 0.0
    %2548 = vmatpush.msra.mxu0 0.0
    %2549 = vmatpush.msra.mxu0 0.0
    %2550 = vmatpush.msra.mxu0 0.0
    %2551 = vmatpush.msra.mxu0 0.0
    %2552 = vmatpush.msra.mxu0 %v1993
    %2553 = vmatpush.msra.mxu0 %v1992
    %2554 = vmatmul.f32.gmra.mxu0 %v2536
    %v2555 = vpop.f32.mrf.mxu0
    %v2556 = vadd.f32 0.0, %v2555
    %2557 = vdwg.mxu0
    %2558 = vmatpush.msra.mxu0 0.0
    %2559 = vmatpush.msra.mxu0 0.0
    %2560 = vmatpush.msra.mxu0 0.0
    %2561 = vmatpush.msra.mxu0 0.0
    %2562 = vmatpush.msra.mxu0 0.0
    %2563 = vmatpush.msra.mxu0 0.0
    %2564 = vmatpush.msra.mxu0 0.0
    %2565 = vmatpush.msra.mxu0 0.0
    %2566 = vmatpush.msra.mxu0 0.0
    %2567 = vmatpush.msra.mxu0 0.0
    %2568 = vmatpush.msra.mxu0 0.0
    %2569 = vmatpush.msra.mxu0 0.0
    %2570 = vmatpush.msra.mxu0 0.0
    %2571 = vmatpush.msra.mxu0 0.0
    %2572 = vmatpush.msra.mxu0 %v1998
    %2573 = vmatpush.msra.mxu0 %v1997
    %2574 = vmatmul.f32.gmra.mxu0 %v2451
    %v2575 = vpop.f32.mrf.mxu0
    %v2576 = vadd.f32 %v2556, %v2575
    %2577 = vdwg.mxu0
    %v2579 = vperm.slane %v1995, 0
    %v2581 = vmul.f32 %v2534, %v2579
    %v2582 = vadd.f32 %v2576, %v2581
    %v2584 = vperm.slane %v1990, 0
    %v2586 = vadd.f32 %v2582, %v2584
    %v2587 = vmax.f32 %v2586, 0.0
    %v2589 = vperm.slane %v2000, 0
    %v2592 = vsel %vm1260, %v2587, 0
    %2594 = vmatpush.msra.mxu0 0.0
    %2595 = vmatpush.msra.mxu0 0.0
    %2596 = vmatpush.msra.mxu0 0.0
    %2597 = vmatpush.msra.mxu0 0.0
    %2598 = vmatpush.msra.mxu0 0.0
    %2599 = vmatpush.msra.mxu0 0.0
    %2600 = vmatpush.msra.mxu0 0.0
    %2601 = vmatpush.msra.mxu0 0.0
    %2602 = vmatpush.msra.mxu0 0.0
    %2603 = vmatpush.msra.mxu0 0.0
    %2604 = vmatpush.msra.mxu0 0.0
    %2605 = vmatpush.msra.mxu0 0.0
    %2606 = vmatpush.msra.mxu0 %v2005
    %2607 = vmatpush.msra.mxu0 %v2004
    %2608 = vmatpush.msra.mxu0 %v2003
    %2609 = vmatpush.msra.mxu0 %v2002
    %2610 = vmatmul.f32.gmra.mxu0 %v2592
    %v2611 = vpop.f32.mrf.mxu0
    %v2612 = vadd.f32 %v2589, %v2611
    %2613 = vdwg.mxu0
    %v2614 = vmax.f32 %v2612, 0.0
    %v2616 = vsel %vm1260, %v2509, 0
    %2618 = vmatpush.msra.mxu0 0.0
    %2619 = vmatpush.msra.mxu0 0.0
    %2620 = vmatpush.msra.mxu0 0.0
    %2621 = vmatpush.msra.mxu0 0.0
    %2622 = vmatpush.msra.mxu0 0.0
    %2623 = vmatpush.msra.mxu0 0.0
    %2624 = vmatpush.msra.mxu0 0.0
    %2625 = vmatpush.msra.mxu0 0.0
    %2626 = vmatpush.msra.mxu0 0.0
    %2627 = vmatpush.msra.mxu0 0.0
    %2628 = vmatpush.msra.mxu0 0.0
    %2629 = vmatpush.msra.mxu0 0.0
    %2630 = vmatpush.msra.mxu0 %v2017
    %2631 = vmatpush.msra.mxu0 %v2016
    %2632 = vmatpush.msra.mxu0 %v2015
    %2633 = vmatpush.msra.mxu0 %v2014
    %2634 = vmatmul.f32.gmra.mxu0 %v2616
    %v2635 = vpop.f32.mrf.mxu0
    %v2636 = vadd.f32 0.0, %v2635
    %2637 = vdwg.mxu0
    %2638 = vmatpush.msra.mxu0 0.0
    %2639 = vmatpush.msra.mxu0 0.0
    %2640 = vmatpush.msra.mxu0 0.0
    %2641 = vmatpush.msra.mxu0 0.0
    %2642 = vmatpush.msra.mxu0 0.0
    %2643 = vmatpush.msra.mxu0 0.0
    %2644 = vmatpush.msra.mxu0 0.0
    %2645 = vmatpush.msra.mxu0 0.0
    %2646 = vmatpush.msra.mxu0 0.0
    %2647 = vmatpush.msra.mxu0 0.0
    %2648 = vmatpush.msra.mxu0 0.0
    %2649 = vmatpush.msra.mxu0 0.0
    %2650 = vmatpush.msra.mxu0 0.0
    %2651 = vmatpush.msra.mxu0 0.0
    %2652 = vmatpush.msra.mxu0 %v2020
    %2653 = vmatpush.msra.mxu0 %v2019
    %2654 = vmatmul.f32.gmra.mxu0 %v2451
    %v2655 = vpop.f32.mrf.mxu0
    %v2656 = vadd.f32 %v2636, %v2655
    %2657 = vdwg.mxu0
    %v2659 = vsel %vm1260, %v2614, 0
    %2661 = vmatpush.msra.mxu0 0.0
    %2662 = vmatpush.msra.mxu0 0.0
    %2663 = vmatpush.msra.mxu0 0.0
    %2664 = vmatpush.msra.mxu0 0.0
    %2665 = vmatpush.msra.mxu0 0.0
    %2666 = vmatpush.msra.mxu0 0.0
    %2667 = vmatpush.msra.mxu0 0.0
    %2668 = vmatpush.msra.mxu0 0.0
    %2669 = vmatpush.msra.mxu0 0.0
    %2670 = vmatpush.msra.mxu0 0.0
    %2671 = vmatpush.msra.mxu0 0.0
    %2672 = vmatpush.msra.mxu0 0.0
    %2673 = vmatpush.msra.mxu0 %v2012
    %2674 = vmatpush.msra.mxu0 %v2011
    %2675 = vmatpush.msra.mxu0 %v2010
    %2676 = vmatpush.msra.mxu0 %v2009
    %2677 = vmatmul.f32.gmra.mxu0 %v2659
    %v2678 = vpop.f32.mrf.mxu0
    %v2679 = vadd.f32 0.0, %v2678
    %2680 = vdwg.mxu0
    %v2681 = vadd.f32 %v2656, %v2679
    %v2683 = vperm.slane %v2007, 0
    %v2685 = vadd.f32 %v2681, %v2683
    %v2686 = vmax.f32 %v2685, 0.0
    %v2688 = vsel %vm1260, %v2686, 0
    %2690 = vmatpush.msra.mxu0 0.0
    %2691 = vmatpush.msra.mxu0 0.0
    %2692 = vmatpush.msra.mxu0 0.0
    %2693 = vmatpush.msra.mxu0 0.0
    %2694 = vmatpush.msra.mxu0 0.0
    %2695 = vmatpush.msra.mxu0 0.0
    %2696 = vmatpush.msra.mxu0 0.0
    %2697 = vmatpush.msra.mxu0 0.0
    %2698 = vmatpush.msra.mxu0 0.0
    %2699 = vmatpush.msra.mxu0 0.0
    %2700 = vmatpush.msra.mxu0 0.0
    %2701 = vmatpush.msra.mxu0 0.0
    %2702 = vmatpush.msra.mxu0 %v2027
    %2703 = vmatpush.msra.mxu0 %v2026
    %2704 = vmatpush.msra.mxu0 %v2025
    %2705 = vmatpush.msra.mxu0 %v2024
    %2706 = vmatmul.f32.gmra.mxu0 %v2688
    %v2707 = vpop.f32.mrf.mxu0
    %v2708 = vadd.f32 0.0, %v2707
    %2709 = vdwg.mxu0
    %v2710 = vadd.f32 %v1770, %v2708
    %v2712 = vperm.slane %v2022, 0
    %v2714 = vadd.f32 %v2710, %v2712
    %2715 = vmatpush.msra.mxu0 0.0
    %2716 = vmatpush.msra.mxu0 0.0
    %2717 = vmatpush.msra.mxu0 0.0
    %2718 = vmatpush.msra.mxu0 0.0
    %2719 = vmatpush.msra.mxu0 0.0
    %2720 = vmatpush.msra.mxu0 0.0
    %2721 = vmatpush.msra.mxu0 0.0
    %2722 = vmatpush.msra.mxu0 0.0
    %2723 = vmatpush.msra.mxu0 0.0
    %2724 = vmatpush.msra.mxu0 0.0
    %2725 = vmatpush.msra.mxu0 0.0
    %2726 = vmatpush.msra.mxu0 0.0
    %2727 = vmatpush.msra.mxu0 0.0
    %2728 = vmatpush.msra.mxu0 0.0
    %2729 = vmatpush.msra.mxu0 0.0
    %2730 = vmatpush.msra.mxu0 %v1770
    %2731 = vmatmul.f32.gmra.mxu0 %v1100
    %v2732 = vpop.f32.mrf.mxu0
    %v2733 = vadd.f32 0.0, %v2732
    %2734 = vdwg.mxu0
    %v2735 = vsub.f32 %v2117, %v2117
    %v2736 = vmul.f32 %v2735, %v2735
    %v2737 = vsel %vm1793, %v2736, 0.0
    %2738 = vadd.xlane.f32.xlu0 %v2737
    %v2739 = vpop.xlane.xlu0 %2738
    %v2741 = vsel %vm1075, %v2733, 0
    %2743 = vmatpush.msra.mxu0 0.0
    %2744 = vmatpush.msra.mxu0 0.0
    %2745 = vmatpush.msra.mxu0 0.0
    %2746 = vmatpush.msra.mxu0 0.0
    %2747 = vmatpush.msra.mxu0 0.0
    %2748 = vmatpush.msra.mxu0 0.0
    %2749 = vmatpush.msra.mxu0 0.0
    %2750 = vmatpush.msra.mxu0 0.0
    %2751 = vmatpush.msra.mxu0 0.0
    %2752 = vmatpush.msra.mxu0 0.0
    %2753 = vmatpush.msra.mxu0 0.0
    %2754 = vmatpush.msra.mxu0 0.0
    %2755 = vmatpush.msra.mxu0 0.0
    %2756 = vmatpush.msra.mxu0 0.0
    %2757 = vmatpush.msra.mxu0 %v2049
    %2758 = vmatpush.msra.mxu0 %v2048
    %2759 = vmatmul.f32.gmra.mxu0 %v2741
    %v2760 = vpop.f32.mrf.mxu0
    %v2761 = vadd.f32 0.0, %v2760
    %2762 = vdwg.mxu0
    %v2763 = vsel %vm1075, %v1954, 0
    %2765 = vmatpush.msra.mxu0 0.0
    %2766 = vmatpush.msra.mxu0 0.0
    %2767 = vmatpush.msra.mxu0 0.0
    %2768 = vmatpush.msra.mxu0 0.0
    %2769 = vmatpush.msra.mxu0 0.0
    %2770 = vmatpush.msra.mxu0 0.0
    %2771 = vmatpush.msra.mxu0 0.0
    %2772 = vmatpush.msra.mxu0 0.0
    %2773 = vmatpush.msra.mxu0 0.0
    %2774 = vmatpush.msra.mxu0 0.0
    %2775 = vmatpush.msra.mxu0 0.0
    %2776 = vmatpush.msra.mxu0 0.0
    %2777 = vmatpush.msra.mxu0 0.0
    %2778 = vmatpush.msra.mxu0 0.0
    %2779 = vmatpush.msra.mxu0 %v2054
    %2780 = vmatpush.msra.mxu0 %v2053
    %2781 = vmatmul.f32.gmra.mxu0 %v2763
    %v2782 = vpop.f32.mrf.mxu0
    %v2783 = vadd.f32 %v2761, %v2782
    %2784 = vdwg.mxu0
    %v2786 = vperm.slane %v2051, 0
    %v2788 = vmul.f32 %v2739, %v2786
    %v2789 = vadd.f32 %v2783, %v2788
    %v2791 = vperm.slane %v2046, 0
    %v2793 = vadd.f32 %v2789, %v2791
    %v2794 = vmax.f32 %v2793, 0.0
    %v2796 = vperm.slane %v2056, 0
    %v2799 = vsel %vm1260, %v2794, 0
    %2801 = vmatpush.msra.mxu0 0.0
    %2802 = vmatpush.msra.mxu0 0.0
    %2803 = vmatpush.msra.mxu0 0.0
    %2804 = vmatpush.msra.mxu0 0.0
    %2805 = vmatpush.msra.mxu0 0.0
    %2806 = vmatpush.msra.mxu0 0.0
    %2807 = vmatpush.msra.mxu0 0.0
    %2808 = vmatpush.msra.mxu0 0.0
    %2809 = vmatpush.msra.mxu0 0.0
    %2810 = vmatpush.msra.mxu0 0.0
    %2811 = vmatpush.msra.mxu0 0.0
    %2812 = vmatpush.msra.mxu0 0.0
    %2813 = vmatpush.msra.mxu0 %v2061
    %2814 = vmatpush.msra.mxu0 %v2060
    %2815 = vmatpush.msra.mxu0 %v2059
    %2816 = vmatpush.msra.mxu0 %v2058
    %2817 = vmatmul.f32.gmra.mxu0 %v2799
    %v2818 = vpop.f32.mrf.mxu0
    %v2819 = vadd.f32 %v2796, %v2818
    %2820 = vdwg.mxu0
    %v2821 = vmax.f32 %v2819, 0.0
    %v2823 = vsel %vm1260, %v2821, 0
    %2825 = vmatpush.msra.mxu0 0.0
    %2826 = vmatpush.msra.mxu0 0.0
    %2827 = vmatpush.msra.mxu0 0.0
    %2828 = vmatpush.msra.mxu0 0.0
    %2829 = vmatpush.msra.mxu0 0.0
    %2830 = vmatpush.msra.mxu0 0.0
    %2831 = vmatpush.msra.mxu0 0.0
    %2832 = vmatpush.msra.mxu0 0.0
    %2833 = vmatpush.msra.mxu0 0.0
    %2834 = vmatpush.msra.mxu0 0.0
    %2835 = vmatpush.msra.mxu0 0.0
    %2836 = vmatpush.msra.mxu0 0.0
    %2837 = vmatpush.msra.mxu0 %v2068
    %2838 = vmatpush.msra.mxu0 %v2067
    %2839 = vmatpush.msra.mxu0 %v2066
    %2840 = vmatpush.msra.mxu0 %v2065
    %2841 = vmatmul.f32.gmra.mxu0 %v2823
    %v2842 = vpop.f32.mrf.mxu0
    %v2843 = vadd.f32 0.0, %v2842
    %2844 = vdwg.mxu0
    %2845 = vmatpush.msra.mxu0 0.0
    %2846 = vmatpush.msra.mxu0 0.0
    %2847 = vmatpush.msra.mxu0 0.0
    %2848 = vmatpush.msra.mxu0 0.0
    %2849 = vmatpush.msra.mxu0 0.0
    %2850 = vmatpush.msra.mxu0 0.0
    %2851 = vmatpush.msra.mxu0 0.0
    %2852 = vmatpush.msra.mxu0 0.0
    %2853 = vmatpush.msra.mxu0 0.0
    %2854 = vmatpush.msra.mxu0 0.0
    %2855 = vmatpush.msra.mxu0 0.0
    %2856 = vmatpush.msra.mxu0 0.0
    %2857 = vmatpush.msra.mxu0 0.0
    %2858 = vmatpush.msra.mxu0 0.0
    %2859 = vmatpush.msra.mxu0 %v2071
    %2860 = vmatpush.msra.mxu0 %v2070
    %2861 = vmatmul.f32.gmra.mxu0 %v2763
    %v2862 = vpop.f32.mrf.mxu0
    %v2863 = vadd.f32 %v2843, %v2862
    %2864 = vdwg.mxu0
    %v2866 = vperm.slane %v2063, 0
    %v2868 = vadd.f32 %v2863, %v2866
    %v2869 = vmax.f32 %v2868, 0.0
    %v2871 = vsel %vm1260, %v2869, 0
    %2873 = vmatpush.msra.mxu0 0.0
    %2874 = vmatpush.msra.mxu0 0.0
    %2875 = vmatpush.msra.mxu0 0.0
    %2876 = vmatpush.msra.mxu0 0.0
    %2877 = vmatpush.msra.mxu0 0.0
    %2878 = vmatpush.msra.mxu0 0.0
    %2879 = vmatpush.msra.mxu0 0.0
    %2880 = vmatpush.msra.mxu0 0.0
    %2881 = vmatpush.msra.mxu0 0.0
    %2882 = vmatpush.msra.mxu0 0.0
    %2883 = vmatpush.msra.mxu0 0.0
    %2884 = vmatpush.msra.mxu0 0.0
    %2885 = vmatpush.msra.mxu0 %v2078
    %2886 = vmatpush.msra.mxu0 %v2077
    %2887 = vmatpush.msra.mxu0 %v2076
    %2888 = vmatpush.msra.mxu0 %v2075
    %2889 = vmatmul.f32.gmra.mxu0 %v2871
    %v2890 = vpop.f32.mrf.mxu0
    %v2891 = vadd.f32 0.0, %v2890
    %2892 = vdwg.mxu0
    %v2893 = vadd.f32 %v1954, %v2891
    %v2895 = vperm.slane %v2073, 0
    %v2897 = vadd.f32 %v2893, %v2895
    %v2898 = vlaneseq
    %v2899 = vand.u32 %v2898, 127
    %v2900 = vld [vmem:[%s17] sm:$0xff]
    %v2901 = vld [vmem:[%s17 + $0x8] sm:$0xff]
    %2902 = vset.pattern.permute.xlu0 0
    %2903 = vperm.xlu0 %2902, %v2900
    %v2904 = vpop.permute.xlu0 %2903
    %2905 = vset.pattern.permute.xlu0 0
    %2906 = vperm.xlu0 %2905, %v2901
    %v2907 = vpop.permute.xlu0 %2906
    %vm2908 = vcmp.eq.s32.totalorder %v2904, %v2899
    %vm2909 = vcmp.eq.s32.totalorder %v2907, %v2899
    %v2910 = vsel %vm2908, 1, 0
    %v2911 = vsel %vm2909, 1, 0
    %v2912 = vcvt.s32.f32 %v2910
    %v2913 = vcvt.s32.f32 %v2911
    %vm2914 = vcmask 7168
    %v2915 = vsel %vm2914, %v2912, -inf
    %v2916 = vsel %vm2914, %v2913, -inf
    %v2917 = vmax.f32 %v2915, %v2916
    %v2918 = vrot.slane %v2917, 4
    %v2919 = vmax.f32 %v2917, %v2918
    %v2920 = vrot.slane %v2919, 2
    %v2921 = vmax.f32 %v2919, %v2920
    %v2922 = vrot.slane %v2921, 1
    %v2923 = vmax.f32 %v2921, %v2922
    %vm2924 = vcmp.gt.f32.partialorder %v2912, 0.0
    %vm2925 = vcmp.gt.f32.partialorder %v2913, 0.0
    %v2926 = vsel %vm2924, 1, 0
    %v2927 = vsel %vm2925, 1, 0
    %2928 = vset.pattern.permute.xlu0 0
    %2929 = vperm.xlu0 %2928, %v2926
    %v2930 = vpop.permute.xlu0 %2929
    %2931 = vset.pattern.permute.xlu0 0
    %2932 = vperm.xlu0 %2931, %v2927
    %v2933 = vpop.permute.xlu0 %2932
    %vm2934 = vcmp.eq.s32.totalorder %v2930, 1
    %vm2935 = vcmp.eq.s32.totalorder %v2933, 1
    %v2936 = vsel %vm2934, %v2374, -3e+38
    %v2937 = vsel %vm2935, %v2375, -3e+38
    %v2938 = vsel %vm1075, %v2936, -inf
    %v2939 = vsel %vm1075, %v2937, -inf
    %v2940 = vmax.f32 %v2938, %v2939
    %v2941 = vrot.slane %v2940, 4
    %v2942 = vmax.f32 %v2940, %v2941
    %v2943 = vrot.slane %v2942, 2
    %v2944 = vmax.f32 %v2942, %v2943
    %v2945 = vrot.slane %v2944, 1
    %v2946 = vmax.f32 %v2944, %v2945
    %2948 = vset.pattern.permute.xlu0 0
    %2949 = vperm.xlu0 %2948, %v2923
    %v2950 = vpop.permute.xlu0 %2949
    %v2952 = vmul.f32 %v2946, %v2950
    %vm2953 = vcmask 15368
    %v2954 = vsel %vm2953, %v2912, -inf
    %v2955 = vsel %vm2953, %v2913, -inf
    %v2956 = vmax.f32 %v2954, %v2955
    %v2957 = vrot.slane %v2956, 4
    %v2958 = vmax.f32 %v2956, %v2957
    %v2959 = vrot.slane %v2958, 2
    %v2960 = vmax.f32 %v2958, %v2959
    %v2961 = vrot.slane %v2960, 1
    %v2962 = vmax.f32 %v2960, %v2961
    %2963 = vset.pattern.permute.xlu0 1
    %2964 = vperm.xlu0 %2963, %v2926
    %v2965 = vpop.permute.xlu0 %2964
    %2966 = vset.pattern.permute.xlu0 1
    %2967 = vperm.xlu0 %2966, %v2927
    %v2968 = vpop.permute.xlu0 %2967
    %vm2969 = vcmp.eq.s32.totalorder %v2965, 1
    %vm2970 = vcmp.eq.s32.totalorder %v2968, 1
    %v2971 = vsel %vm2969, %v2374, -3e+38
    %v2972 = vsel %vm2970, %v2375, -3e+38
    %v2973 = vsel %vm1075, %v2971, -inf
    %v2974 = vsel %vm1075, %v2972, -inf
    %v2975 = vmax.f32 %v2973, %v2974
    %v2976 = vrot.slane %v2975, 4
    %v2977 = vmax.f32 %v2975, %v2976
    %v2978 = vrot.slane %v2977, 2
    %v2979 = vmax.f32 %v2977, %v2978
    %v2980 = vrot.slane %v2979, 1
    %v2981 = vmax.f32 %v2979, %v2980
    %2983 = vset.pattern.permute.xlu0 1
    %2984 = vperm.xlu0 %2983, %v2962
    %v2985 = vpop.permute.xlu0 %2984
    %v2987 = vmul.f32 %v2981, %v2985
    %vm2988 = vcmask 1040384
    %v2989 = vsel %vm2988, %v2952, %v2987
    %v2990 = vld [vmem:[%s19] sm:$0xff]
    %2991 = vset.pattern.permute.xlu0 0
    %2992 = vperm.xlu0 %2991, %v2990
    %v2993 = vpop.permute.xlu0 %2992
    %vm2994 = vcmp.eq.s32.totalorder %v2993, %v2899
    %v2995 = vsel %vm2994, 1, 0
    %v2996 = vcvt.s32.f32 %v2995
    %v2997 = vsel %vm2914, %v2996, -inf
    %v2998 = vrot.slane %v2997, 4
    %v2999 = vmax.f32 %v2997, %v2998
    %v3000 = vrot.slane %v2999, 2
    %v3001 = vmax.f32 %v2999, %v3000
    %v3002 = vrot.slane %v3001, 1
    %v3003 = vmax.f32 %v3001, %v3002
    %vm3004 = vcmp.gt.f32.partialorder %v2996, 0.0
    %v3005 = vsel %vm3004, 1, 0
    %3006 = vset.pattern.permute.xlu0 0
    %3007 = vperm.xlu0 %3006, %v3005
    %v3008 = vpop.permute.xlu0 %3007
    %vm3009 = vcmp.eq.s32.totalorder %v3008, 1
    %v3010 = vsel %vm3009, %v2714, -3e+38
    %v3011 = vsel %vm1075, %v3010, -inf
    %v3012 = vrot.slane %v3011, 4
    %v3013 = vmax.f32 %v3011, %v3012
    %v3014 = vrot.slane %v3013, 2
    %v3015 = vmax.f32 %v3013, %v3014
    %v3016 = vrot.slane %v3015, 1
    %v3017 = vmax.f32 %v3015, %v3016
    %3019 = vset.pattern.permute.xlu0 0
    %3020 = vperm.xlu0 %3019, %v3003
    %v3021 = vpop.permute.xlu0 %3020
    %v3023 = vmul.f32 %v3017, %v3021
    %v3024 = vsel %vm2953, %v2996, -inf
    %v3025 = vrot.slane %v3024, 4
    %v3026 = vmax.f32 %v3024, %v3025
    %v3027 = vrot.slane %v3026, 2
    %v3028 = vmax.f32 %v3026, %v3027
    %v3029 = vrot.slane %v3028, 1
    %v3030 = vmax.f32 %v3028, %v3029
    %3031 = vset.pattern.permute.xlu0 1
    %3032 = vperm.xlu0 %3031, %v3005
    %v3033 = vpop.permute.xlu0 %3032
    %vm3034 = vcmp.eq.s32.totalorder %v3033, 1
    %v3035 = vsel %vm3034, %v2714, -3e+38
    %v3036 = vsel %vm1075, %v3035, -inf
    %v3037 = vrot.slane %v3036, 4
    %v3038 = vmax.f32 %v3036, %v3037
    %v3039 = vrot.slane %v3038, 2
    %v3040 = vmax.f32 %v3038, %v3039
    %v3041 = vrot.slane %v3040, 1
    %v3042 = vmax.f32 %v3040, %v3041
    %3044 = vset.pattern.permute.xlu0 1
    %3045 = vperm.xlu0 %3044, %v3030
    %v3046 = vpop.permute.xlu0 %3045
    %v3048 = vmul.f32 %v3042, %v3046
    %v3049 = vsel %vm2988, %v3023, %v3048
    %v3050 = vld [vmem:[%s21] sm:$0xf]
    %3051 = vset.pattern.permute.xlu0 0
    %3052 = vperm.xlu0 %3051, %v3050
    %v3053 = vpop.permute.xlu0 %3052
    %vm3054 = vcmp.eq.s32.totalorder %v3053, %v2899
    %v3055 = vsel %vm3054, 1, 0
    %v3056 = vcvt.s32.f32 %v3055
    %vm3057 = vcmask 3072
    %v3058 = vsel %vm3057, %v3056, -inf
    %v3059 = vrot.slane %v3058, 4
    %v3060 = vmax.f32 %v3058, %v3059
    %v3061 = vrot.slane %v3060, 2
    %v3062 = vmax.f32 %v3060, %v3061
    %v3063 = vrot.slane %v3062, 1
    %v3064 = vmax.f32 %v3062, %v3063
    %vm3065 = vcmp.gt.f32.partialorder %v3056, 0.0
    %v3066 = vsel %vm3065, 1, 0
    %3067 = vset.pattern.permute.xlu0 0
    %3068 = vperm.xlu0 %3067, %v3066
    %v3069 = vpop.permute.xlu0 %3068
    %vm3070 = vcmp.eq.s32.totalorder %v3069, 1
    %v3071 = vsel %vm3070, %v2897, -3e+38
    %vm3072 = vcmask 125952
    %v3073 = vsel %vm3072, %v3071, -inf
    %v3074 = vrot.slane %v3073, 4
    %v3075 = vmax.f32 %v3073, %v3074
    %v3076 = vrot.slane %v3075, 2
    %v3077 = vmax.f32 %v3075, %v3076
    %v3078 = vrot.slane %v3077, 1
    %v3079 = vmax.f32 %v3077, %v3078
    %3081 = vset.pattern.permute.xlu0 0
    %3082 = vperm.xlu0 %3081, %v3064
    %v3083 = vpop.permute.xlu0 %3082
    %v3085 = vmul.f32 %v3079, %v3083
    %vm3086 = vcmask 11272
    %v3087 = vsel %vm3086, %v3056, -inf
    %v3088 = vrot.slane %v3087, 4
    %v3089 = vmax.f32 %v3087, %v3088
    %v3090 = vrot.slane %v3089, 2
    %v3091 = vmax.f32 %v3089, %v3090
    %v3092 = vrot.slane %v3091, 1
    %v3093 = vmax.f32 %v3091, %v3092
    %3094 = vset.pattern.permute.xlu0 1
    %3095 = vperm.xlu0 %3094, %v3066
    %v3096 = vpop.permute.xlu0 %3095
    %vm3097 = vcmp.eq.s32.totalorder %v3096, 1
    %v3098 = vsel %vm3097, %v2897, -3e+38
    %v3099 = vsel %vm3072, %v3098, -inf
    %v3100 = vrot.slane %v3099, 4
    %v3101 = vmax.f32 %v3099, %v3100
    %v3102 = vrot.slane %v3101, 2
    %v3103 = vmax.f32 %v3101, %v3102
    %v3104 = vrot.slane %v3103, 1
    %v3105 = vmax.f32 %v3103, %v3104
    %3107 = vset.pattern.permute.xlu0 1
    %3108 = vperm.xlu0 %3107, %v3093
    %v3109 = vpop.permute.xlu0 %3108
    %v3111 = vmul.f32 %v3105, %v3109
    %v3112 = vsel %vm2988, %v3085, %v3111
    %v3113 = vld [vmem:[#allocation8] sm:$0xff]
    %v3114 = vld [vmem:[#allocation8 + $0x8] sm:$0xff]
    %v3115 = vld [vmem:[%s31] sm:$0xff]
    %v3116 = vld [vmem:[%s31 + $0x8] sm:$0xff]
    %v3118 = vsel %vm1075, %v3049, 0
    %3120 = vmatpush.msra.mxu0 0.0
    %3121 = vmatpush.msra.mxu0 0.0
    %3122 = vmatpush.msra.mxu0 0.0
    %3123 = vmatpush.msra.mxu0 0.0
    %3124 = vmatpush.msra.mxu0 0.0
    %3125 = vmatpush.msra.mxu0 0.0
    %3126 = vmatpush.msra.mxu0 0.0
    %3127 = vmatpush.msra.mxu0 0.0
    %3128 = vmatpush.msra.mxu0 0.0
    %3129 = vmatpush.msra.mxu0 0.0
    %3130 = vmatpush.msra.mxu0 0.0
    %3131 = vmatpush.msra.mxu0 0.0
    %3132 = vmatpush.msra.mxu0 0.0
    %3133 = vmatpush.msra.mxu0 0.0
    %3134 = vmatpush.msra.mxu0 %v3116
    %3135 = vmatpush.msra.mxu0 %v3115
    %3136 = vmatmul.f32.gmra.mxu0 %v3118
    %v3137 = vpop.f32.mrf.mxu0
    %v3138 = vadd.f32 0.0, %v3137
    %3139 = vdwg.mxu0
    %v3141 = vsel %vm1075, %v2989, 0
    %3143 = vmatpush.msra.mxu0 0.0
    %3144 = vmatpush.msra.mxu0 0.0
    %3145 = vmatpush.msra.mxu0 0.0
    %3146 = vmatpush.msra.mxu0 0.0
    %3147 = vmatpush.msra.mxu0 0.0
    %3148 = vmatpush.msra.mxu0 0.0
    %3149 = vmatpush.msra.mxu0 0.0
    %3150 = vmatpush.msra.mxu0 0.0
    %3151 = vmatpush.msra.mxu0 0.0
    %3152 = vmatpush.msra.mxu0 0.0
    %3153 = vmatpush.msra.mxu0 0.0
    %3154 = vmatpush.msra.mxu0 0.0
    %3155 = vmatpush.msra.mxu0 0.0
    %3156 = vmatpush.msra.mxu0 0.0
    %3157 = vmatpush.msra.mxu0 %v3114
    %3158 = vmatpush.msra.mxu0 %v3113
    %3159 = vmatmul.f32.gmra.mxu0 %v3141
    %v3160 = vpop.f32.mrf.mxu0
    %v3161 = vadd.f32 %v3138, %v3160
    %3162 = vdwg.mxu0
    %v3163 = vld [vmem:[%s33] sm:$0xff]
    %v3164 = vld [vmem:[%s33 + $0x8] sm:$0xff]
    %v3166 = vsel %vm1075, %v3112, 0
    %3168 = vmatpush.msra.mxu0 0.0
    %3169 = vmatpush.msra.mxu0 0.0
    %3170 = vmatpush.msra.mxu0 0.0
    %3171 = vmatpush.msra.mxu0 0.0
    %3172 = vmatpush.msra.mxu0 0.0
    %3173 = vmatpush.msra.mxu0 0.0
    %3174 = vmatpush.msra.mxu0 0.0
    %3175 = vmatpush.msra.mxu0 0.0
    %3176 = vmatpush.msra.mxu0 0.0
    %3177 = vmatpush.msra.mxu0 0.0
    %3178 = vmatpush.msra.mxu0 0.0
    %3179 = vmatpush.msra.mxu0 0.0
    %3180 = vmatpush.msra.mxu0 0.0
    %3181 = vmatpush.msra.mxu0 0.0
    %3182 = vmatpush.msra.mxu0 %v3164
    %3183 = vmatpush.msra.mxu0 %v3163
    %3184 = vmatmul.f32.gmra.mxu0 %v3166
    %v3185 = vpop.f32.mrf.mxu0
    %v3186 = vadd.f32 0.0, %v3185
    %3187 = vdwg.mxu0
    %v3188 = vadd.f32 %v3161, %v3186
    %v3189 = vld [vmem:[#allocation2] sm:$0x1]
    %v3191 = vperm.slane %v3189, 0
    %v3193 = vadd.f32 %v3188, %v3191
    %v3194 = vld [vmem:[%s35] sm:$0xff]
    %v3195 = vld [vmem:[%s35 + $0x8] sm:$0xff]
    %v3196 = vld [vmem:[%s35 + $0x10] sm:$0xff]
    %v3197 = vld [vmem:[%s35 + $0x18] sm:$0xff]
    %v3198 = vld [vmem:[#allocation5] sm:$0x1]
    %v3200 = vperm.slane %v3198, 0
    %v3203 = vsel %vm1260, %v3193, 0
    %3205 = vmatpush.msra.mxu0 0.0
    %3206 = vmatpush.msra.mxu0 0.0
    %3207 = vmatpush.msra.mxu0 0.0
    %3208 = vmatpush.msra.mxu0 0.0
    %3209 = vmatpush.msra.mxu0 0.0
    %3210 = vmatpush.msra.mxu0 0.0
    %3211 = vmatpush.msra.mxu0 0.0
    %3212 = vmatpush.msra.mxu0 0.0
    %3213 = vmatpush.msra.mxu0 0.0
    %3214 = vmatpush.msra.mxu0 0.0
    %3215 = vmatpush.msra.mxu0 0.0
    %3216 = vmatpush.msra.mxu0 0.0
    %3217 = vmatpush.msra.mxu0 %v3197
    %3218 = vmatpush.msra.mxu0 %v3196
    %3219 = vmatpush.msra.mxu0 %v3195
    %3220 = vmatpush.msra.mxu0 %v3194
    %3221 = vmatmul.f32.gmra.mxu0 %v3203
    %v3222 = vpop.f32.mrf.mxu0
    %v3223 = vadd.f32 %v3200, %v3222
    %3224 = vdwg.mxu0
    %v3225 = vmax.f32 %v3223, 0.0
    %v3226 = vld [vmem:[#allocation10] sm:$0xff]
    %v3227 = vld [vmem:[#allocation10 + $0x8] sm:$0xff]
    %v3228 = vld [vmem:[#allocation10 + $0x10] sm:$0xff]
    %v3229 = vld [vmem:[#allocation10 + $0x18] sm:$0xff]
    %v3230 = vld [vmem:[#allocation10 + $0x20] sm:$0xff]
    %v3231 = vld [vmem:[#allocation10 + $0x28] sm:$0xff]
    %v3232 = vld [vmem:[#allocation10 + $0x30] sm:$0xff]
    %v3233 = vld [vmem:[#allocation10 + $0x38] sm:$0xff]
    %v3234 = vld [vmem:[#allocation7] sm:$0x1]
    %v3236 = vperm.slane %v3234, 0
    %vm3238 = vcmask 523264
    %v3240 = vsel %vm3238, %v3225, 0
    %3242 = vmatpush.msra.mxu0 0.0
    %3243 = vmatpush.msra.mxu0 0.0
    %3244 = vmatpush.msra.mxu0 0.0
    %3245 = vmatpush.msra.mxu0 0.0
    %3246 = vmatpush.msra.mxu0 0.0
    %3247 = vmatpush.msra.mxu0 0.0
    %3248 = vmatpush.msra.mxu0 0.0
    %3249 = vmatpush.msra.mxu0 0.0
    %3250 = vmatpush.msra.mxu0 %v3233
    %3251 = vmatpush.msra.mxu0 %v3232
    %3252 = vmatpush.msra.mxu0 %v3231
    %3253 = vmatpush.msra.mxu0 %v3230
    %3254 = vmatpush.msra.mxu0 %v3229
    %3255 = vmatpush.msra.mxu0 %v3228
    %3256 = vmatpush.msra.mxu0 %v3227
    %3257 = vmatpush.msra.mxu0 %v3226
    %3258 = vmatmul.f32.gmra.mxu0 %v3240
    %v3259 = vpop.f32.mrf.mxu0
    %v3260 = vadd.f32 %v3236, %v3259
    %3261 = vdwg.mxu0
    %vm3262 = vcmask 25600
    %v3263 = vsel %vm3262, %v3260, -inf
    %3264 = vmax.xlane.f32.xlu0 %v3263
    %v3265 = vpop.xlane.xlu0 %3264
    %v3266 = vsub.f32 %v3260, %v3265
    %v3267 = vmul.f32 %v3266, 1.442695
    %v3268 = vpow.pop %v3267
    %v3269 = vsel %vm3262, %v3268, 0.0
    %3270 = vadd.xlane.f32.xlu0 %v3269
    %v3271 = vpop.xlane.xlu0 %3270
    %v3272 = vlog2.pop %v3271
    %v3273 = vmul.f32 %v3272, 0.6931472
    %v3274 = vsub.f32 %v3266, %v3273
    %3275 = vst.msk [vmem:[#allocation64] sm:$0x3] %vm3262, %v3274
    // Predicated region
    $region430: #{fwd.1} parent=1 // pred_check
      _
    $region431: #{fwd.1} parent=1 // pred_check_branch
      %3277 = sbr.rel (0) target = $region433
    $region432: #{fwd.1} parent=1 // pred_region
      %3279 = vsyncadd [#allocation4], 0
      %s3281 = sshll.u32 [#allocation64], 4
      %s3282 = int_to_ptr.vmem [resolvable:$true] %s3281
      %s3283 = sshll.u32 %s135, 4
      %s3284 = int_to_ptr.hbm [resolvable:$true] %s3283
      %3286 = dma.vmem_to_hbm [thread:$0]  %s3282, 32, %s3284, [#allocation4]
    $region433: #{fwd.1} parent=1 // pred_fallthru
      _
    // Predicated region
    $region434: #{fwd.1} parent=1 // pred_check
      _
    $region435: #{fwd.1} parent=1 // pred_check_branch
      %3288 = sbr.rel (0) target = $region437
    $region436: #{fwd.1} parent=1 // pred_region
      %3290 = dma.done [#allocation4], 32
    $region437: #{fwd.1} parent=1 // pred_fallthru
      _
    %3291 = vsyncpa [#allocation3], 1
    %3292 = vsyncpa [#allocation6], 1
    %3293 = vsyncpa [#allocation9], 1
    %3294 = vsyncpa [#allocation12], 1
    %3295 = vsyncpa [#allocation15], 1
    %3296 = vsyncpa [#allocation18], 1
    %3297 = vsyncpa [#allocation21], 1
    %3298 = vsyncpa [#allocation24], 1
    %3299 = vsyncpa [#allocation27], 1
    %3300 = vsyncpa [#allocation30], 1
    %3301 = vsyncpa [#allocation33], 1
    %3302 = vsyncpa [#allocation36], 1
    %3303 = vsyncpa [#allocation39], 1
    %3304 = vsyncpa [#allocation42], 1
    %3305 = vsyncpa [#allocation45], 1
    %3306 = vsyncpa [#allocation48], 1
    %3307 = vsyncpa [#allocation51], 1
    %3308 = vsyncpa [#allocation54], 1
    %3309 = vsyncpa [#allocation57], 1
    %3310 = vsyncpa [#allocation60], 1
    %3311 = vsyncpa [#allocation63], 1
    %3312 = vsyncpa [#allocation4], 1

</llo_original>
